<compile_context>
chip_gen: v7x
topology: tpu7x:2x2x1
jax: 0.10.0
libtpu: 0.0.40
codegen_flags: <defaults>
</compile_context>

<pallas_src>
import jax
import jax.numpy as jnp
from jax.experimental import pallas as pl
from jax.experimental.pallas import tpu as pltpu

# ---- dims (from VIB_T.__init__ defaults: in_ch=512, z_dim=256, num_class=2) ----
IN_DIM   = 768             # self.fc input
FC_OUT   = 512             # self.fc output == in_ch
OUT_CH   = 512             # z_dim * 2  (bottleneck output)
NB1, NB1_PAD = 1000, 1024  # ChannelCompress hidden 1 (padded to lane multiple)
NB2, NB2_PAD = 500, 512    # ChannelCompress hidden 2 (padded to lane multiple)
P_COLS   = NB1_PAD         # packed-parameter slab width
BN_EPS   = 1e-5


def vib_t_kernel(x_ref, wfc_ref, w1_ref, w2_ref, w3_ref, p_ref, v_ref, z_ref):
    x = x_ref[...]                       # (B, 768) f32
    inv_b = 1.0 / x.shape[0]             # static

    # packed small params (all f32): one slab load, static slices on the VMEM value
    P = p_ref[...]                       # (8, 1024) f32
    b_fc = P[0:1, 0:FC_OUT]
    b1, g1, be1 = P[1:2, :], P[2:3, :], P[3:4, :]
    b2, g2, be2 = P[4:5, 0:NB2_PAD], P[5:6, 0:NB2_PAD], P[6:7, 0:NB2_PAD]
    b3 = P[7:8, 0:OUT_CH]

    def bn_relu(h, gamma, beta):
        # one-pass batch statistics in f32 (biased variance, train mode), then the
        # affine is folded into one per-column scale/shift before touching (B, N).
        s1 = jnp.sum(h, axis=0, keepdims=True)
        s2 = jnp.sum(h * h, axis=0, keepdims=True)
        mean = s1 * inv_b
        var = jnp.maximum(s2 * inv_b - mean * mean, 0.0)
        scale = gamma * jax.lax.rsqrt(var + BN_EPS)      # (1, N)
        shift = beta - mean * scale                       # (1, N)
        return jnp.maximum(h * scale + shift, 0.0)

    # ---- self.fc : Linear(768, 512) ----  (bf16 operands, f32 accumulate)
    v = jnp.dot(x.astype(jnp.bfloat16), wfc_ref[...],
                preferred_element_type=jnp.float32) + b_fc
    v_ref[...] = v.astype(v_ref.dtype)

    # ---- self.bottleneck : ChannelCompress(512 -> 512) ----
    h = jnp.dot(v.astype(jnp.bfloat16), w1_ref[...],
                preferred_element_type=jnp.float32) + b1          # (B, 1024)
    h = bn_relu(h, g1, be1)
    h = jnp.dot(h.astype(jnp.bfloat16), w2_ref[...],
                preferred_element_type=jnp.float32) + b2          # (B, 512)
    h = bn_relu(h, g2, be2)
    z = jnp.dot(h.astype(jnp.bfloat16), w3_ref[...],
                preferred_element_type=jnp.float32) + b3          # (B, 512)
    z_ref[...] = z.astype(z_ref.dtype)

    # NOTE: p_y_given_z = self.classifier(z_given_v) is computed by forward() but
    # never returned -> dead code for the returned outputs, omitted here.


def vib_t_forward(x, packed):
    """x: (B, 768) f32.  Returns (v (B,512), z_given_v (B,512))."""
    wfc, w1, w2, w3, pvec = packed
    B = x.shape[0]
    flops = 2 * B * (IN_DIM * FC_OUT + FC_OUT * NB1_PAD + NB1_PAD * NB2_PAD
                     + NB2_PAD * OUT_CH)
    bytes_accessed = (x.size * x.dtype.itemsize
                      + wfc.size * wfc.dtype.itemsize
                      + w1.size * w1.dtype.itemsize
                      + w2.size * w2.dtype.itemsize
                      + w3.size * w3.dtype.itemsize
                      + pvec.size * pvec.dtype.itemsize
                      + 4 * (B * FC_OUT + B * OUT_CH))
    return pl.pallas_call(
        vib_t_kernel,
        out_shape=(jax.ShapeDtypeStruct((B, FC_OUT), jnp.float32),
                   jax.ShapeDtypeStruct((B, OUT_CH), jnp.float32)),
        in_specs=[pl.BlockSpec(memory_space=pltpu.MemorySpace.VMEM)] * 6,
        out_specs=(pl.BlockSpec(memory_space=pltpu.MemorySpace.VMEM),
                   pl.BlockSpec(memory_space=pltpu.MemorySpace.VMEM)),
        compiler_params=pltpu.CompilerParams(vmem_limit_bytes=32 * 1024 * 1024),
        cost_estimate=pl.CostEstimate(flops=flops,
                                      transcendentals=2 * (NB1_PAD + NB2_PAD),
                                      bytes_accessed=bytes_accessed),
    )(x, wfc, w1, w2, w3, pvec)


# --------------------------- parameters ---------------------------
def init_raw_params(key):
    """Deterministic synthetic parameters at the module's true (unpadded) shapes."""
    ks = jax.random.split(key, 8)

    def lin(kw, kb, fan_in, fan_out):
        bound = 1.0 / (fan_in ** 0.5)
        w = jax.random.uniform(kw, (fan_in, fan_out), jnp.float32, -bound, bound)
        b = jax.random.uniform(kb, (fan_out,), jnp.float32, -bound, bound)
        return w, b

    wfc, bfc = lin(ks[0], ks[1], IN_DIM, FC_OUT)        # self.fc
    w1, b1 = lin(ks[2], ks[3], FC_OUT, NB1)             # ChannelCompress
    w2, b2 = lin(ks[4], ks[5], NB1, NB2)
    w3, b3 = lin(ks[6], ks[7], NB2, OUT_CH)
    return dict(
        wfc=wfc, bfc=bfc,
        w1=w1, b1=b1, g1=jnp.ones((NB1,), jnp.float32), be1=jnp.zeros((NB1,), jnp.float32),
        w2=w2, b2=b2, g2=jnp.ones((NB2,), jnp.float32), be2=jnp.zeros((NB2,), jnp.float32),
        w3=w3, b3=b3,
    )


def pack_params(p):
    """Zero-pad to lane-aligned shapes, cast weights to bf16 (halves HBM weight
    traffic - the kernel's dominant cost) and pack all 1-D params into one f32 slab."""
    def pad2(w, r, c):
        return jnp.pad(w, ((0, r - w.shape[0]), (0, c - w.shape[1])))

    def pad1(v):
        return jnp.pad(v, (0, P_COLS - v.shape[0]))

    wfc = p["wfc"].astype(jnp.bfloat16)                          # (768, 512)
    w1 = pad2(p["w1"], FC_OUT, NB1_PAD).astype(jnp.bfloat16)     # (512, 1024)
    w2 = pad2(p["w2"], NB1_PAD, NB2_PAD).astype(jnp.bfloat16)    # (1024, 512)
    w3 = pad2(p["w3"], NB2_PAD, OUT_CH).astype(jnp.bfloat16)     # (512, 512)
    pvec = jnp.stack([pad1(p["bfc"]), pad1(p["b1"]), pad1(p["g1"]), pad1(p["be1"]),
                      pad1(p["b2"]), pad1(p["g2"]), pad1(p["be2"]), pad1(p["b3"])],
                     axis=0)                                     # (8, 1024) f32
    return (wfc, w1, w2, w3, pvec)


# --------------------------- pure-JAX reference ---------------------------
def vib_t_reference(x, p):
    hi = jax.lax.Precision.HIGHEST

    def bn(h, gamma, beta):
        mean = jnp.mean(h, axis=0, keepdims=True)
        var = jnp.mean((h - mean) ** 2, axis=0, keepdims=True)
        return (h - mean) * jax.lax.rsqrt(var + BN_EPS) * gamma + beta

    v = jnp.dot(x, p["wfc"], precision=hi) + p["bfc"]
    h = jnp.maximum(bn(jnp.dot(v, p["w1"], precision=hi) + p["b1"], p["g1"], p["be1"]), 0.0)
    h = jnp.maximum(bn(jnp.dot(h, p["w2"], precision=hi) + p["b2"], p["g2"], p["be2"]), 0.0)
    z = jnp.dot(h, p["w3"], precision=hi) + p["b3"]
    return v, z


if __name__ == "__main__":
    key = jax.random.PRNGKey(0)
    kx, kp = jax.random.split(key)

    B = 4
    x = jax.random.normal(kx, (B, IN_DIM), jnp.float32)
    raw = init_raw_params(kp)
    packed = pack_params(raw)

    v_out, z_out = jax.jit(vib_t_forward)(x, packed)
    jax.block_until_ready((v_out, z_out))

    assert v_out.shape == (B, FC_OUT)
    assert z_out.shape == (B, OUT_CH)

    v_ref, z_ref = vib_t_reference(x, raw)
    assert jnp.allclose(v_out, v_ref, atol=2e-2, rtol=2e-2), "fc output mismatch"
    assert jnp.allclose(z_out, z_ref, atol=2e-2, rtol=2e-2), "bottleneck output mismatch"

    print("KERNEL_OK")
</pallas_src>

<mosaic_0001>
module attributes {stable_mosaic.version = 11 : i64} {
  func.func @vib_t_kernel(%arg0: memref<4x768xf32, #tpu.memory_space<vmem>>, %arg1: memref<768x512xbf16, #tpu.memory_space<vmem>>, %arg2: memref<512x1024xbf16, #tpu.memory_space<vmem>>, %arg3: memref<1024x512xbf16, #tpu.memory_space<vmem>>, %arg4: memref<512x512xbf16, #tpu.memory_space<vmem>>, %arg5: memref<8x1024xf32, #tpu.memory_space<vmem>>, %arg6: memref<4x512xf32, #tpu.memory_space<vmem>>, %arg7: memref<4x512xf32, #tpu.memory_space<vmem>>) attributes {dimension_semantics = [], scalar_prefetch = 0 : i64, scratch_operands = 0 : i64, tpu.core_type = #tpu.core_type<tc>} {
    %c0 = arith.constant 0 : index
    %c0_0 = arith.constant 0 : index
    %0 = vector.load %arg0[%c0, %c0_0] : memref<4x768xf32, #tpu.memory_space<vmem>>, vector<4x768xf32>
    %c0_1 = arith.constant 0 : index
    %c0_2 = arith.constant 0 : index
    %1 = vector.load %arg5[%c0_1, %c0_2] : memref<8x1024xf32, #tpu.memory_space<vmem>>, vector<8x1024xf32>
    %2 = vector.extract_strided_slice %1 {offsets = [0, 0], sizes = [1, 512], strides = [1, 1]} : vector<8x1024xf32> to vector<1x512xf32>
    %3 = vector.extract_strided_slice %1 {offsets = [1, 0], sizes = [1, 1024], strides = [1, 1]} : vector<8x1024xf32> to vector<1x1024xf32>
    %4 = vector.extract_strided_slice %1 {offsets = [2, 0], sizes = [1, 1024], strides = [1, 1]} : vector<8x1024xf32> to vector<1x1024xf32>
    %5 = vector.extract_strided_slice %1 {offsets = [3, 0], sizes = [1, 1024], strides = [1, 1]} : vector<8x1024xf32> to vector<1x1024xf32>
    %6 = vector.extract_strided_slice %1 {offsets = [4, 0], sizes = [1, 512], strides = [1, 1]} : vector<8x1024xf32> to vector<1x512xf32>
    %7 = vector.extract_strided_slice %1 {offsets = [5, 0], sizes = [1, 512], strides = [1, 1]} : vector<8x1024xf32> to vector<1x512xf32>
    %8 = vector.extract_strided_slice %1 {offsets = [6, 0], sizes = [1, 512], strides = [1, 1]} : vector<8x1024xf32> to vector<1x512xf32>
    %9 = vector.extract_strided_slice %1 {offsets = [7, 0], sizes = [1, 512], strides = [1, 1]} : vector<8x1024xf32> to vector<1x512xf32>
    %10 = arith.truncf %0 : vector<4x768xf32> to vector<4x768xbf16>
    %c0_3 = arith.constant 0 : index
    %c0_4 = arith.constant 0 : index
    %11 = vector.load %arg1[%c0_3, %c0_4] : memref<768x512xbf16, #tpu.memory_space<vmem>>, vector<768x512xbf16>
    %cst = arith.constant dense<0.000000e+00> : vector<4x512xf32>
    %12 = tpu.matmul %10, %11, %cst {dimension_numbers = #tpu.dot_dimension_numbers<[1], [0], [0], [1], [0, 0, 1, 1], [], []>} : vector<4x768xbf16>, vector<768x512xbf16>, vector<4x512xf32> -> vector<4x512xf32>
    %13 = vector.broadcast %2 : vector<1x512xf32> to vector<4x512xf32>
    %14 = arith.addf %12, %13 : vector<4x512xf32>
    %c0_5 = arith.constant 0 : index
    %c0_6 = arith.constant 0 : index
    %15 = vector.load %arg6[%c0_5, %c0_6] : memref<4x512xf32, #tpu.memory_space<vmem>>, vector<4x512xf32>
    tpu.vector_store %arg6[%c0_5, %c0_6], %14 {strides = array<i32>} : memref<4x512xf32, #tpu.memory_space<vmem>>, vector<4x512xf32>,
    %16 = arith.truncf %14 : vector<4x512xf32> to vector<4x512xbf16>
    %c0_7 = arith.constant 0 : index
    %c0_8 = arith.constant 0 : index
    %17 = vector.load %arg2[%c0_7, %c0_8] : memref<512x1024xbf16, #tpu.memory_space<vmem>>, vector<512x1024xbf16>
    %cst_9 = arith.constant dense<0.000000e+00> : vector<4x1024xf32>
    %18 = tpu.matmul %16, %17, %cst_9 {dimension_numbers = #tpu.dot_dimension_numbers<[1], [0], [0], [1], [0, 0, 1, 1], [], []>} : vector<4x512xbf16>, vector<512x1024xbf16>, vector<4x1024xf32> -> vector<4x1024xf32>
    %19 = vector.broadcast %3 : vector<1x1024xf32> to vector<4x1024xf32>
    %20 = arith.addf %18, %19 : vector<4x1024xf32>
    %cst_10 = arith.constant dense<0.000000e+00> : vector<1024xf32>
    %21 = vector.multi_reduction <add>, %20, %cst_10 [0] : vector<4x1024xf32> to vector<1024xf32>
    %22 = vector.shape_cast %21 : vector<1024xf32> to vector<1x1024xf32>
    %23 = arith.mulf %20, %20 : vector<4x1024xf32>
    %cst_11 = arith.constant dense<0.000000e+00> : vector<1024xf32>
    %24 = vector.multi_reduction <add>, %23, %cst_11 [0] : vector<4x1024xf32> to vector<1024xf32>
    %25 = vector.shape_cast %24 : vector<1024xf32> to vector<1x1024xf32>
    %cst_12 = arith.constant 2.500000e-01 : f32
    %26 = vector.broadcast %cst_12 : f32 to vector<1x1024xf32>
    %27 = arith.mulf %22, %26 : vector<1x1024xf32>
    %cst_13 = arith.constant 2.500000e-01 : f32
    %28 = vector.broadcast %cst_13 : f32 to vector<1x1024xf32>
    %29 = arith.mulf %25, %28 : vector<1x1024xf32>
    %30 = arith.mulf %27, %27 : vector<1x1024xf32>
    %31 = arith.subf %29, %30 : vector<1x1024xf32>
    %cst_14 = arith.constant 0.000000e+00 : f32
    %32 = vector.broadcast %cst_14 : f32 to vector<1x1024xf32>
    %33 = arith.maximumf %31, %32 : vector<1x1024xf32>
    %cst_15 = arith.constant 9.99999974E-6 : f32
    %34 = vector.broadcast %cst_15 : f32 to vector<1x1024xf32>
    %35 = arith.addf %33, %34 : vector<1x1024xf32>
    %36 = math.rsqrt %35 : vector<1x1024xf32>
    %37 = arith.mulf %4, %36 : vector<1x1024xf32>
    %38 = arith.mulf %27, %37 : vector<1x1024xf32>
    %39 = arith.subf %5, %38 : vector<1x1024xf32>
    %40 = vector.broadcast %37 : vector<1x1024xf32> to vector<4x1024xf32>
    %41 = arith.mulf %20, %40 : vector<4x1024xf32>
    %42 = vector.broadcast %39 : vector<1x1024xf32> to vector<4x1024xf32>
    %43 = arith.addf %41, %42 : vector<4x1024xf32>
    %cst_16 = arith.constant 0.000000e+00 : f32
    %44 = vector.broadcast %cst_16 : f32 to vector<4x1024xf32>
    %45 = arith.maximumf %43, %44 : vector<4x1024xf32>
    %46 = arith.truncf %45 : vector<4x1024xf32> to vector<4x1024xbf16>
    %c0_17 = arith.constant 0 : index
    %c0_18 = arith.constant 0 : index
    %47 = vector.load %arg3[%c0_17, %c0_18] : memref<1024x512xbf16, #tpu.memory_space<vmem>>, vector<1024x512xbf16>
    %cst_19 = arith.constant dense<0.000000e+00> : vector<4x512xf32>
    %48 = tpu.matmul %46, %47, %cst_19 {dimension_numbers = #tpu.dot_dimension_numbers<[1], [0], [0], [1], [0, 0, 1, 1], [], []>} : vector<4x1024xbf16>, vector<1024x512xbf16>, vector<4x512xf32> -> vector<4x512xf32>
    %49 = vector.broadcast %6 : vector<1x512xf32> to vector<4x512xf32>
    %50 = arith.addf %48, %49 : vector<4x512xf32>
    %cst_20 = arith.constant dense<0.000000e+00> : vector<512xf32>
    %51 = vector.multi_reduction <add>, %50, %cst_20 [0] : vector<4x512xf32> to vector<512xf32>
    %52 = vector.shape_cast %51 : vector<512xf32> to vector<1x512xf32>
    %53 = arith.mulf %50, %50 : vector<4x512xf32>
    %cst_21 = arith.constant dense<0.000000e+00> : vector<512xf32>
    %54 = vector.multi_reduction <add>, %53, %cst_21 [0] : vector<4x512xf32> to vector<512xf32>
    %55 = vector.shape_cast %54 : vector<512xf32> to vector<1x512xf32>
    %cst_22 = arith.constant 2.500000e-01 : f32
    %56 = vector.broadcast %cst_22 : f32 to vector<1x512xf32>
    %57 = arith.mulf %52, %56 : vector<1x512xf32>
    %cst_23 = arith.constant 2.500000e-01 : f32
    %58 = vector.broadcast %cst_23 : f32 to vector<1x512xf32>
    %59 = arith.mulf %55, %58 : vector<1x512xf32>
    %60 = arith.mulf %57, %57 : vector<1x512xf32>
    %61 = arith.subf %59, %60 : vector<1x512xf32>
    %cst_24 = arith.constant 0.000000e+00 : f32
    %62 = vector.broadcast %cst_24 : f32 to vector<1x512xf32>
    %63 = arith.maximumf %61, %62 : vector<1x512xf32>
    %cst_25 = arith.constant 9.99999974E-6 : f32
    %64 = vector.broadcast %cst_25 : f32 to vector<1x512xf32>
    %65 = arith.addf %63, %64 : vector<1x512xf32>
    %66 = math.rsqrt %65 : vector<1x512xf32>
    %67 = arith.mulf %7, %66 : vector<1x512xf32>
    %68 = arith.mulf %57, %67 : vector<1x512xf32>
    %69 = arith.subf %8, %68 : vector<1x512xf32>
    %70 = vector.broadcast %67 : vector<1x512xf32> to vector<4x512xf32>
    %71 = arith.mulf %50, %70 : vector<4x512xf32>
    %72 = vector.broadcast %69 : vector<1x512xf32> to vector<4x512xf32>
    %73 = arith.addf %71, %72 : vector<4x512xf32>
    %cst_26 = arith.constant 0.000000e+00 : f32
    %74 = vector.broadcast %cst_26 : f32 to vector<4x512xf32>
    %75 = arith.maximumf %73, %74 : vector<4x512xf32>
    %76 = arith.truncf %75 : vector<4x512xf32> to vector<4x512xbf16>
    %c0_27 = arith.constant 0 : index
    %c0_28 = arith.constant 0 : index
    %77 = vector.load %arg4[%c0_27, %c0_28] : memref<512x512xbf16, #tpu.memory_space<vmem>>, vector<512x512xbf16>
    %cst_29 = arith.constant dense<0.000000e+00> : vector<4x512xf32>
    %78 = tpu.matmul %76, %77, %cst_29 {dimension_numbers = #tpu.dot_dimension_numbers<[1], [0], [0], [1], [0, 0, 1, 1], [], []>} : vector<4x512xbf16>, vector<512x512xbf16>, vector<4x512xf32> -> vector<4x512xf32>
    %79 = vector.broadcast %9 : vector<1x512xf32> to vector<4x512xf32>
    %80 = arith.addf %78, %79 : vector<4x512xf32>
    %c0_30 = arith.constant 0 : index
    %c0_31 = arith.constant 0 : index
    %81 = vector.load %arg7[%c0_30, %c0_31] : memref<4x512xf32, #tpu.memory_space<vmem>>, vector<4x512xf32>
    tpu.vector_store %arg7[%c0_30, %c0_31], %80 {strides = array<i32>} : memref<4x512xf32, #tpu.memory_space<vmem>>, vector<4x512xf32>,
    return
  }
}

</mosaic_0001>

<llo_original>
// kernel: vib_t_forward.1
$region0: #{vib_t_forward.1}
  #allocation0 [shape = 'u32[]', space=smem, size = 0x4, offset = 0x4, fixed_abs, tag = 'smem constant byte address 0x4 - core index']
  #allocation1 [shape = 'u32[144,128]{1,0:T(1,128)}', space=vmem, size = 0x12000, scoped, tag = 'internal scratch']
  %s0 = inlined_call_operand.hbm [shape: f32[4,768], index: 0, kind: input, shape index: {}]
  %s1 = inlined_call_operand.hbm [shape: bf16[768,512], index: 1, kind: input, shape index: {}]
  %s2 = inlined_call_operand.hbm [shape: bf16[512,1024], index: 2, kind: input, shape index: {}]
  %s3 = inlined_call_operand.hbm [shape: bf16[1024,512], index: 3, kind: input, shape index: {}]
  %s4 = inlined_call_operand.hbm [shape: bf16[512,512], index: 4, kind: input, shape index: {}]
  %s5 = inlined_call_operand.hbm [shape: f32[8,1024], index: 5, kind: input, shape index: {}]
  %s6 = inlined_call_operand.hbm [shape: f32[4,512], index: 6, kind: output, shape index: {0}]
  %s7 = inlined_call_operand.hbm [shape: f32[4,512], index: 7, kind: output, shape index: {1}]
  %8 = xla_tuple %s6, %s7
  %s9 = sld [smem:[#allocation0]]
  $region66: #{vib_t_forward.1} parent=0
    _
  %s11 = ssub.s32 1, %s9
  %s12 = scalar_select 0, %s11, %s9
  $region1: #{vib_t_forward.1} parent=0
    #allocation2 [shape = 'u8[12288]{0}', space=vmem, size = 0x3000, scoped, tag = 'input window, operand 0, single buffered']
    #allocation3 [shape = 's32[1]{0}', space=sflag, size = 0x4, scoped, tag = 'scoped memory for vib_t_forward.1']
    #allocation4 [shape = 's32[1]{0}', space=sflag, size = 0x4, scoped, tag = 'scoped memory for vib_t_forward.1']
    #allocation5 [shape = 'u8[786432]{0}', space=vmem, size = 0xc0000, scoped, tag = 'input window, operand 1, single buffered']
    #allocation6 [shape = 's32[1]{0}', space=sflag, size = 0x4, scoped, tag = 'scoped memory for vib_t_forward.1']
    #allocation7 [shape = 'u8[1048576]{0}', space=vmem, size = 0x100000, scoped, tag = 'input window, operand 2, single buffered']
    #allocation8 [shape = 'u8[1048576]{0}', space=vmem, size = 0x100000, scoped, tag = 'input window, operand 3, single buffered']
    #allocation9 [shape = 's32[1]{0}', space=sflag, size = 0x4, scoped, tag = 'scoped memory for vib_t_forward.1']
    #allocation10 [shape = 'u8[524288]{0}', space=vmem, size = 0x80000, scoped, tag = 'input window, operand 4, single buffered']
    #allocation11 [shape = 'u8[32768]{0}', space=vmem, size = 0x8000, scoped, tag = 'input window, operand 5, single buffered']
    #allocation12 [shape = 's32[1]{0}', space=sflag, size = 0x4, scoped, tag = 'scoped memory for vib_t_forward.1']
    #allocation13 [shape = 'u8[8192]{0}', space=vmem, size = 0x2000, scoped, tag = 'output window, operand 0, single buffered']
    #allocation14 [shape = 'u8[8192]{0}', space=vmem, size = 0x2000, scoped, tag = 'output window, operand 1, single buffered']
    #allocation15 [shape = 's32[1]{0}', space=sflag, size = 0x4, scoped, tag = 'scoped memory for vib_t_forward.1']
    %13 = vsyncpa [#allocation3], 0
    %14 = vsyncpa [#allocation6], 0
    %15 = vsyncpa [#allocation9], 0
    %16 = vsyncpa [#allocation12], 0
    %17 = vsyncpa [#allocation4], 0
    %18 = vsyncpa [#allocation15], 0
    // Predicated region
    $region2: #{vib_t_forward.1} parent=1 // pred_check
      _
    $region3: #{vib_t_forward.1} parent=1 // pred_check_branch
      %20 = sbr.rel (0) target = $region5
    $region4: #{vib_t_forward.1} parent=1 // pred_region
      %s22 = ssub.s32 384, 384
      %23 = vsyncadd [#allocation3], %s22
      %s25 = sshll.u32 [#allocation2], 4
      %s26 = int_to_ptr.vmem [resolvable:$true] %s25
      %28 = dma.hbm_to_vmem [thread:$0]  %s0, 384, %s26, [#allocation3]
    $region5: #{vib_t_forward.1} parent=1 // pred_fallthru
      _
    // Predicated region
    $region6: #{vib_t_forward.1} parent=1 // pred_check
      _
    $region7: #{vib_t_forward.1} parent=1 // pred_check_branch
      %30 = sbr.rel (0) target = $region9
    $region8: #{vib_t_forward.1} parent=1 // pred_region
      %s32 = ssub.s32 24576, 24576
      %33 = vsyncadd [#allocation6], %s32
      %s34 = sshll.u32 [#allocation5], 4
      %s35 = int_to_ptr.vmem [resolvable:$true] %s34
      %40 = dma.hbm_to_vmem [thread:$0]  %s1, 24576, %s35, [#allocation6], 256, 256, 16
    $region9: #{vib_t_forward.1} parent=1 // pred_fallthru
      _
    // Predicated region
    $region10: #{vib_t_forward.1} parent=1 // pred_check
      _
    $region11: #{vib_t_forward.1} parent=1 // pred_check_branch
      %42 = sbr.rel (0) target = $region13
    $region12: #{vib_t_forward.1} parent=1 // pred_region
      %s44 = ssub.s32 32768, 32768
      %45 = vsyncadd [#allocation6], %s44
      %s46 = sshll.u32 [#allocation7], 4
      %s47 = int_to_ptr.vmem [resolvable:$true] %s46
      %52 = dma.hbm_to_vmem [thread:$0]  %s2, 32768, %s47, [#allocation6], 512, 512, 32
    $region13: #{vib_t_forward.1} parent=1 // pred_fallthru
      _
    // Predicated region
    $region14: #{vib_t_forward.1} parent=1 // pred_check
      _
    $region15: #{vib_t_forward.1} parent=1 // pred_check_branch
      %54 = sbr.rel (0) target = $region17
    $region16: #{vib_t_forward.1} parent=1 // pred_region
      %s56 = ssub.s32 32768, 32768
      %57 = vsyncadd [#allocation9], %s56
      %s58 = sshll.u32 [#allocation8], 4
      %s59 = int_to_ptr.vmem [resolvable:$true] %s58
      %64 = dma.hbm_to_vmem [thread:$0]  %s3, 32768, %s59, [#allocation9], 256, 256, 16
    $region17: #{vib_t_forward.1} parent=1 // pred_fallthru
      _
    // Predicated region
    $region18: #{vib_t_forward.1} parent=1 // pred_check
      _
    $region19: #{vib_t_forward.1} parent=1 // pred_check_branch
      %66 = sbr.rel (0) target = $region21
    $region20: #{vib_t_forward.1} parent=1 // pred_region
      %s68 = ssub.s32 16384, 16384
      %69 = vsyncadd [#allocation9], %s68
      %s70 = sshll.u32 [#allocation10], 4
      %s71 = int_to_ptr.vmem [resolvable:$true] %s70
      %76 = dma.hbm_to_vmem [thread:$0]  %s4, 16384, %s71, [#allocation9], 256, 256, 16
    $region21: #{vib_t_forward.1} parent=1 // pred_fallthru
      _
    // Predicated region
    $region22: #{vib_t_forward.1} parent=1 // pred_check
      _
    $region23: #{vib_t_forward.1} parent=1 // pred_check_branch
      %78 = sbr.rel (0) target = $region25
    $region24: #{vib_t_forward.1} parent=1 // pred_region
      %s80 = ssub.s32 1024, 1024
      %81 = vsyncadd [#allocation12], %s80
      %s83 = sshll.u32 [#allocation11], 4
      %s84 = int_to_ptr.vmem [resolvable:$true] %s83
      %86 = dma.hbm_to_vmem [thread:$0]  %s5, 1024, %s84, [#allocation12]
    $region25: #{vib_t_forward.1} parent=1 // pred_fallthru
      _
    // Predicated region
    $region26: #{vib_t_forward.1} parent=1 // pred_check
      _
    $region27: #{vib_t_forward.1} parent=1 // pred_check_branch
      %88 = sbr.rel (0) target = $region29
    $region28: #{vib_t_forward.1} parent=1 // pred_region
      %89 = dma.done [#allocation3], 384
    $region29: #{vib_t_forward.1} parent=1 // pred_fallthru
      _
    // Predicated region
    $region30: #{vib_t_forward.1} parent=1 // pred_check
      _
    $region31: #{vib_t_forward.1} parent=1 // pred_check_branch
      %91 = sbr.rel (0) target = $region33
    $region32: #{vib_t_forward.1} parent=1 // pred_region
      %92 = dma.done [#allocation6], 24576
    $region33: #{vib_t_forward.1} parent=1 // pred_fallthru
      _
    // Predicated region
    $region34: #{vib_t_forward.1} parent=1 // pred_check
      _
    $region35: #{vib_t_forward.1} parent=1 // pred_check_branch
      %94 = sbr.rel (0) target = $region37
    $region36: #{vib_t_forward.1} parent=1 // pred_region
      %95 = dma.done [#allocation6], 32768
    $region37: #{vib_t_forward.1} parent=1 // pred_fallthru
      _
    // Predicated region
    $region38: #{vib_t_forward.1} parent=1 // pred_check
      _
    $region39: #{vib_t_forward.1} parent=1 // pred_check_branch
      %97 = sbr.rel (0) target = $region41
    $region40: #{vib_t_forward.1} parent=1 // pred_region
      %98 = dma.done [#allocation9], 32768
    $region41: #{vib_t_forward.1} parent=1 // pred_fallthru
      _
    // Predicated region
    $region42: #{vib_t_forward.1} parent=1 // pred_check
      _
    $region43: #{vib_t_forward.1} parent=1 // pred_check_branch
      %100 = sbr.rel (0) target = $region45
    $region44: #{vib_t_forward.1} parent=1 // pred_region
      %101 = dma.done [#allocation9], 16384
    $region45: #{vib_t_forward.1} parent=1 // pred_fallthru
      _
    // Predicated region
    $region46: #{vib_t_forward.1} parent=1 // pred_check
      _
    $region47: #{vib_t_forward.1} parent=1 // pred_check_branch
      %103 = sbr.rel (0) target = $region49
    $region48: #{vib_t_forward.1} parent=1 // pred_region
      %104 = dma.done [#allocation12], 1024
    $region49: #{vib_t_forward.1} parent=1 // pred_fallthru
      _
    %v105 = vld [vmem:[#allocation2] sm:$0xff]
    %v106 = vld [vmem:[#allocation2 + $0x8] sm:$0xff]
    %v107 = vld [vmem:[#allocation2 + $0x10] sm:$0xff]
    %v108 = vld [vmem:[#allocation11] sm:$0xff]
    %v109 = vld [vmem:[#allocation11 + $0x8] sm:$0xff]
    %v110 = vld [vmem:[#allocation11 + $0x10] sm:$0xff]
    %v111 = vld [vmem:[#allocation11 + $0x18] sm:$0xff]
    %v112 = vld [vmem:[#allocation11 + $0x20] sm:$0xff]
    %v113 = vld [vmem:[#allocation11 + $0x28] sm:$0xff]
    %v114 = vld [vmem:[#allocation11 + $0x30] sm:$0xff]
    %v115 = vld [vmem:[#allocation11 + $0x38] sm:$0xff]
    %v119 = vcombine.high %v105, %v105
    %v120 = vcombine.high %v106, %v106
    %v121 = vcombine.high %v107, %v107
    %v125 = vpack.c.bf16 %v105, %v105
    %v126 = vpack.c.bf16 %v119, %v119
    %v127 = vpack.c.bf16 %v106, %v106
    %v128 = vpack.c.bf16 %v120, %v120
    %v129 = vpack.c.bf16 %v107, %v107
    %v130 = vpack.c.bf16 %v121, %v121
    %v131 = vld [vmem:[#allocation5] sm:$0xff]
    %v132 = vld [vmem:[#allocation5 + $0x8] sm:$0xff]
    %v133 = vld [vmem:[#allocation5 + $0x10] sm:$0xff]
    %v134 = vld [vmem:[#allocation5 + $0x18] sm:$0xff]
    %v135 = vld [vmem:[#allocation5 + $0x20] sm:$0xff]
    %v136 = vld [vmem:[#allocation5 + $0x28] sm:$0xff]
    %v137 = vld [vmem:[#allocation5 + $0x30] sm:$0xff]
    %v138 = vld [vmem:[#allocation5 + $0x38] sm:$0xff]
    %v139 = vld [vmem:[#allocation5 + $0x40] sm:$0xff]
    %v140 = vld [vmem:[#allocation5 + $0x48] sm:$0xff]
    %v141 = vld [vmem:[#allocation5 + $0x50] sm:$0xff]
    %v142 = vld [vmem:[#allocation5 + $0x58] sm:$0xff]
    %v143 = vld [vmem:[#allocation5 + $0x60] sm:$0xff]
    %v144 = vld [vmem:[#allocation5 + $0x68] sm:$0xff]
    %v145 = vld [vmem:[#allocation5 + $0x70] sm:$0xff]
    %v146 = vld [vmem:[#allocation5 + $0x78] sm:$0xff]
    %v147 = vld [vmem:[#allocation5 + $0x80] sm:$0xff]
    %v148 = vld [vmem:[#allocation5 + $0x88] sm:$0xff]
    %v149 = vld [vmem:[#allocation5 + $0x90] sm:$0xff]
    %v150 = vld [vmem:[#allocation5 + $0x98] sm:$0xff]
    %v151 = vld [vmem:[#allocation5 + $0xa0] sm:$0xff]
    %v152 = vld [vmem:[#allocation5 + $0xa8] sm:$0xff]
    %v153 = vld [vmem:[#allocation5 + $0xb0] sm:$0xff]
    %v154 = vld [vmem:[#allocation5 + $0xb8] sm:$0xff]
    %v155 = vld [vmem:[#allocation5 + $0xc0] sm:$0xff]
    %v156 = vld [vmem:[#allocation5 + $0xc8] sm:$0xff]
    %v157 = vld [vmem:[#allocation5 + $0xd0] sm:$0xff]
    %v158 = vld [vmem:[#allocation5 + $0xd8] sm:$0xff]
    %v159 = vld [vmem:[#allocation5 + $0xe0] sm:$0xff]
    %v160 = vld [vmem:[#allocation5 + $0xe8] sm:$0xff]
    %v161 = vld [vmem:[#allocation5 + $0xf0] sm:$0xff]
    %v162 = vld [vmem:[#allocation5 + $0xf8] sm:$0xff]
    %v163 = vld [vmem:[#allocation5 + $0x100] sm:$0xff]
    %v164 = vld [vmem:[#allocation5 + $0x108] sm:$0xff]
    %v165 = vld [vmem:[#allocation5 + $0x110] sm:$0xff]
    %v166 = vld [vmem:[#allocation5 + $0x118] sm:$0xff]
    %v167 = vld [vmem:[#allocation5 + $0x120] sm:$0xff]
    %v168 = vld [vmem:[#allocation5 + $0x128] sm:$0xff]
    %v169 = vld [vmem:[#allocation5 + $0x130] sm:$0xff]
    %v170 = vld [vmem:[#allocation5 + $0x138] sm:$0xff]
    %v171 = vld [vmem:[#allocation5 + $0x140] sm:$0xff]
    %v172 = vld [vmem:[#allocation5 + $0x148] sm:$0xff]
    %v173 = vld [vmem:[#allocation5 + $0x150] sm:$0xff]
    %v174 = vld [vmem:[#allocation5 + $0x158] sm:$0xff]
    %v175 = vld [vmem:[#allocation5 + $0x160] sm:$0xff]
    %v176 = vld [vmem:[#allocation5 + $0x168] sm:$0xff]
    %v177 = vld [vmem:[#allocation5 + $0x170] sm:$0xff]
    %v178 = vld [vmem:[#allocation5 + $0x178] sm:$0xff]
    %v179 = vld [vmem:[#allocation5 + $0x180] sm:$0xff]
    %v180 = vld [vmem:[#allocation5 + $0x188] sm:$0xff]
    %v181 = vld [vmem:[#allocation5 + $0x190] sm:$0xff]
    %v182 = vld [vmem:[#allocation5 + $0x198] sm:$0xff]
    %v183 = vld [vmem:[#allocation5 + $0x1a0] sm:$0xff]
    %v184 = vld [vmem:[#allocation5 + $0x1a8] sm:$0xff]
    %v185 = vld [vmem:[#allocation5 + $0x1b0] sm:$0xff]
    %v186 = vld [vmem:[#allocation5 + $0x1b8] sm:$0xff]
    %v187 = vld [vmem:[#allocation5 + $0x1c0] sm:$0xff]
    %v188 = vld [vmem:[#allocation5 + $0x1c8] sm:$0xff]
    %v189 = vld [vmem:[#allocation5 + $0x1d0] sm:$0xff]
    %v190 = vld [vmem:[#allocation5 + $0x1d8] sm:$0xff]
    %v191 = vld [vmem:[#allocation5 + $0x1e0] sm:$0xff]
    %v192 = vld [vmem:[#allocation5 + $0x1e8] sm:$0xff]
    %v193 = vld [vmem:[#allocation5 + $0x1f0] sm:$0xff]
    %v194 = vld [vmem:[#allocation5 + $0x1f8] sm:$0xff]
    %v195 = vld [vmem:[#allocation5 + $0x200] sm:$0xff]
    %v196 = vld [vmem:[#allocation5 + $0x208] sm:$0xff]
    %v197 = vld [vmem:[#allocation5 + $0x210] sm:$0xff]
    %v198 = vld [vmem:[#allocation5 + $0x218] sm:$0xff]
    %v199 = vld [vmem:[#allocation5 + $0x220] sm:$0xff]
    %v200 = vld [vmem:[#allocation5 + $0x228] sm:$0xff]
    %v201 = vld [vmem:[#allocation5 + $0x230] sm:$0xff]
    %v202 = vld [vmem:[#allocation5 + $0x238] sm:$0xff]
    %v203 = vld [vmem:[#allocation5 + $0x240] sm:$0xff]
    %v204 = vld [vmem:[#allocation5 + $0x248] sm:$0xff]
    %v205 = vld [vmem:[#allocation5 + $0x250] sm:$0xff]
    %v206 = vld [vmem:[#allocation5 + $0x258] sm:$0xff]
    %v207 = vld [vmem:[#allocation5 + $0x260] sm:$0xff]
    %v208 = vld [vmem:[#allocation5 + $0x268] sm:$0xff]
    %v209 = vld [vmem:[#allocation5 + $0x270] sm:$0xff]
    %v210 = vld [vmem:[#allocation5 + $0x278] sm:$0xff]
    %v211 = vld [vmem:[#allocation5 + $0x280] sm:$0xff]
    %v212 = vld [vmem:[#allocation5 + $0x288] sm:$0xff]
    %v213 = vld [vmem:[#allocation5 + $0x290] sm:$0xff]
    %v214 = vld [vmem:[#allocation5 + $0x298] sm:$0xff]
    %v215 = vld [vmem:[#allocation5 + $0x2a0] sm:$0xff]
    %v216 = vld [vmem:[#allocation5 + $0x2a8] sm:$0xff]
    %v217 = vld [vmem:[#allocation5 + $0x2b0] sm:$0xff]
    %v218 = vld [vmem:[#allocation5 + $0x2b8] sm:$0xff]
    %v219 = vld [vmem:[#allocation5 + $0x2c0] sm:$0xff]
    %v220 = vld [vmem:[#allocation5 + $0x2c8] sm:$0xff]
    %v221 = vld [vmem:[#allocation5 + $0x2d0] sm:$0xff]
    %v222 = vld [vmem:[#allocation5 + $0x2d8] sm:$0xff]
    %v223 = vld [vmem:[#allocation5 + $0x2e0] sm:$0xff]
    %v224 = vld [vmem:[#allocation5 + $0x2e8] sm:$0xff]
    %v225 = vld [vmem:[#allocation5 + $0x2f0] sm:$0xff]
    %v226 = vld [vmem:[#allocation5 + $0x2f8] sm:$0xff]
    %v227 = vld [vmem:[#allocation5 + $0x300] sm:$0xff]
    %v228 = vld [vmem:[#allocation5 + $0x308] sm:$0xff]
    %v229 = vld [vmem:[#allocation5 + $0x310] sm:$0xff]
    %v230 = vld [vmem:[#allocation5 + $0x318] sm:$0xff]
    %v231 = vld [vmem:[#allocation5 + $0x320] sm:$0xff]
    %v232 = vld [vmem:[#allocation5 + $0x328] sm:$0xff]
    %v233 = vld [vmem:[#allocation5 + $0x330] sm:$0xff]
    %v234 = vld [vmem:[#allocation5 + $0x338] sm:$0xff]
    %v235 = vld [vmem:[#allocation5 + $0x340] sm:$0xff]
    %v236 = vld [vmem:[#allocation5 + $0x348] sm:$0xff]
    %v237 = vld [vmem:[#allocation5 + $0x350] sm:$0xff]
    %v238 = vld [vmem:[#allocation5 + $0x358] sm:$0xff]
    %v239 = vld [vmem:[#allocation5 + $0x360] sm:$0xff]
    %v240 = vld [vmem:[#allocation5 + $0x368] sm:$0xff]
    %v241 = vld [vmem:[#allocation5 + $0x370] sm:$0xff]
    %v242 = vld [vmem:[#allocation5 + $0x378] sm:$0xff]
    %v243 = vld [vmem:[#allocation5 + $0x380] sm:$0xff]
    %v244 = vld [vmem:[#allocation5 + $0x388] sm:$0xff]
    %v245 = vld [vmem:[#allocation5 + $0x390] sm:$0xff]
    %v246 = vld [vmem:[#allocation5 + $0x398] sm:$0xff]
    %v247 = vld [vmem:[#allocation5 + $0x3a0] sm:$0xff]
    %v248 = vld [vmem:[#allocation5 + $0x3a8] sm:$0xff]
    %v249 = vld [vmem:[#allocation5 + $0x3b0] sm:$0xff]
    %v250 = vld [vmem:[#allocation5 + $0x3b8] sm:$0xff]
    %v251 = vld [vmem:[#allocation5 + $0x3c0] sm:$0xff]
    %v252 = vld [vmem:[#allocation5 + $0x3c8] sm:$0xff]
    %v253 = vld [vmem:[#allocation5 + $0x3d0] sm:$0xff]
    %v254 = vld [vmem:[#allocation5 + $0x3d8] sm:$0xff]
    %v255 = vld [vmem:[#allocation5 + $0x3e0] sm:$0xff]
    %v256 = vld [vmem:[#allocation5 + $0x3e8] sm:$0xff]
    %v257 = vld [vmem:[#allocation5 + $0x3f0] sm:$0xff]
    %v258 = vld [vmem:[#allocation5 + $0x3f8] sm:$0xff]
    %v259 = vld [vmem:[#allocation5 + $0x400] sm:$0xff]
    %v260 = vld [vmem:[#allocation5 + $0x408] sm:$0xff]
    %v261 = vld [vmem:[#allocation5 + $0x410] sm:$0xff]
    %v262 = vld [vmem:[#allocation5 + $0x418] sm:$0xff]
    %v263 = vld [vmem:[#allocation5 + $0x420] sm:$0xff]
    %v264 = vld [vmem:[#allocation5 + $0x428] sm:$0xff]
    %v265 = vld [vmem:[#allocation5 + $0x430] sm:$0xff]
    %v266 = vld [vmem:[#allocation5 + $0x438] sm:$0xff]
    %v267 = vld [vmem:[#allocation5 + $0x440] sm:$0xff]
    %v268 = vld [vmem:[#allocation5 + $0x448] sm:$0xff]
    %v269 = vld [vmem:[#allocation5 + $0x450] sm:$0xff]
    %v270 = vld [vmem:[#allocation5 + $0x458] sm:$0xff]
    %v271 = vld [vmem:[#allocation5 + $0x460] sm:$0xff]
    %v272 = vld [vmem:[#allocation5 + $0x468] sm:$0xff]
    %v273 = vld [vmem:[#allocation5 + $0x470] sm:$0xff]
    %v274 = vld [vmem:[#allocation5 + $0x478] sm:$0xff]
    %v275 = vld [vmem:[#allocation5 + $0x480] sm:$0xff]
    %v276 = vld [vmem:[#allocation5 + $0x488] sm:$0xff]
    %v277 = vld [vmem:[#allocation5 + $0x490] sm:$0xff]
    %v278 = vld [vmem:[#allocation5 + $0x498] sm:$0xff]
    %v279 = vld [vmem:[#allocation5 + $0x4a0] sm:$0xff]
    %v280 = vld [vmem:[#allocation5 + $0x4a8] sm:$0xff]
    %v281 = vld [vmem:[#allocation5 + $0x4b0] sm:$0xff]
    %v282 = vld [vmem:[#allocation5 + $0x4b8] sm:$0xff]
    %v283 = vld [vmem:[#allocation5 + $0x4c0] sm:$0xff]
    %v284 = vld [vmem:[#allocation5 + $0x4c8] sm:$0xff]
    %v285 = vld [vmem:[#allocation5 + $0x4d0] sm:$0xff]
    %v286 = vld [vmem:[#allocation5 + $0x4d8] sm:$0xff]
    %v287 = vld [vmem:[#allocation5 + $0x4e0] sm:$0xff]
    %v288 = vld [vmem:[#allocation5 + $0x4e8] sm:$0xff]
    %v289 = vld [vmem:[#allocation5 + $0x4f0] sm:$0xff]
    %v290 = vld [vmem:[#allocation5 + $0x4f8] sm:$0xff]
    %v291 = vld [vmem:[#allocation5 + $0x500] sm:$0xff]
    %v292 = vld [vmem:[#allocation5 + $0x508] sm:$0xff]
    %v293 = vld [vmem:[#allocation5 + $0x510] sm:$0xff]
    %v294 = vld [vmem:[#allocation5 + $0x518] sm:$0xff]
    %v295 = vld [vmem:[#allocation5 + $0x520] sm:$0xff]
    %v296 = vld [vmem:[#allocation5 + $0x528] sm:$0xff]
    %v297 = vld [vmem:[#allocation5 + $0x530] sm:$0xff]
    %v298 = vld [vmem:[#allocation5 + $0x538] sm:$0xff]
    %v299 = vld [vmem:[#allocation5 + $0x540] sm:$0xff]
    %v300 = vld [vmem:[#allocation5 + $0x548] sm:$0xff]
    %v301 = vld [vmem:[#allocation5 + $0x550] sm:$0xff]
    %v302 = vld [vmem:[#allocation5 + $0x558] sm:$0xff]
    %v303 = vld [vmem:[#allocation5 + $0x560] sm:$0xff]
    %v304 = vld [vmem:[#allocation5 + $0x568] sm:$0xff]
    %v305 = vld [vmem:[#allocation5 + $0x570] sm:$0xff]
    %v306 = vld [vmem:[#allocation5 + $0x578] sm:$0xff]
    %v307 = vld [vmem:[#allocation5 + $0x580] sm:$0xff]
    %v308 = vld [vmem:[#allocation5 + $0x588] sm:$0xff]
    %v309 = vld [vmem:[#allocation5 + $0x590] sm:$0xff]
    %v310 = vld [vmem:[#allocation5 + $0x598] sm:$0xff]
    %v311 = vld [vmem:[#allocation5 + $0x5a0] sm:$0xff]
    %v312 = vld [vmem:[#allocation5 + $0x5a8] sm:$0xff]
    %v313 = vld [vmem:[#allocation5 + $0x5b0] sm:$0xff]
    %v314 = vld [vmem:[#allocation5 + $0x5b8] sm:$0xff]
    %v315 = vld [vmem:[#allocation5 + $0x5c0] sm:$0xff]
    %v316 = vld [vmem:[#allocation5 + $0x5c8] sm:$0xff]
    %v317 = vld [vmem:[#allocation5 + $0x5d0] sm:$0xff]
    %v318 = vld [vmem:[#allocation5 + $0x5d8] sm:$0xff]
    %v319 = vld [vmem:[#allocation5 + $0x5e0] sm:$0xff]
    %v320 = vld [vmem:[#allocation5 + $0x5e8] sm:$0xff]
    %v321 = vld [vmem:[#allocation5 + $0x5f0] sm:$0xff]
    %v322 = vld [vmem:[#allocation5 + $0x5f8] sm:$0xff]
    %v323 = vlaneseq
    %v324 = vshrl.u32 %v323, 7
    %v325 = vsub.s32 0, %v324
    %v326 = vrot.slane %v108, %v325
    %v327 = vlaneseq
    %v328 = vshrl.u32 %v327, 7
    %v329 = vsub.s32 0, %v328
    %v330 = vrot.slane %v109, %v329
    %v331 = vlaneseq
    %v332 = vshrl.u32 %v331, 7
    %v333 = vsub.s32 0, %v332
    %v334 = vrot.slane %v110, %v333
    %v335 = vlaneseq
    %v336 = vshrl.u32 %v335, 7
    %v337 = vsub.s32 0, %v336
    %v338 = vrot.slane %v111, %v337
    %v531 = vunpack.c.l.b16 %v131
    %v532 = vunpack.c.h.b16 %v131
    %v533 = vunpack.c.l.b16 %v132
    %v534 = vunpack.c.h.b16 %v132
    %v535 = vunpack.c.l.b16 %v133
    %v536 = vunpack.c.h.b16 %v133
    %v537 = vunpack.c.l.b16 %v134
    %v538 = vunpack.c.h.b16 %v134
    %v539 = vunpack.c.l.b16 %v135
    %v540 = vunpack.c.h.b16 %v135
    %v541 = vunpack.c.l.b16 %v136
    %v542 = vunpack.c.h.b16 %v136
    %v543 = vunpack.c.l.b16 %v137
    %v544 = vunpack.c.h.b16 %v137
    %v545 = vunpack.c.l.b16 %v138
    %v546 = vunpack.c.h.b16 %v138
    %v547 = vunpack.c.l.b16 %v139
    %v548 = vunpack.c.h.b16 %v139
    %v549 = vunpack.c.l.b16 %v140
    %v550 = vunpack.c.h.b16 %v140
    %v551 = vunpack.c.l.b16 %v141
    %v552 = vunpack.c.h.b16 %v141
    %v553 = vunpack.c.l.b16 %v142
    %v554 = vunpack.c.h.b16 %v142
    %v555 = vunpack.c.l.b16 %v143
    %v556 = vunpack.c.h.b16 %v143
    %v557 = vunpack.c.l.b16 %v144
    %v558 = vunpack.c.h.b16 %v144
    %v559 = vunpack.c.l.b16 %v145
    %v560 = vunpack.c.h.b16 %v145
    %v561 = vunpack.c.l.b16 %v146
    %v562 = vunpack.c.h.b16 %v146
    %v563 = vunpack.c.l.b16 %v147
    %v564 = vunpack.c.h.b16 %v147
    %v565 = vunpack.c.l.b16 %v148
    %v566 = vunpack.c.h.b16 %v148
    %v567 = vunpack.c.l.b16 %v149
    %v568 = vunpack.c.h.b16 %v149
    %v569 = vunpack.c.l.b16 %v150
    %v570 = vunpack.c.h.b16 %v150
    %v571 = vunpack.c.l.b16 %v151
    %v572 = vunpack.c.h.b16 %v151
    %v573 = vunpack.c.l.b16 %v152
    %v574 = vunpack.c.h.b16 %v152
    %v575 = vunpack.c.l.b16 %v153
    %v576 = vunpack.c.h.b16 %v153
    %v577 = vunpack.c.l.b16 %v154
    %v578 = vunpack.c.h.b16 %v154
    %v579 = vunpack.c.l.b16 %v155
    %v580 = vunpack.c.h.b16 %v155
    %v581 = vunpack.c.l.b16 %v156
    %v582 = vunpack.c.h.b16 %v156
    %v583 = vunpack.c.l.b16 %v157
    %v584 = vunpack.c.h.b16 %v157
    %v585 = vunpack.c.l.b16 %v158
    %v586 = vunpack.c.h.b16 %v158
    %v587 = vunpack.c.l.b16 %v159
    %v588 = vunpack.c.h.b16 %v159
    %v589 = vunpack.c.l.b16 %v160
    %v590 = vunpack.c.h.b16 %v160
    %v591 = vunpack.c.l.b16 %v161
    %v592 = vunpack.c.h.b16 %v161
    %v593 = vunpack.c.l.b16 %v162
    %v594 = vunpack.c.h.b16 %v162
    %v595 = vunpack.c.l.b16 %v163
    %v596 = vunpack.c.h.b16 %v163
    %v597 = vunpack.c.l.b16 %v164
    %v598 = vunpack.c.h.b16 %v164
    %v599 = vunpack.c.l.b16 %v165
    %v600 = vunpack.c.h.b16 %v165
    %v601 = vunpack.c.l.b16 %v166
    %v602 = vunpack.c.h.b16 %v166
    %v603 = vunpack.c.l.b16 %v167
    %v604 = vunpack.c.h.b16 %v167
    %v605 = vunpack.c.l.b16 %v168
    %v606 = vunpack.c.h.b16 %v168
    %v607 = vunpack.c.l.b16 %v169
    %v608 = vunpack.c.h.b16 %v169
    %v609 = vunpack.c.l.b16 %v170
    %v610 = vunpack.c.h.b16 %v170
    %v611 = vunpack.c.l.b16 %v171
    %v612 = vunpack.c.h.b16 %v171
    %v613 = vunpack.c.l.b16 %v172
    %v614 = vunpack.c.h.b16 %v172
    %v615 = vunpack.c.l.b16 %v173
    %v616 = vunpack.c.h.b16 %v173
    %v617 = vunpack.c.l.b16 %v174
    %v618 = vunpack.c.h.b16 %v174
    %v619 = vunpack.c.l.b16 %v175
    %v620 = vunpack.c.h.b16 %v175
    %v621 = vunpack.c.l.b16 %v176
    %v622 = vunpack.c.h.b16 %v176
    %v623 = vunpack.c.l.b16 %v177
    %v624 = vunpack.c.h.b16 %v177
    %v625 = vunpack.c.l.b16 %v178
    %v626 = vunpack.c.h.b16 %v178
    %v627 = vunpack.c.l.b16 %v179
    %v628 = vunpack.c.h.b16 %v179
    %v629 = vunpack.c.l.b16 %v180
    %v630 = vunpack.c.h.b16 %v180
    %v631 = vunpack.c.l.b16 %v181
    %v632 = vunpack.c.h.b16 %v181
    %v633 = vunpack.c.l.b16 %v182
    %v634 = vunpack.c.h.b16 %v182
    %v635 = vunpack.c.l.b16 %v183
    %v636 = vunpack.c.h.b16 %v183
    %v637 = vunpack.c.l.b16 %v184
    %v638 = vunpack.c.h.b16 %v184
    %v639 = vunpack.c.l.b16 %v185
    %v640 = vunpack.c.h.b16 %v185
    %v641 = vunpack.c.l.b16 %v186
    %v642 = vunpack.c.h.b16 %v186
    %v643 = vunpack.c.l.b16 %v187
    %v644 = vunpack.c.h.b16 %v187
    %v645 = vunpack.c.l.b16 %v188
    %v646 = vunpack.c.h.b16 %v188
    %v647 = vunpack.c.l.b16 %v189
    %v648 = vunpack.c.h.b16 %v189
    %v649 = vunpack.c.l.b16 %v190
    %v650 = vunpack.c.h.b16 %v190
    %v651 = vunpack.c.l.b16 %v191
    %v652 = vunpack.c.h.b16 %v191
    %v653 = vunpack.c.l.b16 %v192
    %v654 = vunpack.c.h.b16 %v192
    %v655 = vunpack.c.l.b16 %v193
    %v656 = vunpack.c.h.b16 %v193
    %v657 = vunpack.c.l.b16 %v194
    %v658 = vunpack.c.h.b16 %v194
    %v659 = vunpack.c.l.b16 %v195
    %v660 = vunpack.c.h.b16 %v195
    %v661 = vunpack.c.l.b16 %v196
    %v662 = vunpack.c.h.b16 %v196
    %v663 = vunpack.c.l.b16 %v197
    %v664 = vunpack.c.h.b16 %v197
    %v665 = vunpack.c.l.b16 %v198
    %v666 = vunpack.c.h.b16 %v198
    %v667 = vunpack.c.l.b16 %v199
    %v668 = vunpack.c.h.b16 %v199
    %v669 = vunpack.c.l.b16 %v200
    %v670 = vunpack.c.h.b16 %v200
    %v671 = vunpack.c.l.b16 %v201
    %v672 = vunpack.c.h.b16 %v201
    %v673 = vunpack.c.l.b16 %v202
    %v674 = vunpack.c.h.b16 %v202
    %v675 = vunpack.c.l.b16 %v203
    %v676 = vunpack.c.h.b16 %v203
    %v677 = vunpack.c.l.b16 %v204
    %v678 = vunpack.c.h.b16 %v204
    %v679 = vunpack.c.l.b16 %v205
    %v680 = vunpack.c.h.b16 %v205
    %v681 = vunpack.c.l.b16 %v206
    %v682 = vunpack.c.h.b16 %v206
    %v683 = vunpack.c.l.b16 %v207
    %v684 = vunpack.c.h.b16 %v207
    %v685 = vunpack.c.l.b16 %v208
    %v686 = vunpack.c.h.b16 %v208
    %v687 = vunpack.c.l.b16 %v209
    %v688 = vunpack.c.h.b16 %v209
    %v689 = vunpack.c.l.b16 %v210
    %v690 = vunpack.c.h.b16 %v210
    %v691 = vunpack.c.l.b16 %v211
    %v692 = vunpack.c.h.b16 %v211
    %v693 = vunpack.c.l.b16 %v212
    %v694 = vunpack.c.h.b16 %v212
    %v695 = vunpack.c.l.b16 %v213
    %v696 = vunpack.c.h.b16 %v213
    %v697 = vunpack.c.l.b16 %v214
    %v698 = vunpack.c.h.b16 %v214
    %v699 = vunpack.c.l.b16 %v215
    %v700 = vunpack.c.h.b16 %v215
    %v701 = vunpack.c.l.b16 %v216
    %v702 = vunpack.c.h.b16 %v216
    %v703 = vunpack.c.l.b16 %v217
    %v704 = vunpack.c.h.b16 %v217
    %v705 = vunpack.c.l.b16 %v218
    %v706 = vunpack.c.h.b16 %v218
    %v707 = vunpack.c.l.b16 %v219
    %v708 = vunpack.c.h.b16 %v219
    %v709 = vunpack.c.l.b16 %v220
    %v710 = vunpack.c.h.b16 %v220
    %v711 = vunpack.c.l.b16 %v221
    %v712 = vunpack.c.h.b16 %v221
    %v713 = vunpack.c.l.b16 %v222
    %v714 = vunpack.c.h.b16 %v222
    %v715 = vunpack.c.l.b16 %v223
    %v716 = vunpack.c.h.b16 %v223
    %v717 = vunpack.c.l.b16 %v224
    %v718 = vunpack.c.h.b16 %v224
    %v719 = vunpack.c.l.b16 %v225
    %v720 = vunpack.c.h.b16 %v225
    %v721 = vunpack.c.l.b16 %v226
    %v722 = vunpack.c.h.b16 %v226
    %v723 = vunpack.c.l.b16 %v227
    %v724 = vunpack.c.h.b16 %v227
    %v725 = vunpack.c.l.b16 %v228
    %v726 = vunpack.c.h.b16 %v228
    %v727 = vunpack.c.l.b16 %v229
    %v728 = vunpack.c.h.b16 %v229
    %v729 = vunpack.c.l.b16 %v230
    %v730 = vunpack.c.h.b16 %v230
    %v731 = vunpack.c.l.b16 %v231
    %v732 = vunpack.c.h.b16 %v231
    %v733 = vunpack.c.l.b16 %v232
    %v734 = vunpack.c.h.b16 %v232
    %v735 = vunpack.c.l.b16 %v233
    %v736 = vunpack.c.h.b16 %v233
    %v737 = vunpack.c.l.b16 %v234
    %v738 = vunpack.c.h.b16 %v234
    %v739 = vunpack.c.l.b16 %v235
    %v740 = vunpack.c.h.b16 %v235
    %v741 = vunpack.c.l.b16 %v236
    %v742 = vunpack.c.h.b16 %v236
    %v743 = vunpack.c.l.b16 %v237
    %v744 = vunpack.c.h.b16 %v237
    %v745 = vunpack.c.l.b16 %v238
    %v746 = vunpack.c.h.b16 %v238
    %v747 = vunpack.c.l.b16 %v239
    %v748 = vunpack.c.h.b16 %v239
    %v749 = vunpack.c.l.b16 %v240
    %v750 = vunpack.c.h.b16 %v240
    %v751 = vunpack.c.l.b16 %v241
    %v752 = vunpack.c.h.b16 %v241
    %v753 = vunpack.c.l.b16 %v242
    %v754 = vunpack.c.h.b16 %v242
    %v755 = vunpack.c.l.b16 %v243
    %v756 = vunpack.c.h.b16 %v243
    %v757 = vunpack.c.l.b16 %v244
    %v758 = vunpack.c.h.b16 %v244
    %v759 = vunpack.c.l.b16 %v245
    %v760 = vunpack.c.h.b16 %v245
    %v761 = vunpack.c.l.b16 %v246
    %v762 = vunpack.c.h.b16 %v246
    %v763 = vunpack.c.l.b16 %v247
    %v764 = vunpack.c.h.b16 %v247
    %v765 = vunpack.c.l.b16 %v248
    %v766 = vunpack.c.h.b16 %v248
    %v767 = vunpack.c.l.b16 %v249
    %v768 = vunpack.c.h.b16 %v249
    %v769 = vunpack.c.l.b16 %v250
    %v770 = vunpack.c.h.b16 %v250
    %v771 = vunpack.c.l.b16 %v251
    %v772 = vunpack.c.h.b16 %v251
    %v773 = vunpack.c.l.b16 %v252
    %v774 = vunpack.c.h.b16 %v252
    %v775 = vunpack.c.l.b16 %v253
    %v776 = vunpack.c.h.b16 %v253
    %v777 = vunpack.c.l.b16 %v254
    %v778 = vunpack.c.h.b16 %v254
    %v779 = vunpack.c.l.b16 %v255
    %v780 = vunpack.c.h.b16 %v255
    %v781 = vunpack.c.l.b16 %v256
    %v782 = vunpack.c.h.b16 %v256
    %v783 = vunpack.c.l.b16 %v257
    %v784 = vunpack.c.h.b16 %v257
    %v785 = vunpack.c.l.b16 %v258
    %v786 = vunpack.c.h.b16 %v258
    %v787 = vunpack.c.l.b16 %v259
    %v788 = vunpack.c.h.b16 %v259
    %v789 = vunpack.c.l.b16 %v260
    %v790 = vunpack.c.h.b16 %v260
    %v791 = vunpack.c.l.b16 %v261
    %v792 = vunpack.c.h.b16 %v261
    %v793 = vunpack.c.l.b16 %v262
    %v794 = vunpack.c.h.b16 %v262
    %v795 = vunpack.c.l.b16 %v263
    %v796 = vunpack.c.h.b16 %v263
    %v797 = vunpack.c.l.b16 %v264
    %v798 = vunpack.c.h.b16 %v264
    %v799 = vunpack.c.l.b16 %v265
    %v800 = vunpack.c.h.b16 %v265
    %v801 = vunpack.c.l.b16 %v266
    %v802 = vunpack.c.h.b16 %v266
    %v803 = vunpack.c.l.b16 %v267
    %v804 = vunpack.c.h.b16 %v267
    %v805 = vunpack.c.l.b16 %v268
    %v806 = vunpack.c.h.b16 %v268
    %v807 = vunpack.c.l.b16 %v269
    %v808 = vunpack.c.h.b16 %v269
    %v809 = vunpack.c.l.b16 %v270
    %v810 = vunpack.c.h.b16 %v270
    %v811 = vunpack.c.l.b16 %v271
    %v812 = vunpack.c.h.b16 %v271
    %v813 = vunpack.c.l.b16 %v272
    %v814 = vunpack.c.h.b16 %v272
    %v815 = vunpack.c.l.b16 %v273
    %v816 = vunpack.c.h.b16 %v273
    %v817 = vunpack.c.l.b16 %v274
    %v818 = vunpack.c.h.b16 %v274
    %v819 = vunpack.c.l.b16 %v275
    %v820 = vunpack.c.h.b16 %v275
    %v821 = vunpack.c.l.b16 %v276
    %v822 = vunpack.c.h.b16 %v276
    %v823 = vunpack.c.l.b16 %v277
    %v824 = vunpack.c.h.b16 %v277
    %v825 = vunpack.c.l.b16 %v278
    %v826 = vunpack.c.h.b16 %v278
    %v827 = vunpack.c.l.b16 %v279
    %v828 = vunpack.c.h.b16 %v279
    %v829 = vunpack.c.l.b16 %v280
    %v830 = vunpack.c.h.b16 %v280
    %v831 = vunpack.c.l.b16 %v281
    %v832 = vunpack.c.h.b16 %v281
    %v833 = vunpack.c.l.b16 %v282
    %v834 = vunpack.c.h.b16 %v282
    %v835 = vunpack.c.l.b16 %v283
    %v836 = vunpack.c.h.b16 %v283
    %v837 = vunpack.c.l.b16 %v284
    %v838 = vunpack.c.h.b16 %v284
    %v839 = vunpack.c.l.b16 %v285
    %v840 = vunpack.c.h.b16 %v285
    %v841 = vunpack.c.l.b16 %v286
    %v842 = vunpack.c.h.b16 %v286
    %v843 = vunpack.c.l.b16 %v287
    %v844 = vunpack.c.h.b16 %v287
    %v845 = vunpack.c.l.b16 %v288
    %v846 = vunpack.c.h.b16 %v288
    %v847 = vunpack.c.l.b16 %v289
    %v848 = vunpack.c.h.b16 %v289
    %v849 = vunpack.c.l.b16 %v290
    %v850 = vunpack.c.h.b16 %v290
    %v851 = vunpack.c.l.b16 %v291
    %v852 = vunpack.c.h.b16 %v291
    %v853 = vunpack.c.l.b16 %v292
    %v854 = vunpack.c.h.b16 %v292
    %v855 = vunpack.c.l.b16 %v293
    %v856 = vunpack.c.h.b16 %v293
    %v857 = vunpack.c.l.b16 %v294
    %v858 = vunpack.c.h.b16 %v294
    %v859 = vunpack.c.l.b16 %v295
    %v860 = vunpack.c.h.b16 %v295
    %v861 = vunpack.c.l.b16 %v296
    %v862 = vunpack.c.h.b16 %v296
    %v863 = vunpack.c.l.b16 %v297
    %v864 = vunpack.c.h.b16 %v297
    %v865 = vunpack.c.l.b16 %v298
    %v866 = vunpack.c.h.b16 %v298
    %v867 = vunpack.c.l.b16 %v299
    %v868 = vunpack.c.h.b16 %v299
    %v869 = vunpack.c.l.b16 %v300
    %v870 = vunpack.c.h.b16 %v300
    %v871 = vunpack.c.l.b16 %v301
    %v872 = vunpack.c.h.b16 %v301
    %v873 = vunpack.c.l.b16 %v302
    %v874 = vunpack.c.h.b16 %v302
    %v875 = vunpack.c.l.b16 %v303
    %v876 = vunpack.c.h.b16 %v303
    %v877 = vunpack.c.l.b16 %v304
    %v878 = vunpack.c.h.b16 %v304
    %v879 = vunpack.c.l.b16 %v305
    %v880 = vunpack.c.h.b16 %v305
    %v881 = vunpack.c.l.b16 %v306
    %v882 = vunpack.c.h.b16 %v306
    %v883 = vunpack.c.l.b16 %v307
    %v884 = vunpack.c.h.b16 %v307
    %v885 = vunpack.c.l.b16 %v308
    %v886 = vunpack.c.h.b16 %v308
    %v887 = vunpack.c.l.b16 %v309
    %v888 = vunpack.c.h.b16 %v309
    %v889 = vunpack.c.l.b16 %v310
    %v890 = vunpack.c.h.b16 %v310
    %v891 = vunpack.c.l.b16 %v311
    %v892 = vunpack.c.h.b16 %v311
    %v893 = vunpack.c.l.b16 %v312
    %v894 = vunpack.c.h.b16 %v312
    %v895 = vunpack.c.l.b16 %v313
    %v896 = vunpack.c.h.b16 %v313
    %v897 = vunpack.c.l.b16 %v314
    %v898 = vunpack.c.h.b16 %v314
    %v899 = vunpack.c.l.b16 %v315
    %v900 = vunpack.c.h.b16 %v315
    %v901 = vunpack.c.l.b16 %v316
    %v902 = vunpack.c.h.b16 %v316
    %v903 = vunpack.c.l.b16 %v317
    %v904 = vunpack.c.h.b16 %v317
    %v905 = vunpack.c.l.b16 %v318
    %v906 = vunpack.c.h.b16 %v318
    %v907 = vunpack.c.l.b16 %v319
    %v908 = vunpack.c.h.b16 %v319
    %v909 = vunpack.c.l.b16 %v320
    %v910 = vunpack.c.h.b16 %v320
    %v911 = vunpack.c.l.b16 %v321
    %v912 = vunpack.c.h.b16 %v321
    %v913 = vunpack.c.l.b16 %v322
    %v914 = vunpack.c.h.b16 %v322
    %v915 = vpack.c.b16 %v535, %v531
    %v916 = vpack.c.b16 %v536, %v532
    %v917 = vpack.c.b16 %v537, %v533
    %v918 = vpack.c.b16 %v538, %v534
    %v919 = vpack.c.b16 %v543, %v539
    %v920 = vpack.c.b16 %v544, %v540
    %v921 = vpack.c.b16 %v545, %v541
    %v922 = vpack.c.b16 %v546, %v542
    %v923 = vpack.c.b16 %v551, %v547
    %v924 = vpack.c.b16 %v552, %v548
    %v925 = vpack.c.b16 %v553, %v549
    %v926 = vpack.c.b16 %v554, %v550
    %v927 = vpack.c.b16 %v559, %v555
    %v928 = vpack.c.b16 %v560, %v556
    %v929 = vpack.c.b16 %v561, %v557
    %v930 = vpack.c.b16 %v562, %v558
    %v931 = vpack.c.b16 %v567, %v563
    %v932 = vpack.c.b16 %v568, %v564
    %v933 = vpack.c.b16 %v569, %v565
    %v934 = vpack.c.b16 %v570, %v566
    %v935 = vpack.c.b16 %v575, %v571
    %v936 = vpack.c.b16 %v576, %v572
    %v937 = vpack.c.b16 %v577, %v573
    %v938 = vpack.c.b16 %v578, %v574
    %v939 = vpack.c.b16 %v583, %v579
    %v940 = vpack.c.b16 %v584, %v580
    %v941 = vpack.c.b16 %v585, %v581
    %v942 = vpack.c.b16 %v586, %v582
    %v943 = vpack.c.b16 %v591, %v587
    %v944 = vpack.c.b16 %v592, %v588
    %v945 = vpack.c.b16 %v593, %v589
    %v946 = vpack.c.b16 %v594, %v590
    %v947 = vpack.c.b16 %v599, %v595
    %v948 = vpack.c.b16 %v600, %v596
    %v949 = vpack.c.b16 %v601, %v597
    %v950 = vpack.c.b16 %v602, %v598
    %v951 = vpack.c.b16 %v607, %v603
    %v952 = vpack.c.b16 %v608, %v604
    %v953 = vpack.c.b16 %v609, %v605
    %v954 = vpack.c.b16 %v610, %v606
    %v955 = vpack.c.b16 %v615, %v611
    %v956 = vpack.c.b16 %v616, %v612
    %v957 = vpack.c.b16 %v617, %v613
    %v958 = vpack.c.b16 %v618, %v614
    %v959 = vpack.c.b16 %v623, %v619
    %v960 = vpack.c.b16 %v624, %v620
    %v961 = vpack.c.b16 %v625, %v621
    %v962 = vpack.c.b16 %v626, %v622
    %v963 = vpack.c.b16 %v631, %v627
    %v964 = vpack.c.b16 %v632, %v628
    %v965 = vpack.c.b16 %v633, %v629
    %v966 = vpack.c.b16 %v634, %v630
    %v967 = vpack.c.b16 %v639, %v635
    %v968 = vpack.c.b16 %v640, %v636
    %v969 = vpack.c.b16 %v641, %v637
    %v970 = vpack.c.b16 %v642, %v638
    %v971 = vpack.c.b16 %v647, %v643
    %v972 = vpack.c.b16 %v648, %v644
    %v973 = vpack.c.b16 %v649, %v645
    %v974 = vpack.c.b16 %v650, %v646
    %v975 = vpack.c.b16 %v655, %v651
    %v976 = vpack.c.b16 %v656, %v652
    %v977 = vpack.c.b16 %v657, %v653
    %v978 = vpack.c.b16 %v658, %v654
    %v979 = vpack.c.b16 %v663, %v659
    %v980 = vpack.c.b16 %v664, %v660
    %v981 = vpack.c.b16 %v665, %v661
    %v982 = vpack.c.b16 %v666, %v662
    %v983 = vpack.c.b16 %v671, %v667
    %v984 = vpack.c.b16 %v672, %v668
    %v985 = vpack.c.b16 %v673, %v669
    %v986 = vpack.c.b16 %v674, %v670
    %v987 = vpack.c.b16 %v679, %v675
    %v988 = vpack.c.b16 %v680, %v676
    %v989 = vpack.c.b16 %v681, %v677
    %v990 = vpack.c.b16 %v682, %v678
    %v991 = vpack.c.b16 %v687, %v683
    %v992 = vpack.c.b16 %v688, %v684
    %v993 = vpack.c.b16 %v689, %v685
    %v994 = vpack.c.b16 %v690, %v686
    %v995 = vpack.c.b16 %v695, %v691
    %v996 = vpack.c.b16 %v696, %v692
    %v997 = vpack.c.b16 %v697, %v693
    %v998 = vpack.c.b16 %v698, %v694
    %v999 = vpack.c.b16 %v703, %v699
    %v1000 = vpack.c.b16 %v704, %v700
    %v1001 = vpack.c.b16 %v705, %v701
    %v1002 = vpack.c.b16 %v706, %v702
    %v1003 = vpack.c.b16 %v711, %v707
    %v1004 = vpack.c.b16 %v712, %v708
    %v1005 = vpack.c.b16 %v713, %v709
    %v1006 = vpack.c.b16 %v714, %v710
    %v1007 = vpack.c.b16 %v719, %v715
    %v1008 = vpack.c.b16 %v720, %v716
    %v1009 = vpack.c.b16 %v721, %v717
    %v1010 = vpack.c.b16 %v722, %v718
    %v1011 = vpack.c.b16 %v727, %v723
    %v1012 = vpack.c.b16 %v728, %v724
    %v1013 = vpack.c.b16 %v729, %v725
    %v1014 = vpack.c.b16 %v730, %v726
    %v1015 = vpack.c.b16 %v735, %v731
    %v1016 = vpack.c.b16 %v736, %v732
    %v1017 = vpack.c.b16 %v737, %v733
    %v1018 = vpack.c.b16 %v738, %v734
    %v1019 = vpack.c.b16 %v743, %v739
    %v1020 = vpack.c.b16 %v744, %v740
    %v1021 = vpack.c.b16 %v745, %v741
    %v1022 = vpack.c.b16 %v746, %v742
    %v1023 = vpack.c.b16 %v751, %v747
    %v1024 = vpack.c.b16 %v752, %v748
    %v1025 = vpack.c.b16 %v753, %v749
    %v1026 = vpack.c.b16 %v754, %v750
    %v1027 = vpack.c.b16 %v759, %v755
    %v1028 = vpack.c.b16 %v760, %v756
    %v1029 = vpack.c.b16 %v761, %v757
    %v1030 = vpack.c.b16 %v762, %v758
    %v1031 = vpack.c.b16 %v767, %v763
    %v1032 = vpack.c.b16 %v768, %v764
    %v1033 = vpack.c.b16 %v769, %v765
    %v1034 = vpack.c.b16 %v770, %v766
    %v1035 = vpack.c.b16 %v775, %v771
    %v1036 = vpack.c.b16 %v776, %v772
    %v1037 = vpack.c.b16 %v777, %v773
    %v1038 = vpack.c.b16 %v778, %v774
    %v1039 = vpack.c.b16 %v783, %v779
    %v1040 = vpack.c.b16 %v784, %v780
    %v1041 = vpack.c.b16 %v785, %v781
    %v1042 = vpack.c.b16 %v786, %v782
    %v1043 = vpack.c.b16 %v791, %v787
    %v1044 = vpack.c.b16 %v792, %v788
    %v1045 = vpack.c.b16 %v793, %v789
    %v1046 = vpack.c.b16 %v794, %v790
    %v1047 = vpack.c.b16 %v799, %v795
    %v1048 = vpack.c.b16 %v800, %v796
    %v1049 = vpack.c.b16 %v801, %v797
    %v1050 = vpack.c.b16 %v802, %v798
    %v1051 = vpack.c.b16 %v807, %v803
    %v1052 = vpack.c.b16 %v808, %v804
    %v1053 = vpack.c.b16 %v809, %v805
    %v1054 = vpack.c.b16 %v810, %v806
    %v1055 = vpack.c.b16 %v815, %v811
    %v1056 = vpack.c.b16 %v816, %v812
    %v1057 = vpack.c.b16 %v817, %v813
    %v1058 = vpack.c.b16 %v818, %v814
    %v1059 = vpack.c.b16 %v823, %v819
    %v1060 = vpack.c.b16 %v824, %v820
    %v1061 = vpack.c.b16 %v825, %v821
    %v1062 = vpack.c.b16 %v826, %v822
    %v1063 = vpack.c.b16 %v831, %v827
    %v1064 = vpack.c.b16 %v832, %v828
    %v1065 = vpack.c.b16 %v833, %v829
    %v1066 = vpack.c.b16 %v834, %v830
    %v1067 = vpack.c.b16 %v839, %v835
    %v1068 = vpack.c.b16 %v840, %v836
    %v1069 = vpack.c.b16 %v841, %v837
    %v1070 = vpack.c.b16 %v842, %v838
    %v1071 = vpack.c.b16 %v847, %v843
    %v1072 = vpack.c.b16 %v848, %v844
    %v1073 = vpack.c.b16 %v849, %v845
    %v1074 = vpack.c.b16 %v850, %v846
    %v1075 = vpack.c.b16 %v855, %v851
    %v1076 = vpack.c.b16 %v856, %v852
    %v1077 = vpack.c.b16 %v857, %v853
    %v1078 = vpack.c.b16 %v858, %v854
    %v1079 = vpack.c.b16 %v863, %v859
    %v1080 = vpack.c.b16 %v864, %v860
    %v1081 = vpack.c.b16 %v865, %v861
    %v1082 = vpack.c.b16 %v866, %v862
    %v1083 = vpack.c.b16 %v871, %v867
    %v1084 = vpack.c.b16 %v872, %v868
    %v1085 = vpack.c.b16 %v873, %v869
    %v1086 = vpack.c.b16 %v874, %v870
    %v1087 = vpack.c.b16 %v879, %v875
    %v1088 = vpack.c.b16 %v880, %v876
    %v1089 = vpack.c.b16 %v881, %v877
    %v1090 = vpack.c.b16 %v882, %v878
    %v1091 = vpack.c.b16 %v887, %v883
    %v1092 = vpack.c.b16 %v888, %v884
    %v1093 = vpack.c.b16 %v889, %v885
    %v1094 = vpack.c.b16 %v890, %v886
    %v1095 = vpack.c.b16 %v895, %v891
    %v1096 = vpack.c.b16 %v896, %v892
    %v1097 = vpack.c.b16 %v897, %v893
    %v1098 = vpack.c.b16 %v898, %v894
    %v1099 = vpack.c.b16 %v903, %v899
    %v1100 = vpack.c.b16 %v904, %v900
    %v1101 = vpack.c.b16 %v905, %v901
    %v1102 = vpack.c.b16 %v906, %v902
    %v1103 = vpack.c.b16 %v911, %v907
    %v1104 = vpack.c.b16 %v912, %v908
    %v1105 = vpack.c.b16 %v913, %v909
    %v1106 = vpack.c.b16 %v914, %v910
    %1299 = vmatprep.subr.bf16.mxu0 %v916
    %1300 = vmatpush1.bf16.msra.mxu0 %v915
    %1301 = vmatprep.subr.bf16.mxu0 %v920
    %1302 = vmatpush1.bf16.msra.mxu0 %v919
    %1303 = vmatprep.subr.bf16.mxu0 %v924
    %1304 = vmatpush1.bf16.msra.mxu0 %v923
    %1305 = vmatprep.subr.bf16.mxu0 %v928
    %1306 = vmatpush1.bf16.msra.mxu0 %v927
    %1307 = vmatprep.subr.bf16.mxu0 %v932
    %1308 = vmatpush1.bf16.msra.mxu0 %v931
    %1309 = vmatprep.subr.bf16.mxu0 %v936
    %1310 = vmatpush1.bf16.msra.mxu0 %v935
    %1311 = vmatprep.subr.bf16.mxu0 %v940
    %1312 = vmatpush1.bf16.msra.mxu0 %v939
    %1313 = vmatprep.subr.bf16.mxu0 %v944
    %1314 = vmatpush1.bf16.msra.mxu0 %v943
    %1315 = vmatprep.subr.bf16.mxu0 %v948
    %1316 = vmatpush1.bf16.msra.mxu0 %v947
    %1317 = vmatprep.subr.bf16.mxu0 %v952
    %1318 = vmatpush1.bf16.msra.mxu0 %v951
    %1319 = vmatprep.subr.bf16.mxu0 %v956
    %1320 = vmatpush1.bf16.msra.mxu0 %v955
    %1321 = vmatprep.subr.bf16.mxu0 %v960
    %1322 = vmatpush1.bf16.msra.mxu0 %v959
    %1323 = vmatprep.subr.bf16.mxu0 %v964
    %1324 = vmatpush1.bf16.msra.mxu0 %v963
    %1325 = vmatprep.subr.bf16.mxu0 %v968
    %1326 = vmatpush1.bf16.msra.mxu0 %v967
    %1327 = vmatprep.subr.bf16.mxu0 %v972
    %1328 = vmatpush1.bf16.msra.mxu0 %v971
    %1329 = vmatprep.subr.bf16.mxu0 %v976
    %1330 = vmatpush1.bf16.msra.mxu0 %v975
    %1331 = vmatprep.mubr.bf16.mxu0 %v126
    %1332 = vmatmul.mubr.bf16.gmra.mrb[0].mxu0 %v125
    %v1333 = vpop.f32.mrb[0].mxu0
    %v1334 = vadd.f32 %v326, %v1333
    %v1335 = vpop.f32.mrb[0].mxu0
    %v1336 = vadd.f32 %v330, %v1335
    %v1337 = vpop.f32.mrb[0].mxu0
    %v1338 = vpop.f32.mrb[0].mxu0
    %1339 = vdwg.mxu0
    %1340 = vmatprep.subr.bf16.mxu0 %v980
    %1341 = vmatpush1.bf16.msra.mxu0 %v979
    %1342 = vmatprep.subr.bf16.mxu0 %v984
    %1343 = vmatpush1.bf16.msra.mxu0 %v983
    %1344 = vmatprep.subr.bf16.mxu0 %v988
    %1345 = vmatpush1.bf16.msra.mxu0 %v987
    %1346 = vmatprep.subr.bf16.mxu0 %v992
    %1347 = vmatpush1.bf16.msra.mxu0 %v991
    %1348 = vmatprep.subr.bf16.mxu0 %v996
    %1349 = vmatpush1.bf16.msra.mxu0 %v995
    %1350 = vmatprep.subr.bf16.mxu0 %v1000
    %1351 = vmatpush1.bf16.msra.mxu0 %v999
    %1352 = vmatprep.subr.bf16.mxu0 %v1004
    %1353 = vmatpush1.bf16.msra.mxu0 %v1003
    %1354 = vmatprep.subr.bf16.mxu0 %v1008
    %1355 = vmatpush1.bf16.msra.mxu0 %v1007
    %1356 = vmatprep.subr.bf16.mxu0 %v1012
    %1357 = vmatpush1.bf16.msra.mxu0 %v1011
    %1358 = vmatprep.subr.bf16.mxu0 %v1016
    %1359 = vmatpush1.bf16.msra.mxu0 %v1015
    %1360 = vmatprep.subr.bf16.mxu0 %v1020
    %1361 = vmatpush1.bf16.msra.mxu0 %v1019
    %1362 = vmatprep.subr.bf16.mxu0 %v1024
    %1363 = vmatpush1.bf16.msra.mxu0 %v1023
    %1364 = vmatprep.subr.bf16.mxu0 %v1028
    %1365 = vmatpush1.bf16.msra.mxu0 %v1027
    %1366 = vmatprep.subr.bf16.mxu0 %v1032
    %1367 = vmatpush1.bf16.msra.mxu0 %v1031
    %1368 = vmatprep.subr.bf16.mxu0 %v1036
    %1369 = vmatpush1.bf16.msra.mxu0 %v1035
    %1370 = vmatprep.subr.bf16.mxu0 %v1040
    %1371 = vmatpush1.bf16.msra.mxu0 %v1039
    %1372 = vmatprep.mubr.bf16.mxu0 %v128
    %1373 = vmatmul.mubr.bf16.gmra.mrb[0].mxu0 %v127
    %v1374 = vpop.f32.mrb[0].mxu0
    %v1375 = vadd.f32 %v1334, %v1374
    %v1376 = vpop.f32.mrb[0].mxu0
    %v1377 = vadd.f32 %v1336, %v1376
    %v1378 = vpop.f32.mrb[0].mxu0
    %v1379 = vpop.f32.mrb[0].mxu0
    %1380 = vdwg.mxu0
    %1381 = vmatprep.subr.bf16.mxu0 %v1044
    %1382 = vmatpush1.bf16.msra.mxu0 %v1043
    %1383 = vmatprep.subr.bf16.mxu0 %v1048
    %1384 = vmatpush1.bf16.msra.mxu0 %v1047
    %1385 = vmatprep.subr.bf16.mxu0 %v1052
    %1386 = vmatpush1.bf16.msra.mxu0 %v1051
    %1387 = vmatprep.subr.bf16.mxu0 %v1056
    %1388 = vmatpush1.bf16.msra.mxu0 %v1055
    %1389 = vmatprep.subr.bf16.mxu0 %v1060
    %1390 = vmatpush1.bf16.msra.mxu0 %v1059
    %1391 = vmatprep.subr.bf16.mxu0 %v1064
    %1392 = vmatpush1.bf16.msra.mxu0 %v1063
    %1393 = vmatprep.subr.bf16.mxu0 %v1068
    %1394 = vmatpush1.bf16.msra.mxu0 %v1067
    %1395 = vmatprep.subr.bf16.mxu0 %v1072
    %1396 = vmatpush1.bf16.msra.mxu0 %v1071
    %1397 = vmatprep.subr.bf16.mxu0 %v1076
    %1398 = vmatpush1.bf16.msra.mxu0 %v1075
    %1399 = vmatprep.subr.bf16.mxu0 %v1080
    %1400 = vmatpush1.bf16.msra.mxu0 %v1079
    %1401 = vmatprep.subr.bf16.mxu0 %v1084
    %1402 = vmatpush1.bf16.msra.mxu0 %v1083
    %1403 = vmatprep.subr.bf16.mxu0 %v1088
    %1404 = vmatpush1.bf16.msra.mxu0 %v1087
    %1405 = vmatprep.subr.bf16.mxu0 %v1092
    %1406 = vmatpush1.bf16.msra.mxu0 %v1091
    %1407 = vmatprep.subr.bf16.mxu0 %v1096
    %1408 = vmatpush1.bf16.msra.mxu0 %v1095
    %1409 = vmatprep.subr.bf16.mxu0 %v1100
    %1410 = vmatpush1.bf16.msra.mxu0 %v1099
    %1411 = vmatprep.subr.bf16.mxu0 %v1104
    %1412 = vmatpush1.bf16.msra.mxu0 %v1103
    %1413 = vmatprep.mubr.bf16.mxu0 %v130
    %1414 = vmatmul.mubr.bf16.gmra.mrb[0].mxu0 %v129
    %v1415 = vpop.f32.mrb[0].mxu0
    %v1416 = vadd.f32 %v1375, %v1415
    %v1417 = vpop.f32.mrb[0].mxu0
    %v1418 = vadd.f32 %v1377, %v1417
    %v1419 = vpop.f32.mrb[0].mxu0
    %v1420 = vpop.f32.mrb[0].mxu0
    %1421 = vdwg.mxu0
    %1422 = vmatprep.subr.bf16.mxu0 %v918
    %1423 = vmatpush1.bf16.msra.mxu0 %v917
    %1424 = vmatprep.subr.bf16.mxu0 %v922
    %1425 = vmatpush1.bf16.msra.mxu0 %v921
    %1426 = vmatprep.subr.bf16.mxu0 %v926
    %1427 = vmatpush1.bf16.msra.mxu0 %v925
    %1428 = vmatprep.subr.bf16.mxu0 %v930
    %1429 = vmatpush1.bf16.msra.mxu0 %v929
    %1430 = vmatprep.subr.bf16.mxu0 %v934
    %1431 = vmatpush1.bf16.msra.mxu0 %v933
    %1432 = vmatprep.subr.bf16.mxu0 %v938
    %1433 = vmatpush1.bf16.msra.mxu0 %v937
    %1434 = vmatprep.subr.bf16.mxu0 %v942
    %1435 = vmatpush1.bf16.msra.mxu0 %v941
    %1436 = vmatprep.subr.bf16.mxu0 %v946
    %1437 = vmatpush1.bf16.msra.mxu0 %v945
    %1438 = vmatprep.subr.bf16.mxu0 %v950
    %1439 = vmatpush1.bf16.msra.mxu0 %v949
    %1440 = vmatprep.subr.bf16.mxu0 %v954
    %1441 = vmatpush1.bf16.msra.mxu0 %v953
    %1442 = vmatprep.subr.bf16.mxu0 %v958
    %1443 = vmatpush1.bf16.msra.mxu0 %v957
    %1444 = vmatprep.subr.bf16.mxu0 %v962
    %1445 = vmatpush1.bf16.msra.mxu0 %v961
    %1446 = vmatprep.subr.bf16.mxu0 %v966
    %1447 = vmatpush1.bf16.msra.mxu0 %v965
    %1448 = vmatprep.subr.bf16.mxu0 %v970
    %1449 = vmatpush1.bf16.msra.mxu0 %v969
    %1450 = vmatprep.subr.bf16.mxu0 %v974
    %1451 = vmatpush1.bf16.msra.mxu0 %v973
    %1452 = vmatprep.subr.bf16.mxu0 %v978
    %1453 = vmatpush1.bf16.msra.mxu0 %v977
    %1454 = vmatprep.mubr.bf16.mxu0 %v126
    %1455 = vmatmul.mubr.bf16.gmra.mrb[0].mxu0 %v125
    %v1456 = vpop.f32.mrb[0].mxu0
    %v1457 = vadd.f32 %v334, %v1456
    %v1458 = vpop.f32.mrb[0].mxu0
    %v1459 = vadd.f32 %v338, %v1458
    %v1460 = vpop.f32.mrb[0].mxu0
    %v1461 = vpop.f32.mrb[0].mxu0
    %1462 = vdwg.mxu0
    %1463 = vmatprep.subr.bf16.mxu0 %v982
    %1464 = vmatpush1.bf16.msra.mxu0 %v981
    %1465 = vmatprep.subr.bf16.mxu0 %v986
    %1466 = vmatpush1.bf16.msra.mxu0 %v985
    %1467 = vmatprep.subr.bf16.mxu0 %v990
    %1468 = vmatpush1.bf16.msra.mxu0 %v989
    %1469 = vmatprep.subr.bf16.mxu0 %v994
    %1470 = vmatpush1.bf16.msra.mxu0 %v993
    %1471 = vmatprep.subr.bf16.mxu0 %v998
    %1472 = vmatpush1.bf16.msra.mxu0 %v997
    %1473 = vmatprep.subr.bf16.mxu0 %v1002
    %1474 = vmatpush1.bf16.msra.mxu0 %v1001
    %1475 = vmatprep.subr.bf16.mxu0 %v1006
    %1476 = vmatpush1.bf16.msra.mxu0 %v1005
    %1477 = vmatprep.subr.bf16.mxu0 %v1010
    %1478 = vmatpush1.bf16.msra.mxu0 %v1009
    %1479 = vmatprep.subr.bf16.mxu0 %v1014
    %1480 = vmatpush1.bf16.msra.mxu0 %v1013
    %1481 = vmatprep.subr.bf16.mxu0 %v1018
    %1482 = vmatpush1.bf16.msra.mxu0 %v1017
    %1483 = vmatprep.subr.bf16.mxu0 %v1022
    %1484 = vmatpush1.bf16.msra.mxu0 %v1021
    %1485 = vmatprep.subr.bf16.mxu0 %v1026
    %1486 = vmatpush1.bf16.msra.mxu0 %v1025
    %1487 = vmatprep.subr.bf16.mxu0 %v1030
    %1488 = vmatpush1.bf16.msra.mxu0 %v1029
    %1489 = vmatprep.subr.bf16.mxu0 %v1034
    %1490 = vmatpush1.bf16.msra.mxu0 %v1033
    %1491 = vmatprep.subr.bf16.mxu0 %v1038
    %1492 = vmatpush1.bf16.msra.mxu0 %v1037
    %1493 = vmatprep.subr.bf16.mxu0 %v1042
    %1494 = vmatpush1.bf16.msra.mxu0 %v1041
    %1495 = vmatprep.mubr.bf16.mxu0 %v128
    %1496 = vmatmul.mubr.bf16.gmra.mrb[0].mxu0 %v127
    %v1497 = vpop.f32.mrb[0].mxu0
    %v1498 = vadd.f32 %v1457, %v1497
    %v1499 = vpop.f32.mrb[0].mxu0
    %v1500 = vadd.f32 %v1459, %v1499
    %v1501 = vpop.f32.mrb[0].mxu0
    %v1502 = vpop.f32.mrb[0].mxu0
    %1503 = vdwg.mxu0
    %1504 = vmatprep.subr.bf16.mxu0 %v1046
    %1505 = vmatpush1.bf16.msra.mxu0 %v1045
    %1506 = vmatprep.subr.bf16.mxu0 %v1050
    %1507 = vmatpush1.bf16.msra.mxu0 %v1049
    %1508 = vmatprep.subr.bf16.mxu0 %v1054
    %1509 = vmatpush1.bf16.msra.mxu0 %v1053
    %1510 = vmatprep.subr.bf16.mxu0 %v1058
    %1511 = vmatpush1.bf16.msra.mxu0 %v1057
    %1512 = vmatprep.subr.bf16.mxu0 %v1062
    %1513 = vmatpush1.bf16.msra.mxu0 %v1061
    %1514 = vmatprep.subr.bf16.mxu0 %v1066
    %1515 = vmatpush1.bf16.msra.mxu0 %v1065
    %1516 = vmatprep.subr.bf16.mxu0 %v1070
    %1517 = vmatpush1.bf16.msra.mxu0 %v1069
    %1518 = vmatprep.subr.bf16.mxu0 %v1074
    %1519 = vmatpush1.bf16.msra.mxu0 %v1073
    %1520 = vmatprep.subr.bf16.mxu0 %v1078
    %1521 = vmatpush1.bf16.msra.mxu0 %v1077
    %1522 = vmatprep.subr.bf16.mxu0 %v1082
    %1523 = vmatpush1.bf16.msra.mxu0 %v1081
    %1524 = vmatprep.subr.bf16.mxu0 %v1086
    %1525 = vmatpush1.bf16.msra.mxu0 %v1085
    %1526 = vmatprep.subr.bf16.mxu0 %v1090
    %1527 = vmatpush1.bf16.msra.mxu0 %v1089
    %1528 = vmatprep.subr.bf16.mxu0 %v1094
    %1529 = vmatpush1.bf16.msra.mxu0 %v1093
    %1530 = vmatprep.subr.bf16.mxu0 %v1098
    %1531 = vmatpush1.bf16.msra.mxu0 %v1097
    %1532 = vmatprep.subr.bf16.mxu0 %v1102
    %1533 = vmatpush1.bf16.msra.mxu0 %v1101
    %1534 = vmatprep.subr.bf16.mxu0 %v1106
    %1535 = vmatpush1.bf16.msra.mxu0 %v1105
    %1536 = vmatprep.mubr.bf16.mxu0 %v130
    %1537 = vmatmul.mubr.bf16.gmra.mrb[0].mxu0 %v129
    %v1538 = vpop.f32.mrb[0].mxu0
    %v1539 = vadd.f32 %v1498, %v1538
    %v1540 = vpop.f32.mrb[0].mxu0
    %v1541 = vadd.f32 %v1500, %v1540
    %v1542 = vpop.f32.mrb[0].mxu0
    %v1543 = vpop.f32.mrb[0].mxu0
    %1544 = vdwg.mxu0
    %v1549 = vcombine.low %v1416, %v1418
    %v1550 = vcombine.low %v1539, %v1541
    %1553 = vst [vmem:[#allocation13] sm:$0xff] %v1549
    %1554 = vst [vmem:[#allocation13 + $0x8] sm:$0xff] %v1550
    %v1555 = vpack.c.bf16 %v1416, %v1416
    %v1556 = vpack.c.bf16 %v1418, %v1418
    %v1557 = vpack.c.bf16 %v1539, %v1539
    %v1558 = vpack.c.bf16 %v1541, %v1541
    %v1559 = vld [vmem:[#allocation7] sm:$0xff]
    %v1560 = vld [vmem:[#allocation7 + $0x8] sm:$0xff]
    %v1561 = vld [vmem:[#allocation7 + $0x10] sm:$0xff]
    %v1562 = vld [vmem:[#allocation7 + $0x18] sm:$0xff]
    %v1563 = vld [vmem:[#allocation7 + $0x20] sm:$0xff]
    %v1564 = vld [vmem:[#allocation7 + $0x28] sm:$0xff]
    %v1565 = vld [vmem:[#allocation7 + $0x30] sm:$0xff]
    %v1566 = vld [vmem:[#allocation7 + $0x38] sm:$0xff]
    %v1567 = vld [vmem:[#allocation7 + $0x40] sm:$0xff]
    %v1568 = vld [vmem:[#allocation7 + $0x48] sm:$0xff]
    %v1569 = vld [vmem:[#allocation7 + $0x50] sm:$0xff]
    %v1570 = vld [vmem:[#allocation7 + $0x58] sm:$0xff]
    %v1571 = vld [vmem:[#allocation7 + $0x60] sm:$0xff]
    %v1572 = vld [vmem:[#allocation7 + $0x68] sm:$0xff]
    %v1573 = vld [vmem:[#allocation7 + $0x70] sm:$0xff]
    %v1574 = vld [vmem:[#allocation7 + $0x78] sm:$0xff]
    %v1575 = vld [vmem:[#allocation7 + $0x80] sm:$0xff]
    %v1576 = vld [vmem:[#allocation7 + $0x88] sm:$0xff]
    %v1577 = vld [vmem:[#allocation7 + $0x90] sm:$0xff]
    %v1578 = vld [vmem:[#allocation7 + $0x98] sm:$0xff]
    %v1579 = vld [vmem:[#allocation7 + $0xa0] sm:$0xff]
    %v1580 = vld [vmem:[#allocation7 + $0xa8] sm:$0xff]
    %v1581 = vld [vmem:[#allocation7 + $0xb0] sm:$0xff]
    %v1582 = vld [vmem:[#allocation7 + $0xb8] sm:$0xff]
    %v1583 = vld [vmem:[#allocation7 + $0xc0] sm:$0xff]
    %v1584 = vld [vmem:[#allocation7 + $0xc8] sm:$0xff]
    %v1585 = vld [vmem:[#allocation7 + $0xd0] sm:$0xff]
    %v1586 = vld [vmem:[#allocation7 + $0xd8] sm:$0xff]
    %v1587 = vld [vmem:[#allocation7 + $0xe0] sm:$0xff]
    %v1588 = vld [vmem:[#allocation7 + $0xe8] sm:$0xff]
    %v1589 = vld [vmem:[#allocation7 + $0xf0] sm:$0xff]
    %v1590 = vld [vmem:[#allocation7 + $0xf8] sm:$0xff]
    %v1591 = vld [vmem:[#allocation7 + $0x100] sm:$0xff]
    %v1592 = vld [vmem:[#allocation7 + $0x108] sm:$0xff]
    %v1593 = vld [vmem:[#allocation7 + $0x110] sm:$0xff]
    %v1594 = vld [vmem:[#allocation7 + $0x118] sm:$0xff]
    %v1595 = vld [vmem:[#allocation7 + $0x120] sm:$0xff]
    %v1596 = vld [vmem:[#allocation7 + $0x128] sm:$0xff]
    %v1597 = vld [vmem:[#allocation7 + $0x130] sm:$0xff]
    %v1598 = vld [vmem:[#allocation7 + $0x138] sm:$0xff]
    %v1599 = vld [vmem:[#allocation7 + $0x140] sm:$0xff]
    %v1600 = vld [vmem:[#allocation7 + $0x148] sm:$0xff]
    %v1601 = vld [vmem:[#allocation7 + $0x150] sm:$0xff]
    %v1602 = vld [vmem:[#allocation7 + $0x158] sm:$0xff]
    %v1603 = vld [vmem:[#allocation7 + $0x160] sm:$0xff]
    %v1604 = vld [vmem:[#allocation7 + $0x168] sm:$0xff]
    %v1605 = vld [vmem:[#allocation7 + $0x170] sm:$0xff]
    %v1606 = vld [vmem:[#allocation7 + $0x178] sm:$0xff]
    %v1607 = vld [vmem:[#allocation7 + $0x180] sm:$0xff]
    %v1608 = vld [vmem:[#allocation7 + $0x188] sm:$0xff]
    %v1609 = vld [vmem:[#allocation7 + $0x190] sm:$0xff]
    %v1610 = vld [vmem:[#allocation7 + $0x198] sm:$0xff]
    %v1611 = vld [vmem:[#allocation7 + $0x1a0] sm:$0xff]
    %v1612 = vld [vmem:[#allocation7 + $0x1a8] sm:$0xff]
    %v1613 = vld [vmem:[#allocation7 + $0x1b0] sm:$0xff]
    %v1614 = vld [vmem:[#allocation7 + $0x1b8] sm:$0xff]
    %v1615 = vld [vmem:[#allocation7 + $0x1c0] sm:$0xff]
    %v1616 = vld [vmem:[#allocation7 + $0x1c8] sm:$0xff]
    %v1617 = vld [vmem:[#allocation7 + $0x1d0] sm:$0xff]
    %v1618 = vld [vmem:[#allocation7 + $0x1d8] sm:$0xff]
    %v1619 = vld [vmem:[#allocation7 + $0x1e0] sm:$0xff]
    %v1620 = vld [vmem:[#allocation7 + $0x1e8] sm:$0xff]
    %v1621 = vld [vmem:[#allocation7 + $0x1f0] sm:$0xff]
    %v1622 = vld [vmem:[#allocation7 + $0x1f8] sm:$0xff]
    %v1623 = vld [vmem:[#allocation7 + $0x200] sm:$0xff]
    %v1624 = vld [vmem:[#allocation7 + $0x208] sm:$0xff]
    %v1625 = vld [vmem:[#allocation7 + $0x210] sm:$0xff]
    %v1626 = vld [vmem:[#allocation7 + $0x218] sm:$0xff]
    %v1627 = vld [vmem:[#allocation7 + $0x220] sm:$0xff]
    %v1628 = vld [vmem:[#allocation7 + $0x228] sm:$0xff]
    %v1629 = vld [vmem:[#allocation7 + $0x230] sm:$0xff]
    %v1630 = vld [vmem:[#allocation7 + $0x238] sm:$0xff]
    %v1631 = vld [vmem:[#allocation7 + $0x240] sm:$0xff]
    %v1632 = vld [vmem:[#allocation7 + $0x248] sm:$0xff]
    %v1633 = vld [vmem:[#allocation7 + $0x250] sm:$0xff]
    %v1634 = vld [vmem:[#allocation7 + $0x258] sm:$0xff]
    %v1635 = vld [vmem:[#allocation7 + $0x260] sm:$0xff]
    %v1636 = vld [vmem:[#allocation7 + $0x268] sm:$0xff]
    %v1637 = vld [vmem:[#allocation7 + $0x270] sm:$0xff]
    %v1638 = vld [vmem:[#allocation7 + $0x278] sm:$0xff]
    %v1639 = vld [vmem:[#allocation7 + $0x280] sm:$0xff]
    %v1640 = vld [vmem:[#allocation7 + $0x288] sm:$0xff]
    %v1641 = vld [vmem:[#allocation7 + $0x290] sm:$0xff]
    %v1642 = vld [vmem:[#allocation7 + $0x298] sm:$0xff]
    %v1643 = vld [vmem:[#allocation7 + $0x2a0] sm:$0xff]
    %v1644 = vld [vmem:[#allocation7 + $0x2a8] sm:$0xff]
    %v1645 = vld [vmem:[#allocation7 + $0x2b0] sm:$0xff]
    %v1646 = vld [vmem:[#allocation7 + $0x2b8] sm:$0xff]
    %v1647 = vld [vmem:[#allocation7 + $0x2c0] sm:$0xff]
    %v1648 = vld [vmem:[#allocation7 + $0x2c8] sm:$0xff]
    %v1649 = vld [vmem:[#allocation7 + $0x2d0] sm:$0xff]
    %v1650 = vld [vmem:[#allocation7 + $0x2d8] sm:$0xff]
    %v1651 = vld [vmem:[#allocation7 + $0x2e0] sm:$0xff]
    %v1652 = vld [vmem:[#allocation7 + $0x2e8] sm:$0xff]
    %v1653 = vld [vmem:[#allocation7 + $0x2f0] sm:$0xff]
    %v1654 = vld [vmem:[#allocation7 + $0x2f8] sm:$0xff]
    %v1655 = vld [vmem:[#allocation7 + $0x300] sm:$0xff]
    %v1656 = vld [vmem:[#allocation7 + $0x308] sm:$0xff]
    %v1657 = vld [vmem:[#allocation7 + $0x310] sm:$0xff]
    %v1658 = vld [vmem:[#allocation7 + $0x318] sm:$0xff]
    %v1659 = vld [vmem:[#allocation7 + $0x320] sm:$0xff]
    %v1660 = vld [vmem:[#allocation7 + $0x328] sm:$0xff]
    %v1661 = vld [vmem:[#allocation7 + $0x330] sm:$0xff]
    %v1662 = vld [vmem:[#allocation7 + $0x338] sm:$0xff]
    %v1663 = vld [vmem:[#allocation7 + $0x340] sm:$0xff]
    %v1664 = vld [vmem:[#allocation7 + $0x348] sm:$0xff]
    %v1665 = vld [vmem:[#allocation7 + $0x350] sm:$0xff]
    %v1666 = vld [vmem:[#allocation7 + $0x358] sm:$0xff]
    %v1667 = vld [vmem:[#allocation7 + $0x360] sm:$0xff]
    %v1668 = vld [vmem:[#allocation7 + $0x368] sm:$0xff]
    %v1669 = vld [vmem:[#allocation7 + $0x370] sm:$0xff]
    %v1670 = vld [vmem:[#allocation7 + $0x378] sm:$0xff]
    %v1671 = vld [vmem:[#allocation7 + $0x380] sm:$0xff]
    %v1672 = vld [vmem:[#allocation7 + $0x388] sm:$0xff]
    %v1673 = vld [vmem:[#allocation7 + $0x390] sm:$0xff]
    %v1674 = vld [vmem:[#allocation7 + $0x398] sm:$0xff]
    %v1675 = vld [vmem:[#allocation7 + $0x3a0] sm:$0xff]
    %v1676 = vld [vmem:[#allocation7 + $0x3a8] sm:$0xff]
    %v1677 = vld [vmem:[#allocation7 + $0x3b0] sm:$0xff]
    %v1678 = vld [vmem:[#allocation7 + $0x3b8] sm:$0xff]
    %v1679 = vld [vmem:[#allocation7 + $0x3c0] sm:$0xff]
    %v1680 = vld [vmem:[#allocation7 + $0x3c8] sm:$0xff]
    %v1681 = vld [vmem:[#allocation7 + $0x3d0] sm:$0xff]
    %v1682 = vld [vmem:[#allocation7 + $0x3d8] sm:$0xff]
    %v1683 = vld [vmem:[#allocation7 + $0x3e0] sm:$0xff]
    %v1684 = vld [vmem:[#allocation7 + $0x3e8] sm:$0xff]
    %v1685 = vld [vmem:[#allocation7 + $0x3f0] sm:$0xff]
    %v1686 = vld [vmem:[#allocation7 + $0x3f8] sm:$0xff]
    %v1687 = vld [vmem:[#allocation7 + $0x400] sm:$0xff]
    %v1688 = vld [vmem:[#allocation7 + $0x408] sm:$0xff]
    %v1689 = vld [vmem:[#allocation7 + $0x410] sm:$0xff]
    %v1690 = vld [vmem:[#allocation7 + $0x418] sm:$0xff]
    %v1691 = vld [vmem:[#allocation7 + $0x420] sm:$0xff]
    %v1692 = vld [vmem:[#allocation7 + $0x428] sm:$0xff]
    %v1693 = vld [vmem:[#allocation7 + $0x430] sm:$0xff]
    %v1694 = vld [vmem:[#allocation7 + $0x438] sm:$0xff]
    %v1695 = vld [vmem:[#allocation7 + $0x440] sm:$0xff]
    %v1696 = vld [vmem:[#allocation7 + $0x448] sm:$0xff]
    %v1697 = vld [vmem:[#allocation7 + $0x450] sm:$0xff]
    %v1698 = vld [vmem:[#allocation7 + $0x458] sm:$0xff]
    %v1699 = vld [vmem:[#allocation7 + $0x460] sm:$0xff]
    %v1700 = vld [vmem:[#allocation7 + $0x468] sm:$0xff]
    %v1701 = vld [vmem:[#allocation7 + $0x470] sm:$0xff]
    %v1702 = vld [vmem:[#allocation7 + $0x478] sm:$0xff]
    %v1703 = vld [vmem:[#allocation7 + $0x480] sm:$0xff]
    %v1704 = vld [vmem:[#allocation7 + $0x488] sm:$0xff]
    %v1705 = vld [vmem:[#allocation7 + $0x490] sm:$0xff]
    %v1706 = vld [vmem:[#allocation7 + $0x498] sm:$0xff]
    %v1707 = vld [vmem:[#allocation7 + $0x4a0] sm:$0xff]
    %v1708 = vld [vmem:[#allocation7 + $0x4a8] sm:$0xff]
    %v1709 = vld [vmem:[#allocation7 + $0x4b0] sm:$0xff]
    %v1710 = vld [vmem:[#allocation7 + $0x4b8] sm:$0xff]
    %v1711 = vld [vmem:[#allocation7 + $0x4c0] sm:$0xff]
    %v1712 = vld [vmem:[#allocation7 + $0x4c8] sm:$0xff]
    %v1713 = vld [vmem:[#allocation7 + $0x4d0] sm:$0xff]
    %v1714 = vld [vmem:[#allocation7 + $0x4d8] sm:$0xff]
    %v1715 = vld [vmem:[#allocation7 + $0x4e0] sm:$0xff]
    %v1716 = vld [vmem:[#allocation7 + $0x4e8] sm:$0xff]
    %v1717 = vld [vmem:[#allocation7 + $0x4f0] sm:$0xff]
    %v1718 = vld [vmem:[#allocation7 + $0x4f8] sm:$0xff]
    %v1719 = vld [vmem:[#allocation7 + $0x500] sm:$0xff]
    %v1720 = vld [vmem:[#allocation7 + $0x508] sm:$0xff]
    %v1721 = vld [vmem:[#allocation7 + $0x510] sm:$0xff]
    %v1722 = vld [vmem:[#allocation7 + $0x518] sm:$0xff]
    %v1723 = vld [vmem:[#allocation7 + $0x520] sm:$0xff]
    %v1724 = vld [vmem:[#allocation7 + $0x528] sm:$0xff]
    %v1725 = vld [vmem:[#allocation7 + $0x530] sm:$0xff]
    %v1726 = vld [vmem:[#allocation7 + $0x538] sm:$0xff]
    %v1727 = vld [vmem:[#allocation7 + $0x540] sm:$0xff]
    %v1728 = vld [vmem:[#allocation7 + $0x548] sm:$0xff]
    %v1729 = vld [vmem:[#allocation7 + $0x550] sm:$0xff]
    %v1730 = vld [vmem:[#allocation7 + $0x558] sm:$0xff]
    %v1731 = vld [vmem:[#allocation7 + $0x560] sm:$0xff]
    %v1732 = vld [vmem:[#allocation7 + $0x568] sm:$0xff]
    %v1733 = vld [vmem:[#allocation7 + $0x570] sm:$0xff]
    %v1734 = vld [vmem:[#allocation7 + $0x578] sm:$0xff]
    %v1735 = vld [vmem:[#allocation7 + $0x580] sm:$0xff]
    %v1736 = vld [vmem:[#allocation7 + $0x588] sm:$0xff]
    %v1737 = vld [vmem:[#allocation7 + $0x590] sm:$0xff]
    %v1738 = vld [vmem:[#allocation7 + $0x598] sm:$0xff]
    %v1739 = vld [vmem:[#allocation7 + $0x5a0] sm:$0xff]
    %v1740 = vld [vmem:[#allocation7 + $0x5a8] sm:$0xff]
    %v1741 = vld [vmem:[#allocation7 + $0x5b0] sm:$0xff]
    %v1742 = vld [vmem:[#allocation7 + $0x5b8] sm:$0xff]
    %v1743 = vld [vmem:[#allocation7 + $0x5c0] sm:$0xff]
    %v1744 = vld [vmem:[#allocation7 + $0x5c8] sm:$0xff]
    %v1745 = vld [vmem:[#allocation7 + $0x5d0] sm:$0xff]
    %v1746 = vld [vmem:[#allocation7 + $0x5d8] sm:$0xff]
    %v1747 = vld [vmem:[#allocation7 + $0x5e0] sm:$0xff]
    %v1748 = vld [vmem:[#allocation7 + $0x5e8] sm:$0xff]
    %v1749 = vld [vmem:[#allocation7 + $0x5f0] sm:$0xff]
    %v1750 = vld [vmem:[#allocation7 + $0x5f8] sm:$0xff]
    %v1751 = vld [vmem:[#allocation7 + $0x600] sm:$0xff]
    %v1752 = vld [vmem:[#allocation7 + $0x608] sm:$0xff]
    %v1753 = vld [vmem:[#allocation7 + $0x610] sm:$0xff]
    %v1754 = vld [vmem:[#allocation7 + $0x618] sm:$0xff]
    %v1755 = vld [vmem:[#allocation7 + $0x620] sm:$0xff]
    %v1756 = vld [vmem:[#allocation7 + $0x628] sm:$0xff]
    %v1757 = vld [vmem:[#allocation7 + $0x630] sm:$0xff]
    %v1758 = vld [vmem:[#allocation7 + $0x638] sm:$0xff]
    %v1759 = vld [vmem:[#allocation7 + $0x640] sm:$0xff]
    %v1760 = vld [vmem:[#allocation7 + $0x648] sm:$0xff]
    %v1761 = vld [vmem:[#allocation7 + $0x650] sm:$0xff]
    %v1762 = vld [vmem:[#allocation7 + $0x658] sm:$0xff]
    %v1763 = vld [vmem:[#allocation7 + $0x660] sm:$0xff]
    %v1764 = vld [vmem:[#allocation7 + $0x668] sm:$0xff]
    %v1765 = vld [vmem:[#allocation7 + $0x670] sm:$0xff]
    %v1766 = vld [vmem:[#allocation7 + $0x678] sm:$0xff]
    %v1767 = vld [vmem:[#allocation7 + $0x680] sm:$0xff]
    %v1768 = vld [vmem:[#allocation7 + $0x688] sm:$0xff]
    %v1769 = vld [vmem:[#allocation7 + $0x690] sm:$0xff]
    %v1770 = vld [vmem:[#allocation7 + $0x698] sm:$0xff]
    %v1771 = vld [vmem:[#allocation7 + $0x6a0] sm:$0xff]
    %v1772 = vld [vmem:[#allocation7 + $0x6a8] sm:$0xff]
    %v1773 = vld [vmem:[#allocation7 + $0x6b0] sm:$0xff]
    %v1774 = vld [vmem:[#allocation7 + $0x6b8] sm:$0xff]
    %v1775 = vld [vmem:[#allocation7 + $0x6c0] sm:$0xff]
    %v1776 = vld [vmem:[#allocation7 + $0x6c8] sm:$0xff]
    %v1777 = vld [vmem:[#allocation7 + $0x6d0] sm:$0xff]
    %v1778 = vld [vmem:[#allocation7 + $0x6d8] sm:$0xff]
    %v1779 = vld [vmem:[#allocation7 + $0x6e0] sm:$0xff]
    %v1780 = vld [vmem:[#allocation7 + $0x6e8] sm:$0xff]
    %v1781 = vld [vmem:[#allocation7 + $0x6f0] sm:$0xff]
    %v1782 = vld [vmem:[#allocation7 + $0x6f8] sm:$0xff]
    %v1783 = vld [vmem:[#allocation7 + $0x700] sm:$0xff]
    %v1784 = vld [vmem:[#allocation7 + $0x708] sm:$0xff]
    %v1785 = vld [vmem:[#allocation7 + $0x710] sm:$0xff]
    %v1786 = vld [vmem:[#allocation7 + $0x718] sm:$0xff]
    %v1787 = vld [vmem:[#allocation7 + $0x720] sm:$0xff]
    %v1788 = vld [vmem:[#allocation7 + $0x728] sm:$0xff]
    %v1789 = vld [vmem:[#allocation7 + $0x730] sm:$0xff]
    %v1790 = vld [vmem:[#allocation7 + $0x738] sm:$0xff]
    %v1791 = vld [vmem:[#allocation7 + $0x740] sm:$0xff]
    %v1792 = vld [vmem:[#allocation7 + $0x748] sm:$0xff]
    %v1793 = vld [vmem:[#allocation7 + $0x750] sm:$0xff]
    %v1794 = vld [vmem:[#allocation7 + $0x758] sm:$0xff]
    %v1795 = vld [vmem:[#allocation7 + $0x760] sm:$0xff]
    %v1796 = vld [vmem:[#allocation7 + $0x768] sm:$0xff]
    %v1797 = vld [vmem:[#allocation7 + $0x770] sm:$0xff]
    %v1798 = vld [vmem:[#allocation7 + $0x778] sm:$0xff]
    %v1799 = vld [vmem:[#allocation7 + $0x780] sm:$0xff]
    %v1800 = vld [vmem:[#allocation7 + $0x788] sm:$0xff]
    %v1801 = vld [vmem:[#allocation7 + $0x790] sm:$0xff]
    %v1802 = vld [vmem:[#allocation7 + $0x798] sm:$0xff]
    %v1803 = vld [vmem:[#allocation7 + $0x7a0] sm:$0xff]
    %v1804 = vld [vmem:[#allocation7 + $0x7a8] sm:$0xff]
    %v1805 = vld [vmem:[#allocation7 + $0x7b0] sm:$0xff]
    %v1806 = vld [vmem:[#allocation7 + $0x7b8] sm:$0xff]
    %v1807 = vld [vmem:[#allocation7 + $0x7c0] sm:$0xff]
    %v1808 = vld [vmem:[#allocation7 + $0x7c8] sm:$0xff]
    %v1809 = vld [vmem:[#allocation7 + $0x7d0] sm:$0xff]
    %v1810 = vld [vmem:[#allocation7 + $0x7d8] sm:$0xff]
    %v1811 = vld [vmem:[#allocation7 + $0x7e0] sm:$0xff]
    %v1812 = vld [vmem:[#allocation7 + $0x7e8] sm:$0xff]
    %v1813 = vld [vmem:[#allocation7 + $0x7f0] sm:$0xff]
    %v1814 = vld [vmem:[#allocation7 + $0x7f8] sm:$0xff]
    %v1815 = vlaneseq
    %v1816 = vshrl.u32 %v1815, 7
    %v1817 = vsub.s32 1, %v1816
    %v1818 = vrot.slane %v108, %v1817
    %v1819 = vlaneseq
    %v1820 = vshrl.u32 %v1819, 7
    %v1821 = vsub.s32 1, %v1820
    %v1822 = vrot.slane %v109, %v1821
    %v1823 = vlaneseq
    %v1824 = vshrl.u32 %v1823, 7
    %v1825 = vsub.s32 1, %v1824
    %v1826 = vrot.slane %v110, %v1825
    %v1827 = vlaneseq
    %v1828 = vshrl.u32 %v1827, 7
    %v1829 = vsub.s32 1, %v1828
    %v1830 = vrot.slane %v111, %v1829
    %v1831 = vlaneseq
    %v1832 = vshrl.u32 %v1831, 7
    %v1833 = vsub.s32 1, %v1832
    %v1834 = vrot.slane %v112, %v1833
    %v1835 = vlaneseq
    %v1836 = vshrl.u32 %v1835, 7
    %v1837 = vsub.s32 1, %v1836
    %v1838 = vrot.slane %v113, %v1837
    %v1839 = vlaneseq
    %v1840 = vshrl.u32 %v1839, 7
    %v1841 = vsub.s32 1, %v1840
    %v1842 = vrot.slane %v114, %v1841
    %v1843 = vlaneseq
    %v1844 = vshrl.u32 %v1843, 7
    %v1845 = vsub.s32 1, %v1844
    %v1846 = vrot.slane %v115, %v1845
    %v2103 = vunpack.c.l.b16 %v1559
    %v2104 = vunpack.c.h.b16 %v1559
    %v2105 = vunpack.c.l.b16 %v1560
    %v2106 = vunpack.c.h.b16 %v1560
    %v2107 = vunpack.c.l.b16 %v1561
    %v2108 = vunpack.c.h.b16 %v1561
    %v2109 = vunpack.c.l.b16 %v1562
    %v2110 = vunpack.c.h.b16 %v1562
    %v2111 = vunpack.c.l.b16 %v1563
    %v2112 = vunpack.c.h.b16 %v1563
    %v2113 = vunpack.c.l.b16 %v1564
    %v2114 = vunpack.c.h.b16 %v1564
    %v2115 = vunpack.c.l.b16 %v1565
    %v2116 = vunpack.c.h.b16 %v1565
    %v2117 = vunpack.c.l.b16 %v1566
    %v2118 = vunpack.c.h.b16 %v1566
    %v2119 = vunpack.c.l.b16 %v1567
    %v2120 = vunpack.c.h.b16 %v1567
    %v2121 = vunpack.c.l.b16 %v1568
    %v2122 = vunpack.c.h.b16 %v1568
    %v2123 = vunpack.c.l.b16 %v1569
    %v2124 = vunpack.c.h.b16 %v1569
    %v2125 = vunpack.c.l.b16 %v1570
    %v2126 = vunpack.c.h.b16 %v1570
    %v2127 = vunpack.c.l.b16 %v1571
    %v2128 = vunpack.c.h.b16 %v1571
    %v2129 = vunpack.c.l.b16 %v1572
    %v2130 = vunpack.c.h.b16 %v1572
    %v2131 = vunpack.c.l.b16 %v1573
    %v2132 = vunpack.c.h.b16 %v1573
    %v2133 = vunpack.c.l.b16 %v1574
    %v2134 = vunpack.c.h.b16 %v1574
    %v2135 = vunpack.c.l.b16 %v1575
    %v2136 = vunpack.c.h.b16 %v1575
    %v2137 = vunpack.c.l.b16 %v1576
    %v2138 = vunpack.c.h.b16 %v1576
    %v2139 = vunpack.c.l.b16 %v1577
    %v2140 = vunpack.c.h.b16 %v1577
    %v2141 = vunpack.c.l.b16 %v1578
    %v2142 = vunpack.c.h.b16 %v1578
    %v2143 = vunpack.c.l.b16 %v1579
    %v2144 = vunpack.c.h.b16 %v1579
    %v2145 = vunpack.c.l.b16 %v1580
    %v2146 = vunpack.c.h.b16 %v1580
    %v2147 = vunpack.c.l.b16 %v1581
    %v2148 = vunpack.c.h.b16 %v1581
    %v2149 = vunpack.c.l.b16 %v1582
    %v2150 = vunpack.c.h.b16 %v1582
    %v2151 = vunpack.c.l.b16 %v1583
    %v2152 = vunpack.c.h.b16 %v1583
    %v2153 = vunpack.c.l.b16 %v1584
    %v2154 = vunpack.c.h.b16 %v1584
    %v2155 = vunpack.c.l.b16 %v1585
    %v2156 = vunpack.c.h.b16 %v1585
    %v2157 = vunpack.c.l.b16 %v1586
    %v2158 = vunpack.c.h.b16 %v1586
    %v2159 = vunpack.c.l.b16 %v1587
    %v2160 = vunpack.c.h.b16 %v1587
    %v2161 = vunpack.c.l.b16 %v1588
    %v2162 = vunpack.c.h.b16 %v1588
    %v2163 = vunpack.c.l.b16 %v1589
    %v2164 = vunpack.c.h.b16 %v1589
    %v2165 = vunpack.c.l.b16 %v1590
    %v2166 = vunpack.c.h.b16 %v1590
    %v2167 = vunpack.c.l.b16 %v1591
    %v2168 = vunpack.c.h.b16 %v1591
    %v2169 = vunpack.c.l.b16 %v1592
    %v2170 = vunpack.c.h.b16 %v1592
    %v2171 = vunpack.c.l.b16 %v1593
    %v2172 = vunpack.c.h.b16 %v1593
    %v2173 = vunpack.c.l.b16 %v1594
    %v2174 = vunpack.c.h.b16 %v1594
    %v2175 = vunpack.c.l.b16 %v1595
    %v2176 = vunpack.c.h.b16 %v1595
    %v2177 = vunpack.c.l.b16 %v1596
    %v2178 = vunpack.c.h.b16 %v1596
    %v2179 = vunpack.c.l.b16 %v1597
    %v2180 = vunpack.c.h.b16 %v1597
    %v2181 = vunpack.c.l.b16 %v1598
    %v2182 = vunpack.c.h.b16 %v1598
    %v2183 = vunpack.c.l.b16 %v1599
    %v2184 = vunpack.c.h.b16 %v1599
    %v2185 = vunpack.c.l.b16 %v1600
    %v2186 = vunpack.c.h.b16 %v1600
    %v2187 = vunpack.c.l.b16 %v1601
    %v2188 = vunpack.c.h.b16 %v1601
    %v2189 = vunpack.c.l.b16 %v1602
    %v2190 = vunpack.c.h.b16 %v1602
    %v2191 = vunpack.c.l.b16 %v1603
    %v2192 = vunpack.c.h.b16 %v1603
    %v2193 = vunpack.c.l.b16 %v1604
    %v2194 = vunpack.c.h.b16 %v1604
    %v2195 = vunpack.c.l.b16 %v1605
    %v2196 = vunpack.c.h.b16 %v1605
    %v2197 = vunpack.c.l.b16 %v1606
    %v2198 = vunpack.c.h.b16 %v1606
    %v2199 = vunpack.c.l.b16 %v1607
    %v2200 = vunpack.c.h.b16 %v1607
    %v2201 = vunpack.c.l.b16 %v1608
    %v2202 = vunpack.c.h.b16 %v1608
    %v2203 = vunpack.c.l.b16 %v1609
    %v2204 = vunpack.c.h.b16 %v1609
    %v2205 = vunpack.c.l.b16 %v1610
    %v2206 = vunpack.c.h.b16 %v1610
    %v2207 = vunpack.c.l.b16 %v1611
    %v2208 = vunpack.c.h.b16 %v1611
    %v2209 = vunpack.c.l.b16 %v1612
    %v2210 = vunpack.c.h.b16 %v1612
    %v2211 = vunpack.c.l.b16 %v1613
    %v2212 = vunpack.c.h.b16 %v1613
    %v2213 = vunpack.c.l.b16 %v1614
    %v2214 = vunpack.c.h.b16 %v1614
    %v2215 = vunpack.c.l.b16 %v1615
    %v2216 = vunpack.c.h.b16 %v1615
    %v2217 = vunpack.c.l.b16 %v1616
    %v2218 = vunpack.c.h.b16 %v1616
    %v2219 = vunpack.c.l.b16 %v1617
    %v2220 = vunpack.c.h.b16 %v1617
    %v2221 = vunpack.c.l.b16 %v1618
    %v2222 = vunpack.c.h.b16 %v1618
    %v2223 = vunpack.c.l.b16 %v1619
    %v2224 = vunpack.c.h.b16 %v1619
    %v2225 = vunpack.c.l.b16 %v1620
    %v2226 = vunpack.c.h.b16 %v1620
    %v2227 = vunpack.c.l.b16 %v1621
    %v2228 = vunpack.c.h.b16 %v1621
    %v2229 = vunpack.c.l.b16 %v1622
    %v2230 = vunpack.c.h.b16 %v1622
    %v2231 = vunpack.c.l.b16 %v1623
    %v2232 = vunpack.c.h.b16 %v1623
    %v2233 = vunpack.c.l.b16 %v1624
    %v2234 = vunpack.c.h.b16 %v1624
    %v2235 = vunpack.c.l.b16 %v1625
    %v2236 = vunpack.c.h.b16 %v1625
    %v2237 = vunpack.c.l.b16 %v1626
    %v2238 = vunpack.c.h.b16 %v1626
    %v2239 = vunpack.c.l.b16 %v1627
    %v2240 = vunpack.c.h.b16 %v1627
    %v2241 = vunpack.c.l.b16 %v1628
    %v2242 = vunpack.c.h.b16 %v1628
    %v2243 = vunpack.c.l.b16 %v1629
    %v2244 = vunpack.c.h.b16 %v1629
    %v2245 = vunpack.c.l.b16 %v1630
    %v2246 = vunpack.c.h.b16 %v1630
    %v2247 = vunpack.c.l.b16 %v1631
    %v2248 = vunpack.c.h.b16 %v1631
    %v2249 = vunpack.c.l.b16 %v1632
    %v2250 = vunpack.c.h.b16 %v1632
    %v2251 = vunpack.c.l.b16 %v1633
    %v2252 = vunpack.c.h.b16 %v1633
    %v2253 = vunpack.c.l.b16 %v1634
    %v2254 = vunpack.c.h.b16 %v1634
    %v2255 = vunpack.c.l.b16 %v1635
    %v2256 = vunpack.c.h.b16 %v1635
    %v2257 = vunpack.c.l.b16 %v1636
    %v2258 = vunpack.c.h.b16 %v1636
    %v2259 = vunpack.c.l.b16 %v1637
    %v2260 = vunpack.c.h.b16 %v1637
    %v2261 = vunpack.c.l.b16 %v1638
    %v2262 = vunpack.c.h.b16 %v1638
    %v2263 = vunpack.c.l.b16 %v1639
    %v2264 = vunpack.c.h.b16 %v1639
    %v2265 = vunpack.c.l.b16 %v1640
    %v2266 = vunpack.c.h.b16 %v1640
    %v2267 = vunpack.c.l.b16 %v1641
    %v2268 = vunpack.c.h.b16 %v1641
    %v2269 = vunpack.c.l.b16 %v1642
    %v2270 = vunpack.c.h.b16 %v1642
    %v2271 = vunpack.c.l.b16 %v1643
    %v2272 = vunpack.c.h.b16 %v1643
    %v2273 = vunpack.c.l.b16 %v1644
    %v2274 = vunpack.c.h.b16 %v1644
    %v2275 = vunpack.c.l.b16 %v1645
    %v2276 = vunpack.c.h.b16 %v1645
    %v2277 = vunpack.c.l.b16 %v1646
    %v2278 = vunpack.c.h.b16 %v1646
    %v2279 = vunpack.c.l.b16 %v1647
    %v2280 = vunpack.c.h.b16 %v1647
    %v2281 = vunpack.c.l.b16 %v1648
    %v2282 = vunpack.c.h.b16 %v1648
    %v2283 = vunpack.c.l.b16 %v1649
    %v2284 = vunpack.c.h.b16 %v1649
    %v2285 = vunpack.c.l.b16 %v1650
    %v2286 = vunpack.c.h.b16 %v1650
    %v2287 = vunpack.c.l.b16 %v1651
    %v2288 = vunpack.c.h.b16 %v1651
    %v2289 = vunpack.c.l.b16 %v1652
    %v2290 = vunpack.c.h.b16 %v1652
    %v2291 = vunpack.c.l.b16 %v1653
    %v2292 = vunpack.c.h.b16 %v1653
    %v2293 = vunpack.c.l.b16 %v1654
    %v2294 = vunpack.c.h.b16 %v1654
    %v2295 = vunpack.c.l.b16 %v1655
    %v2296 = vunpack.c.h.b16 %v1655
    %v2297 = vunpack.c.l.b16 %v1656
    %v2298 = vunpack.c.h.b16 %v1656
    %v2299 = vunpack.c.l.b16 %v1657
    %v2300 = vunpack.c.h.b16 %v1657
    %v2301 = vunpack.c.l.b16 %v1658
    %v2302 = vunpack.c.h.b16 %v1658
    %v2303 = vunpack.c.l.b16 %v1659
    %v2304 = vunpack.c.h.b16 %v1659
    %v2305 = vunpack.c.l.b16 %v1660
    %v2306 = vunpack.c.h.b16 %v1660
    %v2307 = vunpack.c.l.b16 %v1661
    %v2308 = vunpack.c.h.b16 %v1661
    %v2309 = vunpack.c.l.b16 %v1662
    %v2310 = vunpack.c.h.b16 %v1662
    %v2311 = vunpack.c.l.b16 %v1663
    %v2312 = vunpack.c.h.b16 %v1663
    %v2313 = vunpack.c.l.b16 %v1664
    %v2314 = vunpack.c.h.b16 %v1664
    %v2315 = vunpack.c.l.b16 %v1665
    %v2316 = vunpack.c.h.b16 %v1665
    %v2317 = vunpack.c.l.b16 %v1666
    %v2318 = vunpack.c.h.b16 %v1666
    %v2319 = vunpack.c.l.b16 %v1667
    %v2320 = vunpack.c.h.b16 %v1667
    %v2321 = vunpack.c.l.b16 %v1668
    %v2322 = vunpack.c.h.b16 %v1668
    %v2323 = vunpack.c.l.b16 %v1669
    %v2324 = vunpack.c.h.b16 %v1669
    %v2325 = vunpack.c.l.b16 %v1670
    %v2326 = vunpack.c.h.b16 %v1670
    %v2327 = vunpack.c.l.b16 %v1671
    %v2328 = vunpack.c.h.b16 %v1671
    %v2329 = vunpack.c.l.b16 %v1672
    %v2330 = vunpack.c.h.b16 %v1672
    %v2331 = vunpack.c.l.b16 %v1673
    %v2332 = vunpack.c.h.b16 %v1673
    %v2333 = vunpack.c.l.b16 %v1674
    %v2334 = vunpack.c.h.b16 %v1674
    %v2335 = vunpack.c.l.b16 %v1675
    %v2336 = vunpack.c.h.b16 %v1675
    %v2337 = vunpack.c.l.b16 %v1676
    %v2338 = vunpack.c.h.b16 %v1676
    %v2339 = vunpack.c.l.b16 %v1677
    %v2340 = vunpack.c.h.b16 %v1677
    %v2341 = vunpack.c.l.b16 %v1678
    %v2342 = vunpack.c.h.b16 %v1678
    %v2343 = vunpack.c.l.b16 %v1679
    %v2344 = vunpack.c.h.b16 %v1679
    %v2345 = vunpack.c.l.b16 %v1680
    %v2346 = vunpack.c.h.b16 %v1680
    %v2347 = vunpack.c.l.b16 %v1681
    %v2348 = vunpack.c.h.b16 %v1681
    %v2349 = vunpack.c.l.b16 %v1682
    %v2350 = vunpack.c.h.b16 %v1682
    %v2351 = vunpack.c.l.b16 %v1683
    %v2352 = vunpack.c.h.b16 %v1683
    %v2353 = vunpack.c.l.b16 %v1684
    %v2354 = vunpack.c.h.b16 %v1684
    %v2355 = vunpack.c.l.b16 %v1685
    %v2356 = vunpack.c.h.b16 %v1685
    %v2357 = vunpack.c.l.b16 %v1686
    %v2358 = vunpack.c.h.b16 %v1686
    %v2359 = vunpack.c.l.b16 %v1687
    %v2360 = vunpack.c.h.b16 %v1687
    %v2361 = vunpack.c.l.b16 %v1688
    %v2362 = vunpack.c.h.b16 %v1688
    %v2363 = vunpack.c.l.b16 %v1689
    %v2364 = vunpack.c.h.b16 %v1689
    %v2365 = vunpack.c.l.b16 %v1690
    %v2366 = vunpack.c.h.b16 %v1690
    %v2367 = vunpack.c.l.b16 %v1691
    %v2368 = vunpack.c.h.b16 %v1691
    %v2369 = vunpack.c.l.b16 %v1692
    %v2370 = vunpack.c.h.b16 %v1692
    %v2371 = vunpack.c.l.b16 %v1693
    %v2372 = vunpack.c.h.b16 %v1693
    %v2373 = vunpack.c.l.b16 %v1694
    %v2374 = vunpack.c.h.b16 %v1694
    %v2375 = vunpack.c.l.b16 %v1695
    %v2376 = vunpack.c.h.b16 %v1695
    %v2377 = vunpack.c.l.b16 %v1696
    %v2378 = vunpack.c.h.b16 %v1696
    %v2379 = vunpack.c.l.b16 %v1697
    %v2380 = vunpack.c.h.b16 %v1697
    %v2381 = vunpack.c.l.b16 %v1698
    %v2382 = vunpack.c.h.b16 %v1698
    %v2383 = vunpack.c.l.b16 %v1699
    %v2384 = vunpack.c.h.b16 %v1699
    %v2385 = vunpack.c.l.b16 %v1700
    %v2386 = vunpack.c.h.b16 %v1700
    %v2387 = vunpack.c.l.b16 %v1701
    %v2388 = vunpack.c.h.b16 %v1701
    %v2389 = vunpack.c.l.b16 %v1702
    %v2390 = vunpack.c.h.b16 %v1702
    %v2391 = vunpack.c.l.b16 %v1703
    %v2392 = vunpack.c.h.b16 %v1703
    %v2393 = vunpack.c.l.b16 %v1704
    %v2394 = vunpack.c.h.b16 %v1704
    %v2395 = vunpack.c.l.b16 %v1705
    %v2396 = vunpack.c.h.b16 %v1705
    %v2397 = vunpack.c.l.b16 %v1706
    %v2398 = vunpack.c.h.b16 %v1706
    %v2399 = vunpack.c.l.b16 %v1707
    %v2400 = vunpack.c.h.b16 %v1707
    %v2401 = vunpack.c.l.b16 %v1708
    %v2402 = vunpack.c.h.b16 %v1708
    %v2403 = vunpack.c.l.b16 %v1709
    %v2404 = vunpack.c.h.b16 %v1709
    %v2405 = vunpack.c.l.b16 %v1710
    %v2406 = vunpack.c.h.b16 %v1710
    %v2407 = vunpack.c.l.b16 %v1711
    %v2408 = vunpack.c.h.b16 %v1711
    %v2409 = vunpack.c.l.b16 %v1712
    %v2410 = vunpack.c.h.b16 %v1712
    %v2411 = vunpack.c.l.b16 %v1713
    %v2412 = vunpack.c.h.b16 %v1713
    %v2413 = vunpack.c.l.b16 %v1714
    %v2414 = vunpack.c.h.b16 %v1714
    %v2415 = vunpack.c.l.b16 %v1715
    %v2416 = vunpack.c.h.b16 %v1715
    %v2417 = vunpack.c.l.b16 %v1716
    %v2418 = vunpack.c.h.b16 %v1716
    %v2419 = vunpack.c.l.b16 %v1717
    %v2420 = vunpack.c.h.b16 %v1717
    %v2421 = vunpack.c.l.b16 %v1718
    %v2422 = vunpack.c.h.b16 %v1718
    %v2423 = vunpack.c.l.b16 %v1719
    %v2424 = vunpack.c.h.b16 %v1719
    %v2425 = vunpack.c.l.b16 %v1720
    %v2426 = vunpack.c.h.b16 %v1720
    %v2427 = vunpack.c.l.b16 %v1721
    %v2428 = vunpack.c.h.b16 %v1721
    %v2429 = vunpack.c.l.b16 %v1722
    %v2430 = vunpack.c.h.b16 %v1722
    %v2431 = vunpack.c.l.b16 %v1723
    %v2432 = vunpack.c.h.b16 %v1723
    %v2433 = vunpack.c.l.b16 %v1724
    %v2434 = vunpack.c.h.b16 %v1724
    %v2435 = vunpack.c.l.b16 %v1725
    %v2436 = vunpack.c.h.b16 %v1725
    %v2437 = vunpack.c.l.b16 %v1726
    %v2438 = vunpack.c.h.b16 %v1726
    %v2439 = vunpack.c.l.b16 %v1727
    %v2440 = vunpack.c.h.b16 %v1727
    %v2441 = vunpack.c.l.b16 %v1728
    %v2442 = vunpack.c.h.b16 %v1728
    %v2443 = vunpack.c.l.b16 %v1729
    %v2444 = vunpack.c.h.b16 %v1729
    %v2445 = vunpack.c.l.b16 %v1730
    %v2446 = vunpack.c.h.b16 %v1730
    %v2447 = vunpack.c.l.b16 %v1731
    %v2448 = vunpack.c.h.b16 %v1731
    %v2449 = vunpack.c.l.b16 %v1732
    %v2450 = vunpack.c.h.b16 %v1732
    %v2451 = vunpack.c.l.b16 %v1733
    %v2452 = vunpack.c.h.b16 %v1733
    %v2453 = vunpack.c.l.b16 %v1734
    %v2454 = vunpack.c.h.b16 %v1734
    %v2455 = vunpack.c.l.b16 %v1735
    %v2456 = vunpack.c.h.b16 %v1735
    %v2457 = vunpack.c.l.b16 %v1736
    %v2458 = vunpack.c.h.b16 %v1736
    %v2459 = vunpack.c.l.b16 %v1737
    %v2460 = vunpack.c.h.b16 %v1737
    %v2461 = vunpack.c.l.b16 %v1738
    %v2462 = vunpack.c.h.b16 %v1738
    %v2463 = vunpack.c.l.b16 %v1739
    %v2464 = vunpack.c.h.b16 %v1739
    %v2465 = vunpack.c.l.b16 %v1740
    %v2466 = vunpack.c.h.b16 %v1740
    %v2467 = vunpack.c.l.b16 %v1741
    %v2468 = vunpack.c.h.b16 %v1741
    %v2469 = vunpack.c.l.b16 %v1742
    %v2470 = vunpack.c.h.b16 %v1742
    %v2471 = vunpack.c.l.b16 %v1743
    %v2472 = vunpack.c.h.b16 %v1743
    %v2473 = vunpack.c.l.b16 %v1744
    %v2474 = vunpack.c.h.b16 %v1744
    %v2475 = vunpack.c.l.b16 %v1745
    %v2476 = vunpack.c.h.b16 %v1745
    %v2477 = vunpack.c.l.b16 %v1746
    %v2478 = vunpack.c.h.b16 %v1746
    %v2479 = vunpack.c.l.b16 %v1747
    %v2480 = vunpack.c.h.b16 %v1747
    %v2481 = vunpack.c.l.b16 %v1748
    %v2482 = vunpack.c.h.b16 %v1748
    %v2483 = vunpack.c.l.b16 %v1749
    %v2484 = vunpack.c.h.b16 %v1749
    %v2485 = vunpack.c.l.b16 %v1750
    %v2486 = vunpack.c.h.b16 %v1750
    %v2487 = vunpack.c.l.b16 %v1751
    %v2488 = vunpack.c.h.b16 %v1751
    %v2489 = vunpack.c.l.b16 %v1752
    %v2490 = vunpack.c.h.b16 %v1752
    %v2491 = vunpack.c.l.b16 %v1753
    %v2492 = vunpack.c.h.b16 %v1753
    %v2493 = vunpack.c.l.b16 %v1754
    %v2494 = vunpack.c.h.b16 %v1754
    %v2495 = vunpack.c.l.b16 %v1755
    %v2496 = vunpack.c.h.b16 %v1755
    %v2497 = vunpack.c.l.b16 %v1756
    %v2498 = vunpack.c.h.b16 %v1756
    %v2499 = vunpack.c.l.b16 %v1757
    %v2500 = vunpack.c.h.b16 %v1757
    %v2501 = vunpack.c.l.b16 %v1758
    %v2502 = vunpack.c.h.b16 %v1758
    %v2503 = vunpack.c.l.b16 %v1759
    %v2504 = vunpack.c.h.b16 %v1759
    %v2505 = vunpack.c.l.b16 %v1760
    %v2506 = vunpack.c.h.b16 %v1760
    %v2507 = vunpack.c.l.b16 %v1761
    %v2508 = vunpack.c.h.b16 %v1761
    %v2509 = vunpack.c.l.b16 %v1762
    %v2510 = vunpack.c.h.b16 %v1762
    %v2511 = vunpack.c.l.b16 %v1763
    %v2512 = vunpack.c.h.b16 %v1763
    %v2513 = vunpack.c.l.b16 %v1764
    %v2514 = vunpack.c.h.b16 %v1764
    %v2515 = vunpack.c.l.b16 %v1765
    %v2516 = vunpack.c.h.b16 %v1765
    %v2517 = vunpack.c.l.b16 %v1766
    %v2518 = vunpack.c.h.b16 %v1766
    %v2519 = vunpack.c.l.b16 %v1767
    %v2520 = vunpack.c.h.b16 %v1767
    %v2521 = vunpack.c.l.b16 %v1768
    %v2522 = vunpack.c.h.b16 %v1768
    %v2523 = vunpack.c.l.b16 %v1769
    %v2524 = vunpack.c.h.b16 %v1769
    %v2525 = vunpack.c.l.b16 %v1770
    %v2526 = vunpack.c.h.b16 %v1770
    %v2527 = vunpack.c.l.b16 %v1771
    %v2528 = vunpack.c.h.b16 %v1771
    %v2529 = vunpack.c.l.b16 %v1772
    %v2530 = vunpack.c.h.b16 %v1772
    %v2531 = vunpack.c.l.b16 %v1773
    %v2532 = vunpack.c.h.b16 %v1773
    %v2533 = vunpack.c.l.b16 %v1774
    %v2534 = vunpack.c.h.b16 %v1774
    %v2535 = vunpack.c.l.b16 %v1775
    %v2536 = vunpack.c.h.b16 %v1775
    %v2537 = vunpack.c.l.b16 %v1776
    %v2538 = vunpack.c.h.b16 %v1776
    %v2539 = vunpack.c.l.b16 %v1777
    %v2540 = vunpack.c.h.b16 %v1777
    %v2541 = vunpack.c.l.b16 %v1778
    %v2542 = vunpack.c.h.b16 %v1778
    %v2543 = vunpack.c.l.b16 %v1779
    %v2544 = vunpack.c.h.b16 %v1779
    %v2545 = vunpack.c.l.b16 %v1780
    %v2546 = vunpack.c.h.b16 %v1780
    %v2547 = vunpack.c.l.b16 %v1781
    %v2548 = vunpack.c.h.b16 %v1781
    %v2549 = vunpack.c.l.b16 %v1782
    %v2550 = vunpack.c.h.b16 %v1782
    %v2551 = vunpack.c.l.b16 %v1783
    %v2552 = vunpack.c.h.b16 %v1783
    %v2553 = vunpack.c.l.b16 %v1784
    %v2554 = vunpack.c.h.b16 %v1784
    %v2555 = vunpack.c.l.b16 %v1785
    %v2556 = vunpack.c.h.b16 %v1785
    %v2557 = vunpack.c.l.b16 %v1786
    %v2558 = vunpack.c.h.b16 %v1786
    %v2559 = vunpack.c.l.b16 %v1787
    %v2560 = vunpack.c.h.b16 %v1787
    %v2561 = vunpack.c.l.b16 %v1788
    %v2562 = vunpack.c.h.b16 %v1788
    %v2563 = vunpack.c.l.b16 %v1789
    %v2564 = vunpack.c.h.b16 %v1789
    %v2565 = vunpack.c.l.b16 %v1790
    %v2566 = vunpack.c.h.b16 %v1790
    %v2567 = vunpack.c.l.b16 %v1791
    %v2568 = vunpack.c.h.b16 %v1791
    %v2569 = vunpack.c.l.b16 %v1792
    %v2570 = vunpack.c.h.b16 %v1792
    %v2571 = vunpack.c.l.b16 %v1793
    %v2572 = vunpack.c.h.b16 %v1793
    %v2573 = vunpack.c.l.b16 %v1794
    %v2574 = vunpack.c.h.b16 %v1794
    %v2575 = vunpack.c.l.b16 %v1795
    %v2576 = vunpack.c.h.b16 %v1795
    %v2577 = vunpack.c.l.b16 %v1796
    %v2578 = vunpack.c.h.b16 %v1796
    %v2579 = vunpack.c.l.b16 %v1797
    %v2580 = vunpack.c.h.b16 %v1797
    %v2581 = vunpack.c.l.b16 %v1798
    %v2582 = vunpack.c.h.b16 %v1798
    %v2583 = vunpack.c.l.b16 %v1799
    %v2584 = vunpack.c.h.b16 %v1799
    %v2585 = vunpack.c.l.b16 %v1800
    %v2586 = vunpack.c.h.b16 %v1800
    %v2587 = vunpack.c.l.b16 %v1801
    %v2588 = vunpack.c.h.b16 %v1801
    %v2589 = vunpack.c.l.b16 %v1802
    %v2590 = vunpack.c.h.b16 %v1802
    %v2591 = vunpack.c.l.b16 %v1803
    %v2592 = vunpack.c.h.b16 %v1803
    %v2593 = vunpack.c.l.b16 %v1804
    %v2594 = vunpack.c.h.b16 %v1804
    %v2595 = vunpack.c.l.b16 %v1805
    %v2596 = vunpack.c.h.b16 %v1805
    %v2597 = vunpack.c.l.b16 %v1806
    %v2598 = vunpack.c.h.b16 %v1806
    %v2599 = vunpack.c.l.b16 %v1807
    %v2600 = vunpack.c.h.b16 %v1807
    %v2601 = vunpack.c.l.b16 %v1808
    %v2602 = vunpack.c.h.b16 %v1808
    %v2603 = vunpack.c.l.b16 %v1809
    %v2604 = vunpack.c.h.b16 %v1809
    %v2605 = vunpack.c.l.b16 %v1810
    %v2606 = vunpack.c.h.b16 %v1810
    %v2607 = vunpack.c.l.b16 %v1811
    %v2608 = vunpack.c.h.b16 %v1811
    %v2609 = vunpack.c.l.b16 %v1812
    %v2610 = vunpack.c.h.b16 %v1812
    %v2611 = vunpack.c.l.b16 %v1813
    %v2612 = vunpack.c.h.b16 %v1813
    %v2613 = vunpack.c.l.b16 %v1814
    %v2614 = vunpack.c.h.b16 %v1814
    %v2615 = vpack.c.b16 %v2111, %v2103
    %v2616 = vpack.c.b16 %v2112, %v2104
    %v2617 = vpack.c.b16 %v2113, %v2105
    %v2618 = vpack.c.b16 %v2114, %v2106
    %v2619 = vpack.c.b16 %v2115, %v2107
    %v2620 = vpack.c.b16 %v2116, %v2108
    %v2621 = vpack.c.b16 %v2117, %v2109
    %v2622 = vpack.c.b16 %v2118, %v2110
    %v2623 = vpack.c.b16 %v2127, %v2119
    %v2624 = vpack.c.b16 %v2128, %v2120
    %v2625 = vpack.c.b16 %v2129, %v2121
    %v2626 = vpack.c.b16 %v2130, %v2122
    %v2627 = vpack.c.b16 %v2131, %v2123
    %v2628 = vpack.c.b16 %v2132, %v2124
    %v2629 = vpack.c.b16 %v2133, %v2125
    %v2630 = vpack.c.b16 %v2134, %v2126
    %v2631 = vpack.c.b16 %v2143, %v2135
    %v2632 = vpack.c.b16 %v2144, %v2136
    %v2633 = vpack.c.b16 %v2145, %v2137
    %v2634 = vpack.c.b16 %v2146, %v2138
    %v2635 = vpack.c.b16 %v2147, %v2139
    %v2636 = vpack.c.b16 %v2148, %v2140
    %v2637 = vpack.c.b16 %v2149, %v2141
    %v2638 = vpack.c.b16 %v2150, %v2142
    %v2639 = vpack.c.b16 %v2159, %v2151
    %v2640 = vpack.c.b16 %v2160, %v2152
    %v2641 = vpack.c.b16 %v2161, %v2153
    %v2642 = vpack.c.b16 %v2162, %v2154
    %v2643 = vpack.c.b16 %v2163, %v2155
    %v2644 = vpack.c.b16 %v2164, %v2156
    %v2645 = vpack.c.b16 %v2165, %v2157
    %v2646 = vpack.c.b16 %v2166, %v2158
    %v2647 = vpack.c.b16 %v2175, %v2167
    %v2648 = vpack.c.b16 %v2176, %v2168
    %v2649 = vpack.c.b16 %v2177, %v2169
    %v2650 = vpack.c.b16 %v2178, %v2170
    %v2651 = vpack.c.b16 %v2179, %v2171
    %v2652 = vpack.c.b16 %v2180, %v2172
    %v2653 = vpack.c.b16 %v2181, %v2173
    %v2654 = vpack.c.b16 %v2182, %v2174
    %v2655 = vpack.c.b16 %v2191, %v2183
    %v2656 = vpack.c.b16 %v2192, %v2184
    %v2657 = vpack.c.b16 %v2193, %v2185
    %v2658 = vpack.c.b16 %v2194, %v2186
    %v2659 = vpack.c.b16 %v2195, %v2187
    %v2660 = vpack.c.b16 %v2196, %v2188
    %v2661 = vpack.c.b16 %v2197, %v2189
    %v2662 = vpack.c.b16 %v2198, %v2190
    %v2663 = vpack.c.b16 %v2207, %v2199
    %v2664 = vpack.c.b16 %v2208, %v2200
    %v2665 = vpack.c.b16 %v2209, %v2201
    %v2666 = vpack.c.b16 %v2210, %v2202
    %v2667 = vpack.c.b16 %v2211, %v2203
    %v2668 = vpack.c.b16 %v2212, %v2204
    %v2669 = vpack.c.b16 %v2213, %v2205
    %v2670 = vpack.c.b16 %v2214, %v2206
    %v2671 = vpack.c.b16 %v2223, %v2215
    %v2672 = vpack.c.b16 %v2224, %v2216
    %v2673 = vpack.c.b16 %v2225, %v2217
    %v2674 = vpack.c.b16 %v2226, %v2218
    %v2675 = vpack.c.b16 %v2227, %v2219
    %v2676 = vpack.c.b16 %v2228, %v2220
    %v2677 = vpack.c.b16 %v2229, %v2221
    %v2678 = vpack.c.b16 %v2230, %v2222
    %v2679 = vpack.c.b16 %v2239, %v2231
    %v2680 = vpack.c.b16 %v2240, %v2232
    %v2681 = vpack.c.b16 %v2241, %v2233
    %v2682 = vpack.c.b16 %v2242, %v2234
    %v2683 = vpack.c.b16 %v2243, %v2235
    %v2684 = vpack.c.b16 %v2244, %v2236
    %v2685 = vpack.c.b16 %v2245, %v2237
    %v2686 = vpack.c.b16 %v2246, %v2238
    %v2687 = vpack.c.b16 %v2255, %v2247
    %v2688 = vpack.c.b16 %v2256, %v2248
    %v2689 = vpack.c.b16 %v2257, %v2249
    %v2690 = vpack.c.b16 %v2258, %v2250
    %v2691 = vpack.c.b16 %v2259, %v2251
    %v2692 = vpack.c.b16 %v2260, %v2252
    %v2693 = vpack.c.b16 %v2261, %v2253
    %v2694 = vpack.c.b16 %v2262, %v2254
    %v2695 = vpack.c.b16 %v2271, %v2263
    %v2696 = vpack.c.b16 %v2272, %v2264
    %v2697 = vpack.c.b16 %v2273, %v2265
    %v2698 = vpack.c.b16 %v2274, %v2266
    %v2699 = vpack.c.b16 %v2275, %v2267
    %v2700 = vpack.c.b16 %v2276, %v2268
    %v2701 = vpack.c.b16 %v2277, %v2269
    %v2702 = vpack.c.b16 %v2278, %v2270
    %v2703 = vpack.c.b16 %v2287, %v2279
    %v2704 = vpack.c.b16 %v2288, %v2280
    %v2705 = vpack.c.b16 %v2289, %v2281
    %v2706 = vpack.c.b16 %v2290, %v2282
    %v2707 = vpack.c.b16 %v2291, %v2283
    %v2708 = vpack.c.b16 %v2292, %v2284
    %v2709 = vpack.c.b16 %v2293, %v2285
    %v2710 = vpack.c.b16 %v2294, %v2286
    %v2711 = vpack.c.b16 %v2303, %v2295
    %v2712 = vpack.c.b16 %v2304, %v2296
    %v2713 = vpack.c.b16 %v2305, %v2297
    %v2714 = vpack.c.b16 %v2306, %v2298
    %v2715 = vpack.c.b16 %v2307, %v2299
    %v2716 = vpack.c.b16 %v2308, %v2300
    %v2717 = vpack.c.b16 %v2309, %v2301
    %v2718 = vpack.c.b16 %v2310, %v2302
    %v2719 = vpack.c.b16 %v2319, %v2311
    %v2720 = vpack.c.b16 %v2320, %v2312
    %v2721 = vpack.c.b16 %v2321, %v2313
    %v2722 = vpack.c.b16 %v2322, %v2314
    %v2723 = vpack.c.b16 %v2323, %v2315
    %v2724 = vpack.c.b16 %v2324, %v2316
    %v2725 = vpack.c.b16 %v2325, %v2317
    %v2726 = vpack.c.b16 %v2326, %v2318
    %v2727 = vpack.c.b16 %v2335, %v2327
    %v2728 = vpack.c.b16 %v2336, %v2328
    %v2729 = vpack.c.b16 %v2337, %v2329
    %v2730 = vpack.c.b16 %v2338, %v2330
    %v2731 = vpack.c.b16 %v2339, %v2331
    %v2732 = vpack.c.b16 %v2340, %v2332
    %v2733 = vpack.c.b16 %v2341, %v2333
    %v2734 = vpack.c.b16 %v2342, %v2334
    %v2735 = vpack.c.b16 %v2351, %v2343
    %v2736 = vpack.c.b16 %v2352, %v2344
    %v2737 = vpack.c.b16 %v2353, %v2345
    %v2738 = vpack.c.b16 %v2354, %v2346
    %v2739 = vpack.c.b16 %v2355, %v2347
    %v2740 = vpack.c.b16 %v2356, %v2348
    %v2741 = vpack.c.b16 %v2357, %v2349
    %v2742 = vpack.c.b16 %v2358, %v2350
    %v2743 = vpack.c.b16 %v2367, %v2359
    %v2744 = vpack.c.b16 %v2368, %v2360
    %v2745 = vpack.c.b16 %v2369, %v2361
    %v2746 = vpack.c.b16 %v2370, %v2362
    %v2747 = vpack.c.b16 %v2371, %v2363
    %v2748 = vpack.c.b16 %v2372, %v2364
    %v2749 = vpack.c.b16 %v2373, %v2365
    %v2750 = vpack.c.b16 %v2374, %v2366
    %v2751 = vpack.c.b16 %v2383, %v2375
    %v2752 = vpack.c.b16 %v2384, %v2376
    %v2753 = vpack.c.b16 %v2385, %v2377
    %v2754 = vpack.c.b16 %v2386, %v2378
    %v2755 = vpack.c.b16 %v2387, %v2379
    %v2756 = vpack.c.b16 %v2388, %v2380
    %v2757 = vpack.c.b16 %v2389, %v2381
    %v2758 = vpack.c.b16 %v2390, %v2382
    %v2759 = vpack.c.b16 %v2399, %v2391
    %v2760 = vpack.c.b16 %v2400, %v2392
    %v2761 = vpack.c.b16 %v2401, %v2393
    %v2762 = vpack.c.b16 %v2402, %v2394
    %v2763 = vpack.c.b16 %v2403, %v2395
    %v2764 = vpack.c.b16 %v2404, %v2396
    %v2765 = vpack.c.b16 %v2405, %v2397
    %v2766 = vpack.c.b16 %v2406, %v2398
    %v2767 = vpack.c.b16 %v2415, %v2407
    %v2768 = vpack.c.b16 %v2416, %v2408
    %v2769 = vpack.c.b16 %v2417, %v2409
    %v2770 = vpack.c.b16 %v2418, %v2410
    %v2771 = vpack.c.b16 %v2419, %v2411
    %v2772 = vpack.c.b16 %v2420, %v2412
    %v2773 = vpack.c.b16 %v2421, %v2413
    %v2774 = vpack.c.b16 %v2422, %v2414
    %v2775 = vpack.c.b16 %v2431, %v2423
    %v2776 = vpack.c.b16 %v2432, %v2424
    %v2777 = vpack.c.b16 %v2433, %v2425
    %v2778 = vpack.c.b16 %v2434, %v2426
    %v2779 = vpack.c.b16 %v2435, %v2427
    %v2780 = vpack.c.b16 %v2436, %v2428
    %v2781 = vpack.c.b16 %v2437, %v2429
    %v2782 = vpack.c.b16 %v2438, %v2430
    %v2783 = vpack.c.b16 %v2447, %v2439
    %v2784 = vpack.c.b16 %v2448, %v2440
    %v2785 = vpack.c.b16 %v2449, %v2441
    %v2786 = vpack.c.b16 %v2450, %v2442
    %v2787 = vpack.c.b16 %v2451, %v2443
    %v2788 = vpack.c.b16 %v2452, %v2444
    %v2789 = vpack.c.b16 %v2453, %v2445
    %v2790 = vpack.c.b16 %v2454, %v2446
    %v2791 = vpack.c.b16 %v2463, %v2455
    %v2792 = vpack.c.b16 %v2464, %v2456
    %v2793 = vpack.c.b16 %v2465, %v2457
    %v2794 = vpack.c.b16 %v2466, %v2458
    %v2795 = vpack.c.b16 %v2467, %v2459
    %v2796 = vpack.c.b16 %v2468, %v2460
    %v2797 = vpack.c.b16 %v2469, %v2461
    %v2798 = vpack.c.b16 %v2470, %v2462
    %v2799 = vpack.c.b16 %v2479, %v2471
    %v2800 = vpack.c.b16 %v2480, %v2472
    %v2801 = vpack.c.b16 %v2481, %v2473
    %v2802 = vpack.c.b16 %v2482, %v2474
    %v2803 = vpack.c.b16 %v2483, %v2475
    %v2804 = vpack.c.b16 %v2484, %v2476
    %v2805 = vpack.c.b16 %v2485, %v2477
    %v2806 = vpack.c.b16 %v2486, %v2478
    %v2807 = vpack.c.b16 %v2495, %v2487
    %v2808 = vpack.c.b16 %v2496, %v2488
    %v2809 = vpack.c.b16 %v2497, %v2489
    %v2810 = vpack.c.b16 %v2498, %v2490
    %v2811 = vpack.c.b16 %v2499, %v2491
    %v2812 = vpack.c.b16 %v2500, %v2492
    %v2813 = vpack.c.b16 %v2501, %v2493
    %v2814 = vpack.c.b16 %v2502, %v2494
    %v2815 = vpack.c.b16 %v2511, %v2503
    %v2816 = vpack.c.b16 %v2512, %v2504
    %v2817 = vpack.c.b16 %v2513, %v2505
    %v2818 = vpack.c.b16 %v2514, %v2506
    %v2819 = vpack.c.b16 %v2515, %v2507
    %v2820 = vpack.c.b16 %v2516, %v2508
    %v2821 = vpack.c.b16 %v2517, %v2509
    %v2822 = vpack.c.b16 %v2518, %v2510
    %v2823 = vpack.c.b16 %v2527, %v2519
    %v2824 = vpack.c.b16 %v2528, %v2520
    %v2825 = vpack.c.b16 %v2529, %v2521
    %v2826 = vpack.c.b16 %v2530, %v2522
    %v2827 = vpack.c.b16 %v2531, %v2523
    %v2828 = vpack.c.b16 %v2532, %v2524
    %v2829 = vpack.c.b16 %v2533, %v2525
    %v2830 = vpack.c.b16 %v2534, %v2526
    %v2831 = vpack.c.b16 %v2543, %v2535
    %v2832 = vpack.c.b16 %v2544, %v2536
    %v2833 = vpack.c.b16 %v2545, %v2537
    %v2834 = vpack.c.b16 %v2546, %v2538
    %v2835 = vpack.c.b16 %v2547, %v2539
    %v2836 = vpack.c.b16 %v2548, %v2540
    %v2837 = vpack.c.b16 %v2549, %v2541
    %v2838 = vpack.c.b16 %v2550, %v2542
    %v2839 = vpack.c.b16 %v2559, %v2551
    %v2840 = vpack.c.b16 %v2560, %v2552
    %v2841 = vpack.c.b16 %v2561, %v2553
    %v2842 = vpack.c.b16 %v2562, %v2554
    %v2843 = vpack.c.b16 %v2563, %v2555
    %v2844 = vpack.c.b16 %v2564, %v2556
    %v2845 = vpack.c.b16 %v2565, %v2557
    %v2846 = vpack.c.b16 %v2566, %v2558
    %v2847 = vpack.c.b16 %v2575, %v2567
    %v2848 = vpack.c.b16 %v2576, %v2568
    %v2849 = vpack.c.b16 %v2577, %v2569
    %v2850 = vpack.c.b16 %v2578, %v2570
    %v2851 = vpack.c.b16 %v2579, %v2571
    %v2852 = vpack.c.b16 %v2580, %v2572
    %v2853 = vpack.c.b16 %v2581, %v2573
    %v2854 = vpack.c.b16 %v2582, %v2574
    %v2855 = vpack.c.b16 %v2591, %v2583
    %v2856 = vpack.c.b16 %v2592, %v2584
    %v2857 = vpack.c.b16 %v2593, %v2585
    %v2858 = vpack.c.b16 %v2594, %v2586
    %v2859 = vpack.c.b16 %v2595, %v2587
    %v2860 = vpack.c.b16 %v2596, %v2588
    %v2861 = vpack.c.b16 %v2597, %v2589
    %v2862 = vpack.c.b16 %v2598, %v2590
    %v2863 = vpack.c.b16 %v2607, %v2599
    %v2864 = vpack.c.b16 %v2608, %v2600
    %v2865 = vpack.c.b16 %v2609, %v2601
    %v2866 = vpack.c.b16 %v2610, %v2602
    %v2867 = vpack.c.b16 %v2611, %v2603
    %v2868 = vpack.c.b16 %v2612, %v2604
    %v2869 = vpack.c.b16 %v2613, %v2605
    %v2870 = vpack.c.b16 %v2614, %v2606
    %3127 = vmatprep.subr.bf16.mxu0 %v2616
    %3128 = vmatpush1.bf16.msra.mxu0 %v2615
    %3129 = vmatprep.subr.bf16.mxu0 %v2624
    %3130 = vmatpush1.bf16.msra.mxu0 %v2623
    %3131 = vmatprep.subr.bf16.mxu0 %v2632
    %3132 = vmatpush1.bf16.msra.mxu0 %v2631
    %3133 = vmatprep.subr.bf16.mxu0 %v2640
    %3134 = vmatpush1.bf16.msra.mxu0 %v2639
    %3135 = vmatprep.subr.bf16.mxu0 %v2648
    %3136 = vmatpush1.bf16.msra.mxu0 %v2647
    %3137 = vmatprep.subr.bf16.mxu0 %v2656
    %3138 = vmatpush1.bf16.msra.mxu0 %v2655
    %3139 = vmatprep.subr.bf16.mxu0 %v2664
    %3140 = vmatpush1.bf16.msra.mxu0 %v2663
    %3141 = vmatprep.subr.bf16.mxu0 %v2672
    %3142 = vmatpush1.bf16.msra.mxu0 %v2671
    %3143 = vmatprep.subr.bf16.mxu0 %v2680
    %3144 = vmatpush1.bf16.msra.mxu0 %v2679
    %3145 = vmatprep.subr.bf16.mxu0 %v2688
    %3146 = vmatpush1.bf16.msra.mxu0 %v2687
    %3147 = vmatprep.subr.bf16.mxu0 %v2696
    %3148 = vmatpush1.bf16.msra.mxu0 %v2695
    %3149 = vmatprep.subr.bf16.mxu0 %v2704
    %3150 = vmatpush1.bf16.msra.mxu0 %v2703
    %3151 = vmatprep.subr.bf16.mxu0 %v2712
    %3152 = vmatpush1.bf16.msra.mxu0 %v2711
    %3153 = vmatprep.subr.bf16.mxu0 %v2720
    %3154 = vmatpush1.bf16.msra.mxu0 %v2719
    %3155 = vmatprep.subr.bf16.mxu0 %v2728
    %3156 = vmatpush1.bf16.msra.mxu0 %v2727
    %3157 = vmatprep.subr.bf16.mxu0 %v2736
    %3158 = vmatpush1.bf16.msra.mxu0 %v2735
    %3159 = vmatprep.mubr.bf16.mxu0 %v1556
    %3160 = vmatmul.mubr.bf16.gmra.mrb[0].mxu0 %v1555
    %v3161 = vpop.f32.mrb[0].mxu0
    %v3162 = vadd.f32 %v1818, %v3161
    %v3163 = vpop.f32.mrb[0].mxu0
    %v3164 = vadd.f32 %v1822, %v3163
    %v3165 = vpop.f32.mrb[0].mxu0
    %v3166 = vpop.f32.mrb[0].mxu0
    %3167 = vdwg.mxu0
    %3168 = vmatprep.subr.bf16.mxu0 %v2744
    %3169 = vmatpush1.bf16.msra.mxu0 %v2743
    %3170 = vmatprep.subr.bf16.mxu0 %v2752
    %3171 = vmatpush1.bf16.msra.mxu0 %v2751
    %3172 = vmatprep.subr.bf16.mxu0 %v2760
    %3173 = vmatpush1.bf16.msra.mxu0 %v2759
    %3174 = vmatprep.subr.bf16.mxu0 %v2768
    %3175 = vmatpush1.bf16.msra.mxu0 %v2767
    %3176 = vmatprep.subr.bf16.mxu0 %v2776
    %3177 = vmatpush1.bf16.msra.mxu0 %v2775
    %3178 = vmatprep.subr.bf16.mxu0 %v2784
    %3179 = vmatpush1.bf16.msra.mxu0 %v2783
    %3180 = vmatprep.subr.bf16.mxu0 %v2792
    %3181 = vmatpush1.bf16.msra.mxu0 %v2791
    %3182 = vmatprep.subr.bf16.mxu0 %v2800
    %3183 = vmatpush1.bf16.msra.mxu0 %v2799
    %3184 = vmatprep.subr.bf16.mxu0 %v2808
    %3185 = vmatpush1.bf16.msra.mxu0 %v2807
    %3186 = vmatprep.subr.bf16.mxu0 %v2816
    %3187 = vmatpush1.bf16.msra.mxu0 %v2815
    %3188 = vmatprep.subr.bf16.mxu0 %v2824
    %3189 = vmatpush1.bf16.msra.mxu0 %v2823
    %3190 = vmatprep.subr.bf16.mxu0 %v2832
    %3191 = vmatpush1.bf16.msra.mxu0 %v2831
    %3192 = vmatprep.subr.bf16.mxu0 %v2840
    %3193 = vmatpush1.bf16.msra.mxu0 %v2839
    %3194 = vmatprep.subr.bf16.mxu0 %v2848
    %3195 = vmatpush1.bf16.msra.mxu0 %v2847
    %3196 = vmatprep.subr.bf16.mxu0 %v2856
    %3197 = vmatpush1.bf16.msra.mxu0 %v2855
    %3198 = vmatprep.subr.bf16.mxu0 %v2864
    %3199 = vmatpush1.bf16.msra.mxu0 %v2863
    %3200 = vmatprep.mubr.bf16.mxu0 %v1558
    %3201 = vmatmul.mubr.bf16.gmra.mrb[0].mxu0 %v1557
    %v3202 = vpop.f32.mrb[0].mxu0
    %v3203 = vadd.f32 %v3162, %v3202
    %v3204 = vpop.f32.mrb[0].mxu0
    %v3205 = vadd.f32 %v3164, %v3204
    %v3206 = vpop.f32.mrb[0].mxu0
    %v3207 = vpop.f32.mrb[0].mxu0
    %3208 = vdwg.mxu0
    %3209 = vmatprep.subr.bf16.mxu0 %v2618
    %3210 = vmatpush1.bf16.msra.mxu0 %v2617
    %3211 = vmatprep.subr.bf16.mxu0 %v2626
    %3212 = vmatpush1.bf16.msra.mxu0 %v2625
    %3213 = vmatprep.subr.bf16.mxu0 %v2634
    %3214 = vmatpush1.bf16.msra.mxu0 %v2633
    %3215 = vmatprep.subr.bf16.mxu0 %v2642
    %3216 = vmatpush1.bf16.msra.mxu0 %v2641
    %3217 = vmatprep.subr.bf16.mxu0 %v2650
    %3218 = vmatpush1.bf16.msra.mxu0 %v2649
    %3219 = vmatprep.subr.bf16.mxu0 %v2658
    %3220 = vmatpush1.bf16.msra.mxu0 %v2657
    %3221 = vmatprep.subr.bf16.mxu0 %v2666
    %3222 = vmatpush1.bf16.msra.mxu0 %v2665
    %3223 = vmatprep.subr.bf16.mxu0 %v2674
    %3224 = vmatpush1.bf16.msra.mxu0 %v2673
    %3225 = vmatprep.subr.bf16.mxu0 %v2682
    %3226 = vmatpush1.bf16.msra.mxu0 %v2681
    %3227 = vmatprep.subr.bf16.mxu0 %v2690
    %3228 = vmatpush1.bf16.msra.mxu0 %v2689
    %3229 = vmatprep.subr.bf16.mxu0 %v2698
    %3230 = vmatpush1.bf16.msra.mxu0 %v2697
    %3231 = vmatprep.subr.bf16.mxu0 %v2706
    %3232 = vmatpush1.bf16.msra.mxu0 %v2705
    %3233 = vmatprep.subr.bf16.mxu0 %v2714
    %3234 = vmatpush1.bf16.msra.mxu0 %v2713
    %3235 = vmatprep.subr.bf16.mxu0 %v2722
    %3236 = vmatpush1.bf16.msra.mxu0 %v2721
    %3237 = vmatprep.subr.bf16.mxu0 %v2730
    %3238 = vmatpush1.bf16.msra.mxu0 %v2729
    %3239 = vmatprep.subr.bf16.mxu0 %v2738
    %3240 = vmatpush1.bf16.msra.mxu0 %v2737
    %3241 = vmatprep.mubr.bf16.mxu0 %v1556
    %3242 = vmatmul.mubr.bf16.gmra.mrb[0].mxu0 %v1555
    %v3243 = vpop.f32.mrb[0].mxu0
    %v3244 = vadd.f32 %v1826, %v3243
    %v3245 = vpop.f32.mrb[0].mxu0
    %v3246 = vadd.f32 %v1830, %v3245
    %v3247 = vpop.f32.mrb[0].mxu0
    %v3248 = vpop.f32.mrb[0].mxu0
    %3249 = vdwg.mxu0
    %3250 = vmatprep.subr.bf16.mxu0 %v2746
    %3251 = vmatpush1.bf16.msra.mxu0 %v2745
    %3252 = vmatprep.subr.bf16.mxu0 %v2754
    %3253 = vmatpush1.bf16.msra.mxu0 %v2753
    %3254 = vmatprep.subr.bf16.mxu0 %v2762
    %3255 = vmatpush1.bf16.msra.mxu0 %v2761
    %3256 = vmatprep.subr.bf16.mxu0 %v2770
    %3257 = vmatpush1.bf16.msra.mxu0 %v2769
    %3258 = vmatprep.subr.bf16.mxu0 %v2778
    %3259 = vmatpush1.bf16.msra.mxu0 %v2777
    %3260 = vmatprep.subr.bf16.mxu0 %v2786
    %3261 = vmatpush1.bf16.msra.mxu0 %v2785
    %3262 = vmatprep.subr.bf16.mxu0 %v2794
    %3263 = vmatpush1.bf16.msra.mxu0 %v2793
    %3264 = vmatprep.subr.bf16.mxu0 %v2802
    %3265 = vmatpush1.bf16.msra.mxu0 %v2801
    %3266 = vmatprep.subr.bf16.mxu0 %v2810
    %3267 = vmatpush1.bf16.msra.mxu0 %v2809
    %3268 = vmatprep.subr.bf16.mxu0 %v2818
    %3269 = vmatpush1.bf16.msra.mxu0 %v2817
    %3270 = vmatprep.subr.bf16.mxu0 %v2826
    %3271 = vmatpush1.bf16.msra.mxu0 %v2825
    %3272 = vmatprep.subr.bf16.mxu0 %v2834
    %3273 = vmatpush1.bf16.msra.mxu0 %v2833
    %3274 = vmatprep.subr.bf16.mxu0 %v2842
    %3275 = vmatpush1.bf16.msra.mxu0 %v2841
    %3276 = vmatprep.subr.bf16.mxu0 %v2850
    %3277 = vmatpush1.bf16.msra.mxu0 %v2849
    %3278 = vmatprep.subr.bf16.mxu0 %v2858
    %3279 = vmatpush1.bf16.msra.mxu0 %v2857
    %3280 = vmatprep.subr.bf16.mxu0 %v2866
    %3281 = vmatpush1.bf16.msra.mxu0 %v2865
    %3282 = vmatprep.mubr.bf16.mxu0 %v1558
    %3283 = vmatmul.mubr.bf16.gmra.mrb[0].mxu0 %v1557
    %v3284 = vpop.f32.mrb[0].mxu0
    %v3285 = vadd.f32 %v3244, %v3284
    %v3286 = vpop.f32.mrb[0].mxu0
    %v3287 = vadd.f32 %v3246, %v3286
    %v3288 = vpop.f32.mrb[0].mxu0
    %v3289 = vpop.f32.mrb[0].mxu0
    %3290 = vdwg.mxu0
    %3291 = vmatprep.subr.bf16.mxu0 %v2620
    %3292 = vmatpush1.bf16.msra.mxu0 %v2619
    %3293 = vmatprep.subr.bf16.mxu0 %v2628
    %3294 = vmatpush1.bf16.msra.mxu0 %v2627
    %3295 = vmatprep.subr.bf16.mxu0 %v2636
    %3296 = vmatpush1.bf16.msra.mxu0 %v2635
    %3297 = vmatprep.subr.bf16.mxu0 %v2644
    %3298 = vmatpush1.bf16.msra.mxu0 %v2643
    %3299 = vmatprep.subr.bf16.mxu0 %v2652
    %3300 = vmatpush1.bf16.msra.mxu0 %v2651
    %3301 = vmatprep.subr.bf16.mxu0 %v2660
    %3302 = vmatpush1.bf16.msra.mxu0 %v2659
    %3303 = vmatprep.subr.bf16.mxu0 %v2668
    %3304 = vmatpush1.bf16.msra.mxu0 %v2667
    %3305 = vmatprep.subr.bf16.mxu0 %v2676
    %3306 = vmatpush1.bf16.msra.mxu0 %v2675
    %3307 = vmatprep.subr.bf16.mxu0 %v2684
    %3308 = vmatpush1.bf16.msra.mxu0 %v2683
    %3309 = vmatprep.subr.bf16.mxu0 %v2692
    %3310 = vmatpush1.bf16.msra.mxu0 %v2691
    %3311 = vmatprep.subr.bf16.mxu0 %v2700
    %3312 = vmatpush1.bf16.msra.mxu0 %v2699
    %3313 = vmatprep.subr.bf16.mxu0 %v2708
    %3314 = vmatpush1.bf16.msra.mxu0 %v2707
    %3315 = vmatprep.subr.bf16.mxu0 %v2716
    %3316 = vmatpush1.bf16.msra.mxu0 %v2715
    %3317 = vmatprep.subr.bf16.mxu0 %v2724
    %3318 = vmatpush1.bf16.msra.mxu0 %v2723
    %3319 = vmatprep.subr.bf16.mxu0 %v2732
    %3320 = vmatpush1.bf16.msra.mxu0 %v2731
    %3321 = vmatprep.subr.bf16.mxu0 %v2740
    %3322 = vmatpush1.bf16.msra.mxu0 %v2739
    %3323 = vmatprep.mubr.bf16.mxu0 %v1556
    %3324 = vmatmul.mubr.bf16.gmra.mrb[0].mxu0 %v1555
    %v3325 = vpop.f32.mrb[0].mxu0
    %v3326 = vadd.f32 %v1834, %v3325
    %v3327 = vpop.f32.mrb[0].mxu0
    %v3328 = vadd.f32 %v1838, %v3327
    %v3329 = vpop.f32.mrb[0].mxu0
    %v3330 = vpop.f32.mrb[0].mxu0
    %3331 = vdwg.mxu0
    %3332 = vmatprep.subr.bf16.mxu0 %v2748
    %3333 = vmatpush1.bf16.msra.mxu0 %v2747
    %3334 = vmatprep.subr.bf16.mxu0 %v2756
    %3335 = vmatpush1.bf16.msra.mxu0 %v2755
    %3336 = vmatprep.subr.bf16.mxu0 %v2764
    %3337 = vmatpush1.bf16.msra.mxu0 %v2763
    %3338 = vmatprep.subr.bf16.mxu0 %v2772
    %3339 = vmatpush1.bf16.msra.mxu0 %v2771
    %3340 = vmatprep.subr.bf16.mxu0 %v2780
    %3341 = vmatpush1.bf16.msra.mxu0 %v2779
    %3342 = vmatprep.subr.bf16.mxu0 %v2788
    %3343 = vmatpush1.bf16.msra.mxu0 %v2787
    %3344 = vmatprep.subr.bf16.mxu0 %v2796
    %3345 = vmatpush1.bf16.msra.mxu0 %v2795
    %3346 = vmatprep.subr.bf16.mxu0 %v2804
    %3347 = vmatpush1.bf16.msra.mxu0 %v2803
    %3348 = vmatprep.subr.bf16.mxu0 %v2812
    %3349 = vmatpush1.bf16.msra.mxu0 %v2811
    %3350 = vmatprep.subr.bf16.mxu0 %v2820
    %3351 = vmatpush1.bf16.msra.mxu0 %v2819
    %3352 = vmatprep.subr.bf16.mxu0 %v2828
    %3353 = vmatpush1.bf16.msra.mxu0 %v2827
    %3354 = vmatprep.subr.bf16.mxu0 %v2836
    %3355 = vmatpush1.bf16.msra.mxu0 %v2835
    %3356 = vmatprep.subr.bf16.mxu0 %v2844
    %3357 = vmatpush1.bf16.msra.mxu0 %v2843
    %3358 = vmatprep.subr.bf16.mxu0 %v2852
    %3359 = vmatpush1.bf16.msra.mxu0 %v2851
    %3360 = vmatprep.subr.bf16.mxu0 %v2860
    %3361 = vmatpush1.bf16.msra.mxu0 %v2859
    %3362 = vmatprep.subr.bf16.mxu0 %v2868
    %3363 = vmatpush1.bf16.msra.mxu0 %v2867
    %3364 = vmatprep.mubr.bf16.mxu0 %v1558
    %3365 = vmatmul.mubr.bf16.gmra.mrb[0].mxu0 %v1557
    %v3366 = vpop.f32.mrb[0].mxu0
    %v3367 = vadd.f32 %v3326, %v3366
    %v3368 = vpop.f32.mrb[0].mxu0
    %v3369 = vadd.f32 %v3328, %v3368
    %v3370 = vpop.f32.mrb[0].mxu0
    %v3371 = vpop.f32.mrb[0].mxu0
    %3372 = vdwg.mxu0
    %3373 = vmatprep.subr.bf16.mxu0 %v2622
    %3374 = vmatpush1.bf16.msra.mxu0 %v2621
    %3375 = vmatprep.subr.bf16.mxu0 %v2630
    %3376 = vmatpush1.bf16.msra.mxu0 %v2629
    %3377 = vmatprep.subr.bf16.mxu0 %v2638
    %3378 = vmatpush1.bf16.msra.mxu0 %v2637
    %3379 = vmatprep.subr.bf16.mxu0 %v2646
    %3380 = vmatpush1.bf16.msra.mxu0 %v2645
    %3381 = vmatprep.subr.bf16.mxu0 %v2654
    %3382 = vmatpush1.bf16.msra.mxu0 %v2653
    %3383 = vmatprep.subr.bf16.mxu0 %v2662
    %3384 = vmatpush1.bf16.msra.mxu0 %v2661
    %3385 = vmatprep.subr.bf16.mxu0 %v2670
    %3386 = vmatpush1.bf16.msra.mxu0 %v2669
    %3387 = vmatprep.subr.bf16.mxu0 %v2678
    %3388 = vmatpush1.bf16.msra.mxu0 %v2677
    %3389 = vmatprep.subr.bf16.mxu0 %v2686
    %3390 = vmatpush1.bf16.msra.mxu0 %v2685
    %3391 = vmatprep.subr.bf16.mxu0 %v2694
    %3392 = vmatpush1.bf16.msra.mxu0 %v2693
    %3393 = vmatprep.subr.bf16.mxu0 %v2702
    %3394 = vmatpush1.bf16.msra.mxu0 %v2701
    %3395 = vmatprep.subr.bf16.mxu0 %v2710
    %3396 = vmatpush1.bf16.msra.mxu0 %v2709
    %3397 = vmatprep.subr.bf16.mxu0 %v2718
    %3398 = vmatpush1.bf16.msra.mxu0 %v2717
    %3399 = vmatprep.subr.bf16.mxu0 %v2726
    %3400 = vmatpush1.bf16.msra.mxu0 %v2725
    %3401 = vmatprep.subr.bf16.mxu0 %v2734
    %3402 = vmatpush1.bf16.msra.mxu0 %v2733
    %3403 = vmatprep.subr.bf16.mxu0 %v2742
    %3404 = vmatpush1.bf16.msra.mxu0 %v2741
    %3405 = vmatprep.mubr.bf16.mxu0 %v1556
    %3406 = vmatmul.mubr.bf16.gmra.mrb[0].mxu0 %v1555
    %v3407 = vpop.f32.mrb[0].mxu0
    %v3408 = vadd.f32 %v1842, %v3407
    %v3409 = vpop.f32.mrb[0].mxu0
    %v3410 = vadd.f32 %v1846, %v3409
    %v3411 = vpop.f32.mrb[0].mxu0
    %v3412 = vpop.f32.mrb[0].mxu0
    %3413 = vdwg.mxu0
    %3414 = vmatprep.subr.bf16.mxu0 %v2750
    %3415 = vmatpush1.bf16.msra.mxu0 %v2749
    %3416 = vmatprep.subr.bf16.mxu0 %v2758
    %3417 = vmatpush1.bf16.msra.mxu0 %v2757
    %3418 = vmatprep.subr.bf16.mxu0 %v2766
    %3419 = vmatpush1.bf16.msra.mxu0 %v2765
    %3420 = vmatprep.subr.bf16.mxu0 %v2774
    %3421 = vmatpush1.bf16.msra.mxu0 %v2773
    %3422 = vmatprep.subr.bf16.mxu0 %v2782
    %3423 = vmatpush1.bf16.msra.mxu0 %v2781
    %3424 = vmatprep.subr.bf16.mxu0 %v2790
    %3425 = vmatpush1.bf16.msra.mxu0 %v2789
    %3426 = vmatprep.subr.bf16.mxu0 %v2798
    %3427 = vmatpush1.bf16.msra.mxu0 %v2797
    %3428 = vmatprep.subr.bf16.mxu0 %v2806
    %3429 = vmatpush1.bf16.msra.mxu0 %v2805
    %3430 = vmatprep.subr.bf16.mxu0 %v2814
    %3431 = vmatpush1.bf16.msra.mxu0 %v2813
    %3432 = vmatprep.subr.bf16.mxu0 %v2822
    %3433 = vmatpush1.bf16.msra.mxu0 %v2821
    %3434 = vmatprep.subr.bf16.mxu0 %v2830
    %3435 = vmatpush1.bf16.msra.mxu0 %v2829
    %3436 = vmatprep.subr.bf16.mxu0 %v2838
    %3437 = vmatpush1.bf16.msra.mxu0 %v2837
    %3438 = vmatprep.subr.bf16.mxu0 %v2846
    %3439 = vmatpush1.bf16.msra.mxu0 %v2845
    %3440 = vmatprep.subr.bf16.mxu0 %v2854
    %3441 = vmatpush1.bf16.msra.mxu0 %v2853
    %3442 = vmatprep.subr.bf16.mxu0 %v2862
    %3443 = vmatpush1.bf16.msra.mxu0 %v2861
    %3444 = vmatprep.subr.bf16.mxu0 %v2870
    %3445 = vmatpush1.bf16.msra.mxu0 %v2869
    %3446 = vmatprep.mubr.bf16.mxu0 %v1558
    %3447 = vmatmul.mubr.bf16.gmra.mrb[0].mxu0 %v1557
    %v3448 = vpop.f32.mrb[0].mxu0
    %v3449 = vadd.f32 %v3408, %v3448
    %v3450 = vpop.f32.mrb[0].mxu0
    %v3451 = vadd.f32 %v3410, %v3450
    %v3452 = vpop.f32.mrb[0].mxu0
    %v3453 = vpop.f32.mrb[0].mxu0
    %3454 = vdwg.mxu0
    %vm3455 = vcmask 1043456
    %v3456 = vsel %vm3455, %v3203, 0.0
    %v3457 = vrot.slane %v3456, 4
    %v3458 = vadd.f32 %v3456, %v3457
    %v3459 = vrot.slane %v3458, 2
    %v3460 = vadd.f32 %v3458, %v3459
    %v3461 = vrot.slane %v3460, 1
    %v3462 = vadd.f32 %v3460, %v3461
    %v3463 = vsel %vm3455, %v3205, 0.0
    %v3464 = vrot.slane %v3463, 4
    %v3465 = vadd.f32 %v3463, %v3464
    %v3466 = vrot.slane %v3465, 2
    %v3467 = vadd.f32 %v3465, %v3466
    %v3468 = vrot.slane %v3467, 1
    %v3469 = vadd.f32 %v3467, %v3468
    %v3470 = vsel %vm3455, %v3285, 0.0
    %v3471 = vrot.slane %v3470, 4
    %v3472 = vadd.f32 %v3470, %v3471
    %v3473 = vrot.slane %v3472, 2
    %v3474 = vadd.f32 %v3472, %v3473
    %v3475 = vrot.slane %v3474, 1
    %v3476 = vadd.f32 %v3474, %v3475
    %v3477 = vsel %vm3455, %v3287, 0.0
    %v3478 = vrot.slane %v3477, 4
    %v3479 = vadd.f32 %v3477, %v3478
    %v3480 = vrot.slane %v3479, 2
    %v3481 = vadd.f32 %v3479, %v3480
    %v3482 = vrot.slane %v3481, 1
    %v3483 = vadd.f32 %v3481, %v3482
    %v3484 = vsel %vm3455, %v3367, 0.0
    %v3485 = vrot.slane %v3484, 4
    %v3486 = vadd.f32 %v3484, %v3485
    %v3487 = vrot.slane %v3486, 2
    %v3488 = vadd.f32 %v3486, %v3487
    %v3489 = vrot.slane %v3488, 1
    %v3490 = vadd.f32 %v3488, %v3489
    %v3491 = vsel %vm3455, %v3369, 0.0
    %v3492 = vrot.slane %v3491, 4
    %v3493 = vadd.f32 %v3491, %v3492
    %v3494 = vrot.slane %v3493, 2
    %v3495 = vadd.f32 %v3493, %v3494
    %v3496 = vrot.slane %v3495, 1
    %v3497 = vadd.f32 %v3495, %v3496
    %v3498 = vsel %vm3455, %v3449, 0.0
    %v3499 = vrot.slane %v3498, 4
    %v3500 = vadd.f32 %v3498, %v3499
    %v3501 = vrot.slane %v3500, 2
    %v3502 = vadd.f32 %v3500, %v3501
    %v3503 = vrot.slane %v3502, 1
    %v3504 = vadd.f32 %v3502, %v3503
    %v3505 = vsel %vm3455, %v3451, 0.0
    %v3506 = vrot.slane %v3505, 4
    %v3507 = vadd.f32 %v3505, %v3506
    %v3508 = vrot.slane %v3507, 2
    %v3509 = vadd.f32 %v3507, %v3508
    %v3510 = vrot.slane %v3509, 1
    %v3511 = vadd.f32 %v3509, %v3510
    %v3512 = vmul.f32 %v3203, %v3203
    %v3513 = vmul.f32 %v3205, %v3205
    %v3514 = vmul.f32 %v3285, %v3285
    %v3515 = vmul.f32 %v3287, %v3287
    %v3516 = vmul.f32 %v3367, %v3367
    %v3517 = vmul.f32 %v3369, %v3369
    %v3518 = vmul.f32 %v3449, %v3449
    %v3519 = vmul.f32 %v3451, %v3451
    %v3520 = vsel %vm3455, %v3512, 0.0
    %v3521 = vrot.slane %v3520, 4
    %v3522 = vadd.f32 %v3520, %v3521
    %v3523 = vrot.slane %v3522, 2
    %v3524 = vadd.f32 %v3522, %v3523
    %v3525 = vrot.slane %v3524, 1
    %v3526 = vadd.f32 %v3524, %v3525
    %v3527 = vsel %vm3455, %v3513, 0.0
    %v3528 = vrot.slane %v3527, 4
    %v3529 = vadd.f32 %v3527, %v3528
    %v3530 = vrot.slane %v3529, 2
    %v3531 = vadd.f32 %v3529, %v3530
    %v3532 = vrot.slane %v3531, 1
    %v3533 = vadd.f32 %v3531, %v3532
    %v3534 = vsel %vm3455, %v3514, 0.0
    %v3535 = vrot.slane %v3534, 4
    %v3536 = vadd.f32 %v3534, %v3535
    %v3537 = vrot.slane %v3536, 2
    %v3538 = vadd.f32 %v3536, %v3537
    %v3539 = vrot.slane %v3538, 1
    %v3540 = vadd.f32 %v3538, %v3539
    %v3541 = vsel %vm3455, %v3515, 0.0
    %v3542 = vrot.slane %v3541, 4
    %v3543 = vadd.f32 %v3541, %v3542
    %v3544 = vrot.slane %v3543, 2
    %v3545 = vadd.f32 %v3543, %v3544
    %v3546 = vrot.slane %v3545, 1
    %v3547 = vadd.f32 %v3545, %v3546
    %v3548 = vsel %vm3455, %v3516, 0.0
    %v3549 = vrot.slane %v3548, 4
    %v3550 = vadd.f32 %v3548, %v3549
    %v3551 = vrot.slane %v3550, 2
    %v3552 = vadd.f32 %v3550, %v3551
    %v3553 = vrot.slane %v3552, 1
    %v3554 = vadd.f32 %v3552, %v3553
    %v3555 = vsel %vm3455, %v3517, 0.0
    %v3556 = vrot.slane %v3555, 4
    %v3557 = vadd.f32 %v3555, %v3556
    %v3558 = vrot.slane %v3557, 2
    %v3559 = vadd.f32 %v3557, %v3558
    %v3560 = vrot.slane %v3559, 1
    %v3561 = vadd.f32 %v3559, %v3560
    %v3562 = vsel %vm3455, %v3518, 0.0
    %v3563 = vrot.slane %v3562, 4
    %v3564 = vadd.f32 %v3562, %v3563
    %v3565 = vrot.slane %v3564, 2
    %v3566 = vadd.f32 %v3564, %v3565
    %v3567 = vrot.slane %v3566, 1
    %v3568 = vadd.f32 %v3566, %v3567
    %v3569 = vsel %vm3455, %v3519, 0.0
    %v3570 = vrot.slane %v3569, 4
    %v3571 = vadd.f32 %v3569, %v3570
    %v3572 = vrot.slane %v3571, 2
    %v3573 = vadd.f32 %v3571, %v3572
    %v3574 = vrot.slane %v3573, 1
    %v3575 = vadd.f32 %v3573, %v3574
    %v3576 = vmul.f32 %v3462, 0.25
    %v3577 = vmul.f32 %v3469, 0.25
    %v3578 = vmul.f32 %v3476, 0.25
    %v3579 = vmul.f32 %v3483, 0.25
    %v3580 = vmul.f32 %v3490, 0.25
    %v3581 = vmul.f32 %v3497, 0.25
    %v3582 = vmul.f32 %v3504, 0.25
    %v3583 = vmul.f32 %v3511, 0.25
    %v3584 = vmul.f32 %v3526, 0.25
    %v3585 = vmul.f32 %v3533, 0.25
    %v3586 = vmul.f32 %v3540, 0.25
    %v3587 = vmul.f32 %v3547, 0.25
    %v3588 = vmul.f32 %v3554, 0.25
    %v3589 = vmul.f32 %v3561, 0.25
    %v3590 = vmul.f32 %v3568, 0.25
    %v3591 = vmul.f32 %v3575, 0.25
    %v3592 = vmul.f32 %v3576, %v3576
    %v3593 = vmul.f32 %v3577, %v3577
    %v3594 = vmul.f32 %v3578, %v3578
    %v3595 = vmul.f32 %v3579, %v3579
    %v3596 = vmul.f32 %v3580, %v3580
    %v3597 = vmul.f32 %v3581, %v3581
    %v3598 = vmul.f32 %v3582, %v3582
    %v3599 = vmul.f32 %v3583, %v3583
    %v3600 = vsub.f32 %v3584, %v3592
    %v3601 = vsub.f32 %v3585, %v3593
    %v3602 = vsub.f32 %v3586, %v3594
    %v3603 = vsub.f32 %v3587, %v3595
    %v3604 = vsub.f32 %v3588, %v3596
    %v3605 = vsub.f32 %v3589, %v3597
    %v3606 = vsub.f32 %v3590, %v3598
    %v3607 = vsub.f32 %v3591, %v3599
    %v3608 = vmax.f32 %v3600, 0.0
    %v3609 = vmax.f32 %v3601, 0.0
    %v3610 = vmax.f32 %v3602, 0.0
    %v3611 = vmax.f32 %v3603, 0.0
    %v3612 = vmax.f32 %v3604, 0.0
    %v3613 = vmax.f32 %v3605, 0.0
    %v3614 = vmax.f32 %v3606, 0.0
    %v3615 = vmax.f32 %v3607, 0.0
    %v3616 = vadd.f32 %v3608, 1e-05
    %v3617 = vadd.f32 %v3609, 1e-05
    %v3618 = vadd.f32 %v3610, 1e-05
    %v3619 = vadd.f32 %v3611, 1e-05
    %v3620 = vadd.f32 %v3612, 1e-05
    %v3621 = vadd.f32 %v3613, 1e-05
    %v3622 = vadd.f32 %v3614, 1e-05
    %v3623 = vadd.f32 %v3615, 1e-05
    %v3624 = vrsqrt.pop %v3616
    %v3625 = vrsqrt.pop %v3617
    %v3626 = vrsqrt.pop %v3618
    %v3627 = vrsqrt.pop %v3619
    %v3628 = vrsqrt.pop %v3620
    %v3629 = vrsqrt.pop %v3621
    %v3630 = vrsqrt.pop %v3622
    %v3631 = vrsqrt.pop %v3623
    %v3632 = vmul.f32 %v108, %v3624
    %v3633 = vmul.f32 %v109, %v3625
    %v3634 = vmul.f32 %v110, %v3626
    %v3635 = vmul.f32 %v111, %v3627
    %v3636 = vmul.f32 %v112, %v3628
    %v3637 = vmul.f32 %v113, %v3629
    %v3638 = vmul.f32 %v114, %v3630
    %v3639 = vmul.f32 %v115, %v3631
    %v3640 = vmul.f32 %v3576, %v3632
    %v3641 = vmul.f32 %v3577, %v3633
    %v3642 = vmul.f32 %v3578, %v3634
    %v3643 = vmul.f32 %v3579, %v3635
    %v3644 = vmul.f32 %v3580, %v3636
    %v3645 = vmul.f32 %v3581, %v3637
    %v3646 = vmul.f32 %v3582, %v3638
    %v3647 = vmul.f32 %v3583, %v3639
    %v3656 = vrot.slane %v3640, 7
    %v3657 = vrot.slane %v3641, 7
    %v3658 = vrot.slane %v3642, 7
    %v3659 = vrot.slane %v3643, 7
    %v3660 = vrot.slane %v3644, 7
    %v3661 = vrot.slane %v3645, 7
    %v3662 = vrot.slane %v3646, 7
    %v3663 = vrot.slane %v3647, 7
    %v3672 = vsub.f32 %v108, %v3656
    %v3673 = vsub.f32 %v109, %v3657
    %v3674 = vsub.f32 %v110, %v3658
    %v3675 = vsub.f32 %v111, %v3659
    %v3676 = vsub.f32 %v112, %v3660
    %v3677 = vsub.f32 %v113, %v3661
    %v3678 = vsub.f32 %v114, %v3662
    %v3679 = vsub.f32 %v115, %v3663
    %v3680 = vlaneseq
    %v3681 = vshrl.u32 %v3680, 7
    %v3682 = vsub.s32 2, %v3681
    %v3683 = vrot.slane %v3632, %v3682
    %v3684 = vlaneseq
    %v3685 = vshrl.u32 %v3684, 7
    %v3686 = vsub.s32 2, %v3685
    %v3687 = vrot.slane %v3633, %v3686
    %v3688 = vlaneseq
    %v3689 = vshrl.u32 %v3688, 7
    %v3690 = vsub.s32 2, %v3689
    %v3691 = vrot.slane %v3634, %v3690
    %v3692 = vlaneseq
    %v3693 = vshrl.u32 %v3692, 7
    %v3694 = vsub.s32 2, %v3693
    %v3695 = vrot.slane %v3635, %v3694
    %v3696 = vlaneseq
    %v3697 = vshrl.u32 %v3696, 7
    %v3698 = vsub.s32 2, %v3697
    %v3699 = vrot.slane %v3636, %v3698
    %v3700 = vlaneseq
    %v3701 = vshrl.u32 %v3700, 7
    %v3702 = vsub.s32 2, %v3701
    %v3703 = vrot.slane %v3637, %v3702
    %v3704 = vlaneseq
    %v3705 = vshrl.u32 %v3704, 7
    %v3706 = vsub.s32 2, %v3705
    %v3707 = vrot.slane %v3638, %v3706
    %v3708 = vlaneseq
    %v3709 = vshrl.u32 %v3708, 7
    %v3710 = vsub.s32 2, %v3709
    %v3711 = vrot.slane %v3639, %v3710
    %v3712 = vmul.f32 %v3203, %v3683
    %v3713 = vmul.f32 %v3205, %v3687
    %v3714 = vmul.f32 %v3285, %v3691
    %v3715 = vmul.f32 %v3287, %v3695
    %v3716 = vmul.f32 %v3367, %v3699
    %v3717 = vmul.f32 %v3369, %v3703
    %v3718 = vmul.f32 %v3449, %v3707
    %v3719 = vmul.f32 %v3451, %v3711
    %v3720 = vlaneseq
    %v3721 = vshrl.u32 %v3720, 7
    %v3722 = vsub.s32 3, %v3721
    %v3723 = vrot.slane %v3672, %v3722
    %v3724 = vlaneseq
    %v3725 = vshrl.u32 %v3724, 7
    %v3726 = vsub.s32 3, %v3725
    %v3727 = vrot.slane %v3673, %v3726
    %v3728 = vlaneseq
    %v3729 = vshrl.u32 %v3728, 7
    %v3730 = vsub.s32 3, %v3729
    %v3731 = vrot.slane %v3674, %v3730
    %v3732 = vlaneseq
    %v3733 = vshrl.u32 %v3732, 7
    %v3734 = vsub.s32 3, %v3733
    %v3735 = vrot.slane %v3675, %v3734
    %v3736 = vlaneseq
    %v3737 = vshrl.u32 %v3736, 7
    %v3738 = vsub.s32 3, %v3737
    %v3739 = vrot.slane %v3676, %v3738
    %v3740 = vlaneseq
    %v3741 = vshrl.u32 %v3740, 7
    %v3742 = vsub.s32 3, %v3741
    %v3743 = vrot.slane %v3677, %v3742
    %v3744 = vlaneseq
    %v3745 = vshrl.u32 %v3744, 7
    %v3746 = vsub.s32 3, %v3745
    %v3747 = vrot.slane %v3678, %v3746
    %v3748 = vlaneseq
    %v3749 = vshrl.u32 %v3748, 7
    %v3750 = vsub.s32 3, %v3749
    %v3751 = vrot.slane %v3679, %v3750
    %v3752 = vadd.f32 %v3712, %v3723
    %v3753 = vadd.f32 %v3713, %v3727
    %v3754 = vadd.f32 %v3714, %v3731
    %v3755 = vadd.f32 %v3715, %v3735
    %v3756 = vadd.f32 %v3716, %v3739
    %v3757 = vadd.f32 %v3717, %v3743
    %v3758 = vadd.f32 %v3718, %v3747
    %v3759 = vadd.f32 %v3719, %v3751
    %v3760 = vmax.f32 %v3752, 0.0
    %v3761 = vmax.f32 %v3753, 0.0
    %v3762 = vmax.f32 %v3754, 0.0
    %v3763 = vmax.f32 %v3755, 0.0
    %v3764 = vmax.f32 %v3756, 0.0
    %v3765 = vmax.f32 %v3757, 0.0
    %v3766 = vmax.f32 %v3758, 0.0
    %v3767 = vmax.f32 %v3759, 0.0
    %v3768 = vpack.c.bf16 %v3760, %v3760
    %v3769 = vpack.c.bf16 %v3761, %v3761
    %v3770 = vpack.c.bf16 %v3762, %v3762
    %v3771 = vpack.c.bf16 %v3763, %v3763
    %v3772 = vpack.c.bf16 %v3764, %v3764
    %v3773 = vpack.c.bf16 %v3765, %v3765
    %v3774 = vpack.c.bf16 %v3766, %v3766
    %v3775 = vpack.c.bf16 %v3767, %v3767
    %v3776 = vld [vmem:[#allocation8] sm:$0xff]
    %v3777 = vld [vmem:[#allocation8 + $0x8] sm:$0xff]
    %v3778 = vld [vmem:[#allocation8 + $0x10] sm:$0xff]
    %v3779 = vld [vmem:[#allocation8 + $0x18] sm:$0xff]
    %v3780 = vld [vmem:[#allocation8 + $0x20] sm:$0xff]
    %v3781 = vld [vmem:[#allocation8 + $0x28] sm:$0xff]
    %v3782 = vld [vmem:[#allocation8 + $0x30] sm:$0xff]
    %v3783 = vld [vmem:[#allocation8 + $0x38] sm:$0xff]
    %v3784 = vld [vmem:[#allocation8 + $0x40] sm:$0xff]
    %v3785 = vld [vmem:[#allocation8 + $0x48] sm:$0xff]
    %v3786 = vld [vmem:[#allocation8 + $0x50] sm:$0xff]
    %v3787 = vld [vmem:[#allocation8 + $0x58] sm:$0xff]
    %v3788 = vld [vmem:[#allocation8 + $0x60] sm:$0xff]
    %v3789 = vld [vmem:[#allocation8 + $0x68] sm:$0xff]
    %v3790 = vld [vmem:[#allocation8 + $0x70] sm:$0xff]
    %v3791 = vld [vmem:[#allocation8 + $0x78] sm:$0xff]
    %v3792 = vld [vmem:[#allocation8 + $0x80] sm:$0xff]
    %v3793 = vld [vmem:[#allocation8 + $0x88] sm:$0xff]
    %v3794 = vld [vmem:[#allocation8 + $0x90] sm:$0xff]
    %v3795 = vld [vmem:[#allocation8 + $0x98] sm:$0xff]
    %v3796 = vld [vmem:[#allocation8 + $0xa0] sm:$0xff]
    %v3797 = vld [vmem:[#allocation8 + $0xa8] sm:$0xff]
    %v3798 = vld [vmem:[#allocation8 + $0xb0] sm:$0xff]
    %v3799 = vld [vmem:[#allocation8 + $0xb8] sm:$0xff]
    %v3800 = vld [vmem:[#allocation8 + $0xc0] sm:$0xff]
    %v3801 = vld [vmem:[#allocation8 + $0xc8] sm:$0xff]
    %v3802 = vld [vmem:[#allocation8 + $0xd0] sm:$0xff]
    %v3803 = vld [vmem:[#allocation8 + $0xd8] sm:$0xff]
    %v3804 = vld [vmem:[#allocation8 + $0xe0] sm:$0xff]
    %v3805 = vld [vmem:[#allocation8 + $0xe8] sm:$0xff]
    %v3806 = vld [vmem:[#allocation8 + $0xf0] sm:$0xff]
    %v3807 = vld [vmem:[#allocation8 + $0xf8] sm:$0xff]
    %v3808 = vld [vmem:[#allocation8 + $0x100] sm:$0xff]
    %v3809 = vld [vmem:[#allocation8 + $0x108] sm:$0xff]
    %v3810 = vld [vmem:[#allocation8 + $0x110] sm:$0xff]
    %v3811 = vld [vmem:[#allocation8 + $0x118] sm:$0xff]
    %v3812 = vld [vmem:[#allocation8 + $0x120] sm:$0xff]
    %v3813 = vld [vmem:[#allocation8 + $0x128] sm:$0xff]
    %v3814 = vld [vmem:[#allocation8 + $0x130] sm:$0xff]
    %v3815 = vld [vmem:[#allocation8 + $0x138] sm:$0xff]
    %v3816 = vld [vmem:[#allocation8 + $0x140] sm:$0xff]
    %v3817 = vld [vmem:[#allocation8 + $0x148] sm:$0xff]
    %v3818 = vld [vmem:[#allocation8 + $0x150] sm:$0xff]
    %v3819 = vld [vmem:[#allocation8 + $0x158] sm:$0xff]
    %v3820 = vld [vmem:[#allocation8 + $0x160] sm:$0xff]
    %v3821 = vld [vmem:[#allocation8 + $0x168] sm:$0xff]
    %v3822 = vld [vmem:[#allocation8 + $0x170] sm:$0xff]
    %v3823 = vld [vmem:[#allocation8 + $0x178] sm:$0xff]
    %v3824 = vld [vmem:[#allocation8 + $0x180] sm:$0xff]
    %v3825 = vld [vmem:[#allocation8 + $0x188] sm:$0xff]
    %v3826 = vld [vmem:[#allocation8 + $0x190] sm:$0xff]
    %v3827 = vld [vmem:[#allocation8 + $0x198] sm:$0xff]
    %v3828 = vld [vmem:[#allocation8 + $0x1a0] sm:$0xff]
    %v3829 = vld [vmem:[#allocation8 + $0x1a8] sm:$0xff]
    %v3830 = vld [vmem:[#allocation8 + $0x1b0] sm:$0xff]
    %v3831 = vld [vmem:[#allocation8 + $0x1b8] sm:$0xff]
    %v3832 = vld [vmem:[#allocation8 + $0x1c0] sm:$0xff]
    %v3833 = vld [vmem:[#allocation8 + $0x1c8] sm:$0xff]
    %v3834 = vld [vmem:[#allocation8 + $0x1d0] sm:$0xff]
    %v3835 = vld [vmem:[#allocation8 + $0x1d8] sm:$0xff]
    %v3836 = vld [vmem:[#allocation8 + $0x1e0] sm:$0xff]
    %v3837 = vld [vmem:[#allocation8 + $0x1e8] sm:$0xff]
    %v3838 = vld [vmem:[#allocation8 + $0x1f0] sm:$0xff]
    %v3839 = vld [vmem:[#allocation8 + $0x1f8] sm:$0xff]
    %v3840 = vld [vmem:[#allocation8 + $0x200] sm:$0xff]
    %v3841 = vld [vmem:[#allocation8 + $0x208] sm:$0xff]
    %v3842 = vld [vmem:[#allocation8 + $0x210] sm:$0xff]
    %v3843 = vld [vmem:[#allocation8 + $0x218] sm:$0xff]
    %v3844 = vld [vmem:[#allocation8 + $0x220] sm:$0xff]
    %v3845 = vld [vmem:[#allocation8 + $0x228] sm:$0xff]
    %v3846 = vld [vmem:[#allocation8 + $0x230] sm:$0xff]
    %v3847 = vld [vmem:[#allocation8 + $0x238] sm:$0xff]
    %v3848 = vld [vmem:[#allocation8 + $0x240] sm:$0xff]
    %v3849 = vld [vmem:[#allocation8 + $0x248] sm:$0xff]
    %v3850 = vld [vmem:[#allocation8 + $0x250] sm:$0xff]
    %v3851 = vld [vmem:[#allocation8 + $0x258] sm:$0xff]
    %v3852 = vld [vmem:[#allocation8 + $0x260] sm:$0xff]
    %v3853 = vld [vmem:[#allocation8 + $0x268] sm:$0xff]
    %v3854 = vld [vmem:[#allocation8 + $0x270] sm:$0xff]
    %v3855 = vld [vmem:[#allocation8 + $0x278] sm:$0xff]
    %v3856 = vld [vmem:[#allocation8 + $0x280] sm:$0xff]
    %v3857 = vld [vmem:[#allocation8 + $0x288] sm:$0xff]
    %v3858 = vld [vmem:[#allocation8 + $0x290] sm:$0xff]
    %v3859 = vld [vmem:[#allocation8 + $0x298] sm:$0xff]
    %v3860 = vld [vmem:[#allocation8 + $0x2a0] sm:$0xff]
    %v3861 = vld [vmem:[#allocation8 + $0x2a8] sm:$0xff]
    %v3862 = vld [vmem:[#allocation8 + $0x2b0] sm:$0xff]
    %v3863 = vld [vmem:[#allocation8 + $0x2b8] sm:$0xff]
    %v3864 = vld [vmem:[#allocation8 + $0x2c0] sm:$0xff]
    %v3865 = vld [vmem:[#allocation8 + $0x2c8] sm:$0xff]
    %v3866 = vld [vmem:[#allocation8 + $0x2d0] sm:$0xff]
    %v3867 = vld [vmem:[#allocation8 + $0x2d8] sm:$0xff]
    %v3868 = vld [vmem:[#allocation8 + $0x2e0] sm:$0xff]
    %v3869 = vld [vmem:[#allocation8 + $0x2e8] sm:$0xff]
    %v3870 = vld [vmem:[#allocation8 + $0x2f0] sm:$0xff]
    %v3871 = vld [vmem:[#allocation8 + $0x2f8] sm:$0xff]
    %v3872 = vld [vmem:[#allocation8 + $0x300] sm:$0xff]
    %v3873 = vld [vmem:[#allocation8 + $0x308] sm:$0xff]
    %v3874 = vld [vmem:[#allocation8 + $0x310] sm:$0xff]
    %v3875 = vld [vmem:[#allocation8 + $0x318] sm:$0xff]
    %v3876 = vld [vmem:[#allocation8 + $0x320] sm:$0xff]
    %v3877 = vld [vmem:[#allocation8 + $0x328] sm:$0xff]
    %v3878 = vld [vmem:[#allocation8 + $0x330] sm:$0xff]
    %v3879 = vld [vmem:[#allocation8 + $0x338] sm:$0xff]
    %v3880 = vld [vmem:[#allocation8 + $0x340] sm:$0xff]
    %v3881 = vld [vmem:[#allocation8 + $0x348] sm:$0xff]
    %v3882 = vld [vmem:[#allocation8 + $0x350] sm:$0xff]
    %v3883 = vld [vmem:[#allocation8 + $0x358] sm:$0xff]
    %v3884 = vld [vmem:[#allocation8 + $0x360] sm:$0xff]
    %v3885 = vld [vmem:[#allocation8 + $0x368] sm:$0xff]
    %v3886 = vld [vmem:[#allocation8 + $0x370] sm:$0xff]
    %v3887 = vld [vmem:[#allocation8 + $0x378] sm:$0xff]
    %v3888 = vld [vmem:[#allocation8 + $0x380] sm:$0xff]
    %v3889 = vld [vmem:[#allocation8 + $0x388] sm:$0xff]
    %v3890 = vld [vmem:[#allocation8 + $0x390] sm:$0xff]
    %v3891 = vld [vmem:[#allocation8 + $0x398] sm:$0xff]
    %v3892 = vld [vmem:[#allocation8 + $0x3a0] sm:$0xff]
    %v3893 = vld [vmem:[#allocation8 + $0x3a8] sm:$0xff]
    %v3894 = vld [vmem:[#allocation8 + $0x3b0] sm:$0xff]
    %v3895 = vld [vmem:[#allocation8 + $0x3b8] sm:$0xff]
    %v3896 = vld [vmem:[#allocation8 + $0x3c0] sm:$0xff]
    %v3897 = vld [vmem:[#allocation8 + $0x3c8] sm:$0xff]
    %v3898 = vld [vmem:[#allocation8 + $0x3d0] sm:$0xff]
    %v3899 = vld [vmem:[#allocation8 + $0x3d8] sm:$0xff]
    %v3900 = vld [vmem:[#allocation8 + $0x3e0] sm:$0xff]
    %v3901 = vld [vmem:[#allocation8 + $0x3e8] sm:$0xff]
    %v3902 = vld [vmem:[#allocation8 + $0x3f0] sm:$0xff]
    %v3903 = vld [vmem:[#allocation8 + $0x3f8] sm:$0xff]
    %v3904 = vld [vmem:[#allocation8 + $0x400] sm:$0xff]
    %v3905 = vld [vmem:[#allocation8 + $0x408] sm:$0xff]
    %v3906 = vld [vmem:[#allocation8 + $0x410] sm:$0xff]
    %v3907 = vld [vmem:[#allocation8 + $0x418] sm:$0xff]
    %v3908 = vld [vmem:[#allocation8 + $0x420] sm:$0xff]
    %v3909 = vld [vmem:[#allocation8 + $0x428] sm:$0xff]
    %v3910 = vld [vmem:[#allocation8 + $0x430] sm:$0xff]
    %v3911 = vld [vmem:[#allocation8 + $0x438] sm:$0xff]
    %v3912 = vld [vmem:[#allocation8 + $0x440] sm:$0xff]
    %v3913 = vld [vmem:[#allocation8 + $0x448] sm:$0xff]
    %v3914 = vld [vmem:[#allocation8 + $0x450] sm:$0xff]
    %v3915 = vld [vmem:[#allocation8 + $0x458] sm:$0xff]
    %v3916 = vld [vmem:[#allocation8 + $0x460] sm:$0xff]
    %v3917 = vld [vmem:[#allocation8 + $0x468] sm:$0xff]
    %v3918 = vld [vmem:[#allocation8 + $0x470] sm:$0xff]
    %v3919 = vld [vmem:[#allocation8 + $0x478] sm:$0xff]
    %v3920 = vld [vmem:[#allocation8 + $0x480] sm:$0xff]
    %v3921 = vld [vmem:[#allocation8 + $0x488] sm:$0xff]
    %v3922 = vld [vmem:[#allocation8 + $0x490] sm:$0xff]
    %v3923 = vld [vmem:[#allocation8 + $0x498] sm:$0xff]
    %v3924 = vld [vmem:[#allocation8 + $0x4a0] sm:$0xff]
    %v3925 = vld [vmem:[#allocation8 + $0x4a8] sm:$0xff]
    %v3926 = vld [vmem:[#allocation8 + $0x4b0] sm:$0xff]
    %v3927 = vld [vmem:[#allocation8 + $0x4b8] sm:$0xff]
    %v3928 = vld [vmem:[#allocation8 + $0x4c0] sm:$0xff]
    %v3929 = vld [vmem:[#allocation8 + $0x4c8] sm:$0xff]
    %v3930 = vld [vmem:[#allocation8 + $0x4d0] sm:$0xff]
    %v3931 = vld [vmem:[#allocation8 + $0x4d8] sm:$0xff]
    %v3932 = vld [vmem:[#allocation8 + $0x4e0] sm:$0xff]
    %v3933 = vld [vmem:[#allocation8 + $0x4e8] sm:$0xff]
    %v3934 = vld [vmem:[#allocation8 + $0x4f0] sm:$0xff]
    %v3935 = vld [vmem:[#allocation8 + $0x4f8] sm:$0xff]
    %v3936 = vld [vmem:[#allocation8 + $0x500] sm:$0xff]
    %v3937 = vld [vmem:[#allocation8 + $0x508] sm:$0xff]
    %v3938 = vld [vmem:[#allocation8 + $0x510] sm:$0xff]
    %v3939 = vld [vmem:[#allocation8 + $0x518] sm:$0xff]
    %v3940 = vld [vmem:[#allocation8 + $0x520] sm:$0xff]
    %v3941 = vld [vmem:[#allocation8 + $0x528] sm:$0xff]
    %v3942 = vld [vmem:[#allocation8 + $0x530] sm:$0xff]
    %v3943 = vld [vmem:[#allocation8 + $0x538] sm:$0xff]
    %v3944 = vld [vmem:[#allocation8 + $0x540] sm:$0xff]
    %v3945 = vld [vmem:[#allocation8 + $0x548] sm:$0xff]
    %v3946 = vld [vmem:[#allocation8 + $0x550] sm:$0xff]
    %v3947 = vld [vmem:[#allocation8 + $0x558] sm:$0xff]
    %v3948 = vld [vmem:[#allocation8 + $0x560] sm:$0xff]
    %v3949 = vld [vmem:[#allocation8 + $0x568] sm:$0xff]
    %v3950 = vld [vmem:[#allocation8 + $0x570] sm:$0xff]
    %v3951 = vld [vmem:[#allocation8 + $0x578] sm:$0xff]
    %v3952 = vld [vmem:[#allocation8 + $0x580] sm:$0xff]
    %v3953 = vld [vmem:[#allocation8 + $0x588] sm:$0xff]
    %v3954 = vld [vmem:[#allocation8 + $0x590] sm:$0xff]
    %v3955 = vld [vmem:[#allocation8 + $0x598] sm:$0xff]
    %v3956 = vld [vmem:[#allocation8 + $0x5a0] sm:$0xff]
    %v3957 = vld [vmem:[#allocation8 + $0x5a8] sm:$0xff]
    %v3958 = vld [vmem:[#allocation8 + $0x5b0] sm:$0xff]
    %v3959 = vld [vmem:[#allocation8 + $0x5b8] sm:$0xff]
    %v3960 = vld [vmem:[#allocation8 + $0x5c0] sm:$0xff]
    %v3961 = vld [vmem:[#allocation8 + $0x5c8] sm:$0xff]
    %v3962 = vld [vmem:[#allocation8 + $0x5d0] sm:$0xff]
    %v3963 = vld [vmem:[#allocation8 + $0x5d8] sm:$0xff]
    %v3964 = vld [vmem:[#allocation8 + $0x5e0] sm:$0xff]
    %v3965 = vld [vmem:[#allocation8 + $0x5e8] sm:$0xff]
    %v3966 = vld [vmem:[#allocation8 + $0x5f0] sm:$0xff]
    %v3967 = vld [vmem:[#allocation8 + $0x5f8] sm:$0xff]
    %v3968 = vld [vmem:[#allocation8 + $0x600] sm:$0xff]
    %v3969 = vld [vmem:[#allocation8 + $0x608] sm:$0xff]
    %v3970 = vld [vmem:[#allocation8 + $0x610] sm:$0xff]
    %v3971 = vld [vmem:[#allocation8 + $0x618] sm:$0xff]
    %v3972 = vld [vmem:[#allocation8 + $0x620] sm:$0xff]
    %v3973 = vld [vmem:[#allocation8 + $0x628] sm:$0xff]
    %v3974 = vld [vmem:[#allocation8 + $0x630] sm:$0xff]
    %v3975 = vld [vmem:[#allocation8 + $0x638] sm:$0xff]
    %v3976 = vld [vmem:[#allocation8 + $0x640] sm:$0xff]
    %v3977 = vld [vmem:[#allocation8 + $0x648] sm:$0xff]
    %v3978 = vld [vmem:[#allocation8 + $0x650] sm:$0xff]
    %v3979 = vld [vmem:[#allocation8 + $0x658] sm:$0xff]
    %v3980 = vld [vmem:[#allocation8 + $0x660] sm:$0xff]
    %v3981 = vld [vmem:[#allocation8 + $0x668] sm:$0xff]
    %v3982 = vld [vmem:[#allocation8 + $0x670] sm:$0xff]
    %v3983 = vld [vmem:[#allocation8 + $0x678] sm:$0xff]
    %v3984 = vld [vmem:[#allocation8 + $0x680] sm:$0xff]
    %v3985 = vld [vmem:[#allocation8 + $0x688] sm:$0xff]
    %v3986 = vld [vmem:[#allocation8 + $0x690] sm:$0xff]
    %v3987 = vld [vmem:[#allocation8 + $0x698] sm:$0xff]
    %v3988 = vld [vmem:[#allocation8 + $0x6a0] sm:$0xff]
    %v3989 = vld [vmem:[#allocation8 + $0x6a8] sm:$0xff]
    %v3990 = vld [vmem:[#allocation8 + $0x6b0] sm:$0xff]
    %v3991 = vld [vmem:[#allocation8 + $0x6b8] sm:$0xff]
    %v3992 = vld [vmem:[#allocation8 + $0x6c0] sm:$0xff]
    %v3993 = vld [vmem:[#allocation8 + $0x6c8] sm:$0xff]
    %v3994 = vld [vmem:[#allocation8 + $0x6d0] sm:$0xff]
    %v3995 = vld [vmem:[#allocation8 + $0x6d8] sm:$0xff]
    %v3996 = vld [vmem:[#allocation8 + $0x6e0] sm:$0xff]
    %v3997 = vld [vmem:[#allocation8 + $0x6e8] sm:$0xff]
    %v3998 = vld [vmem:[#allocation8 + $0x6f0] sm:$0xff]
    %v3999 = vld [vmem:[#allocation8 + $0x6f8] sm:$0xff]
    %v4000 = vld [vmem:[#allocation8 + $0x700] sm:$0xff]
    %v4001 = vld [vmem:[#allocation8 + $0x708] sm:$0xff]
    %v4002 = vld [vmem:[#allocation8 + $0x710] sm:$0xff]
    %v4003 = vld [vmem:[#allocation8 + $0x718] sm:$0xff]
    %v4004 = vld [vmem:[#allocation8 + $0x720] sm:$0xff]
    %v4005 = vld [vmem:[#allocation8 + $0x728] sm:$0xff]
    %v4006 = vld [vmem:[#allocation8 + $0x730] sm:$0xff]
    %v4007 = vld [vmem:[#allocation8 + $0x738] sm:$0xff]
    %v4008 = vld [vmem:[#allocation8 + $0x740] sm:$0xff]
    %v4009 = vld [vmem:[#allocation8 + $0x748] sm:$0xff]
    %v4010 = vld [vmem:[#allocation8 + $0x750] sm:$0xff]
    %v4011 = vld [vmem:[#allocation8 + $0x758] sm:$0xff]
    %v4012 = vld [vmem:[#allocation8 + $0x760] sm:$0xff]
    %v4013 = vld [vmem:[#allocation8 + $0x768] sm:$0xff]
    %v4014 = vld [vmem:[#allocation8 + $0x770] sm:$0xff]
    %v4015 = vld [vmem:[#allocation8 + $0x778] sm:$0xff]
    %v4016 = vld [vmem:[#allocation8 + $0x780] sm:$0xff]
    %v4017 = vld [vmem:[#allocation8 + $0x788] sm:$0xff]
    %v4018 = vld [vmem:[#allocation8 + $0x790] sm:$0xff]
    %v4019 = vld [vmem:[#allocation8 + $0x798] sm:$0xff]
    %v4020 = vld [vmem:[#allocation8 + $0x7a0] sm:$0xff]
    %v4021 = vld [vmem:[#allocation8 + $0x7a8] sm:$0xff]
    %v4022 = vld [vmem:[#allocation8 + $0x7b0] sm:$0xff]
    %v4023 = vld [vmem:[#allocation8 + $0x7b8] sm:$0xff]
    %v4024 = vld [vmem:[#allocation8 + $0x7c0] sm:$0xff]
    %v4025 = vld [vmem:[#allocation8 + $0x7c8] sm:$0xff]
    %v4026 = vld [vmem:[#allocation8 + $0x7d0] sm:$0xff]
    %v4027 = vld [vmem:[#allocation8 + $0x7d8] sm:$0xff]
    %v4028 = vld [vmem:[#allocation8 + $0x7e0] sm:$0xff]
    %v4029 = vld [vmem:[#allocation8 + $0x7e8] sm:$0xff]
    %v4030 = vld [vmem:[#allocation8 + $0x7f0] sm:$0xff]
    %v4031 = vld [vmem:[#allocation8 + $0x7f8] sm:$0xff]
    %v4032 = vlaneseq
    %v4033 = vshrl.u32 %v4032, 7
    %v4034 = vsub.s32 4, %v4033
    %v4035 = vrot.slane %v108, %v4034
    %v4036 = vlaneseq
    %v4037 = vshrl.u32 %v4036, 7
    %v4038 = vsub.s32 4, %v4037
    %v4039 = vrot.slane %v109, %v4038
    %v4040 = vlaneseq
    %v4041 = vshrl.u32 %v4040, 7
    %v4042 = vsub.s32 4, %v4041
    %v4043 = vrot.slane %v110, %v4042
    %v4044 = vlaneseq
    %v4045 = vshrl.u32 %v4044, 7
    %v4046 = vsub.s32 4, %v4045
    %v4047 = vrot.slane %v111, %v4046
    %v4304 = vunpack.c.l.b16 %v3776
    %v4305 = vunpack.c.h.b16 %v3776
    %v4306 = vunpack.c.l.b16 %v3777
    %v4307 = vunpack.c.h.b16 %v3777
    %v4308 = vunpack.c.l.b16 %v3778
    %v4309 = vunpack.c.h.b16 %v3778
    %v4310 = vunpack.c.l.b16 %v3779
    %v4311 = vunpack.c.h.b16 %v3779
    %v4312 = vunpack.c.l.b16 %v3780
    %v4313 = vunpack.c.h.b16 %v3780
    %v4314 = vunpack.c.l.b16 %v3781
    %v4315 = vunpack.c.h.b16 %v3781
    %v4316 = vunpack.c.l.b16 %v3782
    %v4317 = vunpack.c.h.b16 %v3782
    %v4318 = vunpack.c.l.b16 %v3783
    %v4319 = vunpack.c.h.b16 %v3783
    %v4320 = vunpack.c.l.b16 %v3784
    %v4321 = vunpack.c.h.b16 %v3784
    %v4322 = vunpack.c.l.b16 %v3785
    %v4323 = vunpack.c.h.b16 %v3785
    %v4324 = vunpack.c.l.b16 %v3786
    %v4325 = vunpack.c.h.b16 %v3786
    %v4326 = vunpack.c.l.b16 %v3787
    %v4327 = vunpack.c.h.b16 %v3787
    %v4328 = vunpack.c.l.b16 %v3788
    %v4329 = vunpack.c.h.b16 %v3788
    %v4330 = vunpack.c.l.b16 %v3789
    %v4331 = vunpack.c.h.b16 %v3789
    %v4332 = vunpack.c.l.b16 %v3790
    %v4333 = vunpack.c.h.b16 %v3790
    %v4334 = vunpack.c.l.b16 %v3791
    %v4335 = vunpack.c.h.b16 %v3791
    %v4336 = vunpack.c.l.b16 %v3792
    %v4337 = vunpack.c.h.b16 %v3792
    %v4338 = vunpack.c.l.b16 %v3793
    %v4339 = vunpack.c.h.b16 %v3793
    %v4340 = vunpack.c.l.b16 %v3794
    %v4341 = vunpack.c.h.b16 %v3794
    %v4342 = vunpack.c.l.b16 %v3795
    %v4343 = vunpack.c.h.b16 %v3795
    %v4344 = vunpack.c.l.b16 %v3796
    %v4345 = vunpack.c.h.b16 %v3796
    %v4346 = vunpack.c.l.b16 %v3797
    %v4347 = vunpack.c.h.b16 %v3797
    %v4348 = vunpack.c.l.b16 %v3798
    %v4349 = vunpack.c.h.b16 %v3798
    %v4350 = vunpack.c.l.b16 %v3799
    %v4351 = vunpack.c.h.b16 %v3799
    %v4352 = vunpack.c.l.b16 %v3800
    %v4353 = vunpack.c.h.b16 %v3800
    %v4354 = vunpack.c.l.b16 %v3801
    %v4355 = vunpack.c.h.b16 %v3801
    %v4356 = vunpack.c.l.b16 %v3802
    %v4357 = vunpack.c.h.b16 %v3802
    %v4358 = vunpack.c.l.b16 %v3803
    %v4359 = vunpack.c.h.b16 %v3803
    %v4360 = vunpack.c.l.b16 %v3804
    %v4361 = vunpack.c.h.b16 %v3804
    %v4362 = vunpack.c.l.b16 %v3805
    %v4363 = vunpack.c.h.b16 %v3805
    %v4364 = vunpack.c.l.b16 %v3806
    %v4365 = vunpack.c.h.b16 %v3806
    %v4366 = vunpack.c.l.b16 %v3807
    %v4367 = vunpack.c.h.b16 %v3807
    %v4368 = vunpack.c.l.b16 %v3808
    %v4369 = vunpack.c.h.b16 %v3808
    %v4370 = vunpack.c.l.b16 %v3809
    %v4371 = vunpack.c.h.b16 %v3809
    %v4372 = vunpack.c.l.b16 %v3810
    %v4373 = vunpack.c.h.b16 %v3810
    %v4374 = vunpack.c.l.b16 %v3811
    %v4375 = vunpack.c.h.b16 %v3811
    %v4376 = vunpack.c.l.b16 %v3812
    %v4377 = vunpack.c.h.b16 %v3812
    %v4378 = vunpack.c.l.b16 %v3813
    %v4379 = vunpack.c.h.b16 %v3813
    %v4380 = vunpack.c.l.b16 %v3814
    %v4381 = vunpack.c.h.b16 %v3814
    %v4382 = vunpack.c.l.b16 %v3815
    %v4383 = vunpack.c.h.b16 %v3815
    %v4384 = vunpack.c.l.b16 %v3816
    %v4385 = vunpack.c.h.b16 %v3816
    %v4386 = vunpack.c.l.b16 %v3817
    %v4387 = vunpack.c.h.b16 %v3817
    %v4388 = vunpack.c.l.b16 %v3818
    %v4389 = vunpack.c.h.b16 %v3818
    %v4390 = vunpack.c.l.b16 %v3819
    %v4391 = vunpack.c.h.b16 %v3819
    %v4392 = vunpack.c.l.b16 %v3820
    %v4393 = vunpack.c.h.b16 %v3820
    %v4394 = vunpack.c.l.b16 %v3821
    %v4395 = vunpack.c.h.b16 %v3821
    %v4396 = vunpack.c.l.b16 %v3822
    %v4397 = vunpack.c.h.b16 %v3822
    %v4398 = vunpack.c.l.b16 %v3823
    %v4399 = vunpack.c.h.b16 %v3823
    %v4400 = vunpack.c.l.b16 %v3824
    %v4401 = vunpack.c.h.b16 %v3824
    %v4402 = vunpack.c.l.b16 %v3825
    %v4403 = vunpack.c.h.b16 %v3825
    %v4404 = vunpack.c.l.b16 %v3826
    %v4405 = vunpack.c.h.b16 %v3826
    %v4406 = vunpack.c.l.b16 %v3827
    %v4407 = vunpack.c.h.b16 %v3827
    %v4408 = vunpack.c.l.b16 %v3828
    %v4409 = vunpack.c.h.b16 %v3828
    %v4410 = vunpack.c.l.b16 %v3829
    %v4411 = vunpack.c.h.b16 %v3829
    %v4412 = vunpack.c.l.b16 %v3830
    %v4413 = vunpack.c.h.b16 %v3830
    %v4414 = vunpack.c.l.b16 %v3831
    %v4415 = vunpack.c.h.b16 %v3831
    %v4416 = vunpack.c.l.b16 %v3832
    %v4417 = vunpack.c.h.b16 %v3832
    %v4418 = vunpack.c.l.b16 %v3833
    %v4419 = vunpack.c.h.b16 %v3833
    %v4420 = vunpack.c.l.b16 %v3834
    %v4421 = vunpack.c.h.b16 %v3834
    %v4422 = vunpack.c.l.b16 %v3835
    %v4423 = vunpack.c.h.b16 %v3835
    %v4424 = vunpack.c.l.b16 %v3836
    %v4425 = vunpack.c.h.b16 %v3836
    %v4426 = vunpack.c.l.b16 %v3837
    %v4427 = vunpack.c.h.b16 %v3837
    %v4428 = vunpack.c.l.b16 %v3838
    %v4429 = vunpack.c.h.b16 %v3838
    %v4430 = vunpack.c.l.b16 %v3839
    %v4431 = vunpack.c.h.b16 %v3839
    %v4432 = vunpack.c.l.b16 %v3840
    %v4433 = vunpack.c.h.b16 %v3840
    %v4434 = vunpack.c.l.b16 %v3841
    %v4435 = vunpack.c.h.b16 %v3841
    %v4436 = vunpack.c.l.b16 %v3842
    %v4437 = vunpack.c.h.b16 %v3842
    %v4438 = vunpack.c.l.b16 %v3843
    %v4439 = vunpack.c.h.b16 %v3843
    %v4440 = vunpack.c.l.b16 %v3844
    %v4441 = vunpack.c.h.b16 %v3844
    %v4442 = vunpack.c.l.b16 %v3845
    %v4443 = vunpack.c.h.b16 %v3845
    %v4444 = vunpack.c.l.b16 %v3846
    %v4445 = vunpack.c.h.b16 %v3846
    %v4446 = vunpack.c.l.b16 %v3847
    %v4447 = vunpack.c.h.b16 %v3847
    %v4448 = vunpack.c.l.b16 %v3848
    %v4449 = vunpack.c.h.b16 %v3848
    %v4450 = vunpack.c.l.b16 %v3849
    %v4451 = vunpack.c.h.b16 %v3849
    %v4452 = vunpack.c.l.b16 %v3850
    %v4453 = vunpack.c.h.b16 %v3850
    %v4454 = vunpack.c.l.b16 %v3851
    %v4455 = vunpack.c.h.b16 %v3851
    %v4456 = vunpack.c.l.b16 %v3852
    %v4457 = vunpack.c.h.b16 %v3852
    %v4458 = vunpack.c.l.b16 %v3853
    %v4459 = vunpack.c.h.b16 %v3853
    %v4460 = vunpack.c.l.b16 %v3854
    %v4461 = vunpack.c.h.b16 %v3854
    %v4462 = vunpack.c.l.b16 %v3855
    %v4463 = vunpack.c.h.b16 %v3855
    %v4464 = vunpack.c.l.b16 %v3856
    %v4465 = vunpack.c.h.b16 %v3856
    %v4466 = vunpack.c.l.b16 %v3857
    %v4467 = vunpack.c.h.b16 %v3857
    %v4468 = vunpack.c.l.b16 %v3858
    %v4469 = vunpack.c.h.b16 %v3858
    %v4470 = vunpack.c.l.b16 %v3859
    %v4471 = vunpack.c.h.b16 %v3859
    %v4472 = vunpack.c.l.b16 %v3860
    %v4473 = vunpack.c.h.b16 %v3860
    %v4474 = vunpack.c.l.b16 %v3861
    %v4475 = vunpack.c.h.b16 %v3861
    %v4476 = vunpack.c.l.b16 %v3862
    %v4477 = vunpack.c.h.b16 %v3862
    %v4478 = vunpack.c.l.b16 %v3863
    %v4479 = vunpack.c.h.b16 %v3863
    %v4480 = vunpack.c.l.b16 %v3864
    %v4481 = vunpack.c.h.b16 %v3864
    %v4482 = vunpack.c.l.b16 %v3865
    %v4483 = vunpack.c.h.b16 %v3865
    %v4484 = vunpack.c.l.b16 %v3866
    %v4485 = vunpack.c.h.b16 %v3866
    %v4486 = vunpack.c.l.b16 %v3867
    %v4487 = vunpack.c.h.b16 %v3867
    %v4488 = vunpack.c.l.b16 %v3868
    %v4489 = vunpack.c.h.b16 %v3868
    %v4490 = vunpack.c.l.b16 %v3869
    %v4491 = vunpack.c.h.b16 %v3869
    %v4492 = vunpack.c.l.b16 %v3870
    %v4493 = vunpack.c.h.b16 %v3870
    %v4494 = vunpack.c.l.b16 %v3871
    %v4495 = vunpack.c.h.b16 %v3871
    %v4496 = vunpack.c.l.b16 %v3872
    %v4497 = vunpack.c.h.b16 %v3872
    %v4498 = vunpack.c.l.b16 %v3873
    %v4499 = vunpack.c.h.b16 %v3873
    %v4500 = vunpack.c.l.b16 %v3874
    %v4501 = vunpack.c.h.b16 %v3874
    %v4502 = vunpack.c.l.b16 %v3875
    %v4503 = vunpack.c.h.b16 %v3875
    %v4504 = vunpack.c.l.b16 %v3876
    %v4505 = vunpack.c.h.b16 %v3876
    %v4506 = vunpack.c.l.b16 %v3877
    %v4507 = vunpack.c.h.b16 %v3877
    %v4508 = vunpack.c.l.b16 %v3878
    %v4509 = vunpack.c.h.b16 %v3878
    %v4510 = vunpack.c.l.b16 %v3879
    %v4511 = vunpack.c.h.b16 %v3879
    %v4512 = vunpack.c.l.b16 %v3880
    %v4513 = vunpack.c.h.b16 %v3880
    %v4514 = vunpack.c.l.b16 %v3881
    %v4515 = vunpack.c.h.b16 %v3881
    %v4516 = vunpack.c.l.b16 %v3882
    %v4517 = vunpack.c.h.b16 %v3882
    %v4518 = vunpack.c.l.b16 %v3883
    %v4519 = vunpack.c.h.b16 %v3883
    %v4520 = vunpack.c.l.b16 %v3884
    %v4521 = vunpack.c.h.b16 %v3884
    %v4522 = vunpack.c.l.b16 %v3885
    %v4523 = vunpack.c.h.b16 %v3885
    %v4524 = vunpack.c.l.b16 %v3886
    %v4525 = vunpack.c.h.b16 %v3886
    %v4526 = vunpack.c.l.b16 %v3887
    %v4527 = vunpack.c.h.b16 %v3887
    %v4528 = vunpack.c.l.b16 %v3888
    %v4529 = vunpack.c.h.b16 %v3888
    %v4530 = vunpack.c.l.b16 %v3889
    %v4531 = vunpack.c.h.b16 %v3889
    %v4532 = vunpack.c.l.b16 %v3890
    %v4533 = vunpack.c.h.b16 %v3890
    %v4534 = vunpack.c.l.b16 %v3891
    %v4535 = vunpack.c.h.b16 %v3891
    %v4536 = vunpack.c.l.b16 %v3892
    %v4537 = vunpack.c.h.b16 %v3892
    %v4538 = vunpack.c.l.b16 %v3893
    %v4539 = vunpack.c.h.b16 %v3893
    %v4540 = vunpack.c.l.b16 %v3894
    %v4541 = vunpack.c.h.b16 %v3894
    %v4542 = vunpack.c.l.b16 %v3895
    %v4543 = vunpack.c.h.b16 %v3895
    %v4544 = vunpack.c.l.b16 %v3896
    %v4545 = vunpack.c.h.b16 %v3896
    %v4546 = vunpack.c.l.b16 %v3897
    %v4547 = vunpack.c.h.b16 %v3897
    %v4548 = vunpack.c.l.b16 %v3898
    %v4549 = vunpack.c.h.b16 %v3898
    %v4550 = vunpack.c.l.b16 %v3899
    %v4551 = vunpack.c.h.b16 %v3899
    %v4552 = vunpack.c.l.b16 %v3900
    %v4553 = vunpack.c.h.b16 %v3900
    %v4554 = vunpack.c.l.b16 %v3901
    %v4555 = vunpack.c.h.b16 %v3901
    %v4556 = vunpack.c.l.b16 %v3902
    %v4557 = vunpack.c.h.b16 %v3902
    %v4558 = vunpack.c.l.b16 %v3903
    %v4559 = vunpack.c.h.b16 %v3903
    %v4560 = vunpack.c.l.b16 %v3904
    %v4561 = vunpack.c.h.b16 %v3904
    %v4562 = vunpack.c.l.b16 %v3905
    %v4563 = vunpack.c.h.b16 %v3905
    %v4564 = vunpack.c.l.b16 %v3906
    %v4565 = vunpack.c.h.b16 %v3906
    %v4566 = vunpack.c.l.b16 %v3907
    %v4567 = vunpack.c.h.b16 %v3907
    %v4568 = vunpack.c.l.b16 %v3908
    %v4569 = vunpack.c.h.b16 %v3908
    %v4570 = vunpack.c.l.b16 %v3909
    %v4571 = vunpack.c.h.b16 %v3909
    %v4572 = vunpack.c.l.b16 %v3910
    %v4573 = vunpack.c.h.b16 %v3910
    %v4574 = vunpack.c.l.b16 %v3911
    %v4575 = vunpack.c.h.b16 %v3911
    %v4576 = vunpack.c.l.b16 %v3912
    %v4577 = vunpack.c.h.b16 %v3912
    %v4578 = vunpack.c.l.b16 %v3913
    %v4579 = vunpack.c.h.b16 %v3913
    %v4580 = vunpack.c.l.b16 %v3914
    %v4581 = vunpack.c.h.b16 %v3914
    %v4582 = vunpack.c.l.b16 %v3915
    %v4583 = vunpack.c.h.b16 %v3915
    %v4584 = vunpack.c.l.b16 %v3916
    %v4585 = vunpack.c.h.b16 %v3916
    %v4586 = vunpack.c.l.b16 %v3917
    %v4587 = vunpack.c.h.b16 %v3917
    %v4588 = vunpack.c.l.b16 %v3918
    %v4589 = vunpack.c.h.b16 %v3918
    %v4590 = vunpack.c.l.b16 %v3919
    %v4591 = vunpack.c.h.b16 %v3919
    %v4592 = vunpack.c.l.b16 %v3920
    %v4593 = vunpack.c.h.b16 %v3920
    %v4594 = vunpack.c.l.b16 %v3921
    %v4595 = vunpack.c.h.b16 %v3921
    %v4596 = vunpack.c.l.b16 %v3922
    %v4597 = vunpack.c.h.b16 %v3922
    %v4598 = vunpack.c.l.b16 %v3923
    %v4599 = vunpack.c.h.b16 %v3923
    %v4600 = vunpack.c.l.b16 %v3924
    %v4601 = vunpack.c.h.b16 %v3924
    %v4602 = vunpack.c.l.b16 %v3925
    %v4603 = vunpack.c.h.b16 %v3925
    %v4604 = vunpack.c.l.b16 %v3926
    %v4605 = vunpack.c.h.b16 %v3926
    %v4606 = vunpack.c.l.b16 %v3927
    %v4607 = vunpack.c.h.b16 %v3927
    %v4608 = vunpack.c.l.b16 %v3928
    %v4609 = vunpack.c.h.b16 %v3928
    %v4610 = vunpack.c.l.b16 %v3929
    %v4611 = vunpack.c.h.b16 %v3929
    %v4612 = vunpack.c.l.b16 %v3930
    %v4613 = vunpack.c.h.b16 %v3930
    %v4614 = vunpack.c.l.b16 %v3931
    %v4615 = vunpack.c.h.b16 %v3931
    %v4616 = vunpack.c.l.b16 %v3932
    %v4617 = vunpack.c.h.b16 %v3932
    %v4618 = vunpack.c.l.b16 %v3933
    %v4619 = vunpack.c.h.b16 %v3933
    %v4620 = vunpack.c.l.b16 %v3934
    %v4621 = vunpack.c.h.b16 %v3934
    %v4622 = vunpack.c.l.b16 %v3935
    %v4623 = vunpack.c.h.b16 %v3935
    %v4624 = vunpack.c.l.b16 %v3936
    %v4625 = vunpack.c.h.b16 %v3936
    %v4626 = vunpack.c.l.b16 %v3937
    %v4627 = vunpack.c.h.b16 %v3937
    %v4628 = vunpack.c.l.b16 %v3938
    %v4629 = vunpack.c.h.b16 %v3938
    %v4630 = vunpack.c.l.b16 %v3939
    %v4631 = vunpack.c.h.b16 %v3939
    %v4632 = vunpack.c.l.b16 %v3940
    %v4633 = vunpack.c.h.b16 %v3940
    %v4634 = vunpack.c.l.b16 %v3941
    %v4635 = vunpack.c.h.b16 %v3941
    %v4636 = vunpack.c.l.b16 %v3942
    %v4637 = vunpack.c.h.b16 %v3942
    %v4638 = vunpack.c.l.b16 %v3943
    %v4639 = vunpack.c.h.b16 %v3943
    %v4640 = vunpack.c.l.b16 %v3944
    %v4641 = vunpack.c.h.b16 %v3944
    %v4642 = vunpack.c.l.b16 %v3945
    %v4643 = vunpack.c.h.b16 %v3945
    %v4644 = vunpack.c.l.b16 %v3946
    %v4645 = vunpack.c.h.b16 %v3946
    %v4646 = vunpack.c.l.b16 %v3947
    %v4647 = vunpack.c.h.b16 %v3947
    %v4648 = vunpack.c.l.b16 %v3948
    %v4649 = vunpack.c.h.b16 %v3948
    %v4650 = vunpack.c.l.b16 %v3949
    %v4651 = vunpack.c.h.b16 %v3949
    %v4652 = vunpack.c.l.b16 %v3950
    %v4653 = vunpack.c.h.b16 %v3950
    %v4654 = vunpack.c.l.b16 %v3951
    %v4655 = vunpack.c.h.b16 %v3951
    %v4656 = vunpack.c.l.b16 %v3952
    %v4657 = vunpack.c.h.b16 %v3952
    %v4658 = vunpack.c.l.b16 %v3953
    %v4659 = vunpack.c.h.b16 %v3953
    %v4660 = vunpack.c.l.b16 %v3954
    %v4661 = vunpack.c.h.b16 %v3954
    %v4662 = vunpack.c.l.b16 %v3955
    %v4663 = vunpack.c.h.b16 %v3955
    %v4664 = vunpack.c.l.b16 %v3956
    %v4665 = vunpack.c.h.b16 %v3956
    %v4666 = vunpack.c.l.b16 %v3957
    %v4667 = vunpack.c.h.b16 %v3957
    %v4668 = vunpack.c.l.b16 %v3958
    %v4669 = vunpack.c.h.b16 %v3958
    %v4670 = vunpack.c.l.b16 %v3959
    %v4671 = vunpack.c.h.b16 %v3959
    %v4672 = vunpack.c.l.b16 %v3960
    %v4673 = vunpack.c.h.b16 %v3960
    %v4674 = vunpack.c.l.b16 %v3961
    %v4675 = vunpack.c.h.b16 %v3961
    %v4676 = vunpack.c.l.b16 %v3962
    %v4677 = vunpack.c.h.b16 %v3962
    %v4678 = vunpack.c.l.b16 %v3963
    %v4679 = vunpack.c.h.b16 %v3963
    %v4680 = vunpack.c.l.b16 %v3964
    %v4681 = vunpack.c.h.b16 %v3964
    %v4682 = vunpack.c.l.b16 %v3965
    %v4683 = vunpack.c.h.b16 %v3965
    %v4684 = vunpack.c.l.b16 %v3966
    %v4685 = vunpack.c.h.b16 %v3966
    %v4686 = vunpack.c.l.b16 %v3967
    %v4687 = vunpack.c.h.b16 %v3967
    %v4688 = vunpack.c.l.b16 %v3968
    %v4689 = vunpack.c.h.b16 %v3968
    %v4690 = vunpack.c.l.b16 %v3969
    %v4691 = vunpack.c.h.b16 %v3969
    %v4692 = vunpack.c.l.b16 %v3970
    %v4693 = vunpack.c.h.b16 %v3970
    %v4694 = vunpack.c.l.b16 %v3971
    %v4695 = vunpack.c.h.b16 %v3971
    %v4696 = vunpack.c.l.b16 %v3972
    %v4697 = vunpack.c.h.b16 %v3972
    %v4698 = vunpack.c.l.b16 %v3973
    %v4699 = vunpack.c.h.b16 %v3973
    %v4700 = vunpack.c.l.b16 %v3974
    %v4701 = vunpack.c.h.b16 %v3974
    %v4702 = vunpack.c.l.b16 %v3975
    %v4703 = vunpack.c.h.b16 %v3975
    %v4704 = vunpack.c.l.b16 %v3976
    %v4705 = vunpack.c.h.b16 %v3976
    %v4706 = vunpack.c.l.b16 %v3977
    %v4707 = vunpack.c.h.b16 %v3977
    %v4708 = vunpack.c.l.b16 %v3978
    %v4709 = vunpack.c.h.b16 %v3978
    %v4710 = vunpack.c.l.b16 %v3979
    %v4711 = vunpack.c.h.b16 %v3979
    %v4712 = vunpack.c.l.b16 %v3980
    %v4713 = vunpack.c.h.b16 %v3980
    %v4714 = vunpack.c.l.b16 %v3981
    %v4715 = vunpack.c.h.b16 %v3981
    %v4716 = vunpack.c.l.b16 %v3982
    %v4717 = vunpack.c.h.b16 %v3982
    %v4718 = vunpack.c.l.b16 %v3983
    %v4719 = vunpack.c.h.b16 %v3983
    %v4720 = vunpack.c.l.b16 %v3984
    %v4721 = vunpack.c.h.b16 %v3984
    %v4722 = vunpack.c.l.b16 %v3985
    %v4723 = vunpack.c.h.b16 %v3985
    %v4724 = vunpack.c.l.b16 %v3986
    %v4725 = vunpack.c.h.b16 %v3986
    %v4726 = vunpack.c.l.b16 %v3987
    %v4727 = vunpack.c.h.b16 %v3987
    %v4728 = vunpack.c.l.b16 %v3988
    %v4729 = vunpack.c.h.b16 %v3988
    %v4730 = vunpack.c.l.b16 %v3989
    %v4731 = vunpack.c.h.b16 %v3989
    %v4732 = vunpack.c.l.b16 %v3990
    %v4733 = vunpack.c.h.b16 %v3990
    %v4734 = vunpack.c.l.b16 %v3991
    %v4735 = vunpack.c.h.b16 %v3991
    %v4736 = vunpack.c.l.b16 %v3992
    %v4737 = vunpack.c.h.b16 %v3992
    %v4738 = vunpack.c.l.b16 %v3993
    %v4739 = vunpack.c.h.b16 %v3993
    %v4740 = vunpack.c.l.b16 %v3994
    %v4741 = vunpack.c.h.b16 %v3994
    %v4742 = vunpack.c.l.b16 %v3995
    %v4743 = vunpack.c.h.b16 %v3995
    %v4744 = vunpack.c.l.b16 %v3996
    %v4745 = vunpack.c.h.b16 %v3996
    %v4746 = vunpack.c.l.b16 %v3997
    %v4747 = vunpack.c.h.b16 %v3997
    %v4748 = vunpack.c.l.b16 %v3998
    %v4749 = vunpack.c.h.b16 %v3998
    %v4750 = vunpack.c.l.b16 %v3999
    %v4751 = vunpack.c.h.b16 %v3999
    %v4752 = vunpack.c.l.b16 %v4000
    %v4753 = vunpack.c.h.b16 %v4000
    %v4754 = vunpack.c.l.b16 %v4001
    %v4755 = vunpack.c.h.b16 %v4001
    %v4756 = vunpack.c.l.b16 %v4002
    %v4757 = vunpack.c.h.b16 %v4002
    %v4758 = vunpack.c.l.b16 %v4003
    %v4759 = vunpack.c.h.b16 %v4003
    %v4760 = vunpack.c.l.b16 %v4004
    %v4761 = vunpack.c.h.b16 %v4004
    %v4762 = vunpack.c.l.b16 %v4005
    %v4763 = vunpack.c.h.b16 %v4005
    %v4764 = vunpack.c.l.b16 %v4006
    %v4765 = vunpack.c.h.b16 %v4006
    %v4766 = vunpack.c.l.b16 %v4007
    %v4767 = vunpack.c.h.b16 %v4007
    %v4768 = vunpack.c.l.b16 %v4008
    %v4769 = vunpack.c.h.b16 %v4008
    %v4770 = vunpack.c.l.b16 %v4009
    %v4771 = vunpack.c.h.b16 %v4009
    %v4772 = vunpack.c.l.b16 %v4010
    %v4773 = vunpack.c.h.b16 %v4010
    %v4774 = vunpack.c.l.b16 %v4011
    %v4775 = vunpack.c.h.b16 %v4011
    %v4776 = vunpack.c.l.b16 %v4012
    %v4777 = vunpack.c.h.b16 %v4012
    %v4778 = vunpack.c.l.b16 %v4013
    %v4779 = vunpack.c.h.b16 %v4013
    %v4780 = vunpack.c.l.b16 %v4014
    %v4781 = vunpack.c.h.b16 %v4014
    %v4782 = vunpack.c.l.b16 %v4015
    %v4783 = vunpack.c.h.b16 %v4015
    %v4784 = vunpack.c.l.b16 %v4016
    %v4785 = vunpack.c.h.b16 %v4016
    %v4786 = vunpack.c.l.b16 %v4017
    %v4787 = vunpack.c.h.b16 %v4017
    %v4788 = vunpack.c.l.b16 %v4018
    %v4789 = vunpack.c.h.b16 %v4018
    %v4790 = vunpack.c.l.b16 %v4019
    %v4791 = vunpack.c.h.b16 %v4019
    %v4792 = vunpack.c.l.b16 %v4020
    %v4793 = vunpack.c.h.b16 %v4020
    %v4794 = vunpack.c.l.b16 %v4021
    %v4795 = vunpack.c.h.b16 %v4021
    %v4796 = vunpack.c.l.b16 %v4022
    %v4797 = vunpack.c.h.b16 %v4022
    %v4798 = vunpack.c.l.b16 %v4023
    %v4799 = vunpack.c.h.b16 %v4023
    %v4800 = vunpack.c.l.b16 %v4024
    %v4801 = vunpack.c.h.b16 %v4024
    %v4802 = vunpack.c.l.b16 %v4025
    %v4803 = vunpack.c.h.b16 %v4025
    %v4804 = vunpack.c.l.b16 %v4026
    %v4805 = vunpack.c.h.b16 %v4026
    %v4806 = vunpack.c.l.b16 %v4027
    %v4807 = vunpack.c.h.b16 %v4027
    %v4808 = vunpack.c.l.b16 %v4028
    %v4809 = vunpack.c.h.b16 %v4028
    %v4810 = vunpack.c.l.b16 %v4029
    %v4811 = vunpack.c.h.b16 %v4029
    %v4812 = vunpack.c.l.b16 %v4030
    %v4813 = vunpack.c.h.b16 %v4030
    %v4814 = vunpack.c.l.b16 %v4031
    %v4815 = vunpack.c.h.b16 %v4031
    %v4816 = vpack.c.b16 %v4308, %v4304
    %v4817 = vpack.c.b16 %v4309, %v4305
    %v4818 = vpack.c.b16 %v4310, %v4306
    %v4819 = vpack.c.b16 %v4311, %v4307
    %v4820 = vpack.c.b16 %v4316, %v4312
    %v4821 = vpack.c.b16 %v4317, %v4313
    %v4822 = vpack.c.b16 %v4318, %v4314
    %v4823 = vpack.c.b16 %v4319, %v4315
    %v4824 = vpack.c.b16 %v4324, %v4320
    %v4825 = vpack.c.b16 %v4325, %v4321
    %v4826 = vpack.c.b16 %v4326, %v4322
    %v4827 = vpack.c.b16 %v4327, %v4323
    %v4828 = vpack.c.b16 %v4332, %v4328
    %v4829 = vpack.c.b16 %v4333, %v4329
    %v4830 = vpack.c.b16 %v4334, %v4330
    %v4831 = vpack.c.b16 %v4335, %v4331
    %v4832 = vpack.c.b16 %v4340, %v4336
    %v4833 = vpack.c.b16 %v4341, %v4337
    %v4834 = vpack.c.b16 %v4342, %v4338
    %v4835 = vpack.c.b16 %v4343, %v4339
    %v4836 = vpack.c.b16 %v4348, %v4344
    %v4837 = vpack.c.b16 %v4349, %v4345
    %v4838 = vpack.c.b16 %v4350, %v4346
    %v4839 = vpack.c.b16 %v4351, %v4347
    %v4840 = vpack.c.b16 %v4356, %v4352
    %v4841 = vpack.c.b16 %v4357, %v4353
    %v4842 = vpack.c.b16 %v4358, %v4354
    %v4843 = vpack.c.b16 %v4359, %v4355
    %v4844 = vpack.c.b16 %v4364, %v4360
    %v4845 = vpack.c.b16 %v4365, %v4361
    %v4846 = vpack.c.b16 %v4366, %v4362
    %v4847 = vpack.c.b16 %v4367, %v4363
    %v4848 = vpack.c.b16 %v4372, %v4368
    %v4849 = vpack.c.b16 %v4373, %v4369
    %v4850 = vpack.c.b16 %v4374, %v4370
    %v4851 = vpack.c.b16 %v4375, %v4371
    %v4852 = vpack.c.b16 %v4380, %v4376
    %v4853 = vpack.c.b16 %v4381, %v4377
    %v4854 = vpack.c.b16 %v4382, %v4378
    %v4855 = vpack.c.b16 %v4383, %v4379
    %v4856 = vpack.c.b16 %v4388, %v4384
    %v4857 = vpack.c.b16 %v4389, %v4385
    %v4858 = vpack.c.b16 %v4390, %v4386
    %v4859 = vpack.c.b16 %v4391, %v4387
    %v4860 = vpack.c.b16 %v4396, %v4392
    %v4861 = vpack.c.b16 %v4397, %v4393
    %v4862 = vpack.c.b16 %v4398, %v4394
    %v4863 = vpack.c.b16 %v4399, %v4395
    %v4864 = vpack.c.b16 %v4404, %v4400
    %v4865 = vpack.c.b16 %v4405, %v4401
    %v4866 = vpack.c.b16 %v4406, %v4402
    %v4867 = vpack.c.b16 %v4407, %v4403
    %v4868 = vpack.c.b16 %v4412, %v4408
    %v4869 = vpack.c.b16 %v4413, %v4409
    %v4870 = vpack.c.b16 %v4414, %v4410
    %v4871 = vpack.c.b16 %v4415, %v4411
    %v4872 = vpack.c.b16 %v4420, %v4416
    %v4873 = vpack.c.b16 %v4421, %v4417
    %v4874 = vpack.c.b16 %v4422, %v4418
    %v4875 = vpack.c.b16 %v4423, %v4419
    %v4876 = vpack.c.b16 %v4428, %v4424
    %v4877 = vpack.c.b16 %v4429, %v4425
    %v4878 = vpack.c.b16 %v4430, %v4426
    %v4879 = vpack.c.b16 %v4431, %v4427
    %v4880 = vpack.c.b16 %v4436, %v4432
    %v4881 = vpack.c.b16 %v4437, %v4433
    %v4882 = vpack.c.b16 %v4438, %v4434
    %v4883 = vpack.c.b16 %v4439, %v4435
    %v4884 = vpack.c.b16 %v4444, %v4440
    %v4885 = vpack.c.b16 %v4445, %v4441
    %v4886 = vpack.c.b16 %v4446, %v4442
    %v4887 = vpack.c.b16 %v4447, %v4443
    %v4888 = vpack.c.b16 %v4452, %v4448
    %v4889 = vpack.c.b16 %v4453, %v4449
    %v4890 = vpack.c.b16 %v4454, %v4450
    %v4891 = vpack.c.b16 %v4455, %v4451
    %v4892 = vpack.c.b16 %v4460, %v4456
    %v4893 = vpack.c.b16 %v4461, %v4457
    %v4894 = vpack.c.b16 %v4462, %v4458
    %v4895 = vpack.c.b16 %v4463, %v4459
    %v4896 = vpack.c.b16 %v4468, %v4464
    %v4897 = vpack.c.b16 %v4469, %v4465
    %v4898 = vpack.c.b16 %v4470, %v4466
    %v4899 = vpack.c.b16 %v4471, %v4467
    %v4900 = vpack.c.b16 %v4476, %v4472
    %v4901 = vpack.c.b16 %v4477, %v4473
    %v4902 = vpack.c.b16 %v4478, %v4474
    %v4903 = vpack.c.b16 %v4479, %v4475
    %v4904 = vpack.c.b16 %v4484, %v4480
    %v4905 = vpack.c.b16 %v4485, %v4481
    %v4906 = vpack.c.b16 %v4486, %v4482
    %v4907 = vpack.c.b16 %v4487, %v4483
    %v4908 = vpack.c.b16 %v4492, %v4488
    %v4909 = vpack.c.b16 %v4493, %v4489
    %v4910 = vpack.c.b16 %v4494, %v4490
    %v4911 = vpack.c.b16 %v4495, %v4491
    %v4912 = vpack.c.b16 %v4500, %v4496
    %v4913 = vpack.c.b16 %v4501, %v4497
    %v4914 = vpack.c.b16 %v4502, %v4498
    %v4915 = vpack.c.b16 %v4503, %v4499
    %v4916 = vpack.c.b16 %v4508, %v4504
    %v4917 = vpack.c.b16 %v4509, %v4505
    %v4918 = vpack.c.b16 %v4510, %v4506
    %v4919 = vpack.c.b16 %v4511, %v4507
    %v4920 = vpack.c.b16 %v4516, %v4512
    %v4921 = vpack.c.b16 %v4517, %v4513
    %v4922 = vpack.c.b16 %v4518, %v4514
    %v4923 = vpack.c.b16 %v4519, %v4515
    %v4924 = vpack.c.b16 %v4524, %v4520
    %v4925 = vpack.c.b16 %v4525, %v4521
    %v4926 = vpack.c.b16 %v4526, %v4522
    %v4927 = vpack.c.b16 %v4527, %v4523
    %v4928 = vpack.c.b16 %v4532, %v4528
    %v4929 = vpack.c.b16 %v4533, %v4529
    %v4930 = vpack.c.b16 %v4534, %v4530
    %v4931 = vpack.c.b16 %v4535, %v4531
    %v4932 = vpack.c.b16 %v4540, %v4536
    %v4933 = vpack.c.b16 %v4541, %v4537
    %v4934 = vpack.c.b16 %v4542, %v4538
    %v4935 = vpack.c.b16 %v4543, %v4539
    %v4936 = vpack.c.b16 %v4548, %v4544
    %v4937 = vpack.c.b16 %v4549, %v4545
    %v4938 = vpack.c.b16 %v4550, %v4546
    %v4939 = vpack.c.b16 %v4551, %v4547
    %v4940 = vpack.c.b16 %v4556, %v4552
    %v4941 = vpack.c.b16 %v4557, %v4553
    %v4942 = vpack.c.b16 %v4558, %v4554
    %v4943 = vpack.c.b16 %v4559, %v4555
    %v4944 = vpack.c.b16 %v4564, %v4560
    %v4945 = vpack.c.b16 %v4565, %v4561
    %v4946 = vpack.c.b16 %v4566, %v4562
    %v4947 = vpack.c.b16 %v4567, %v4563
    %v4948 = vpack.c.b16 %v4572, %v4568
    %v4949 = vpack.c.b16 %v4573, %v4569
    %v4950 = vpack.c.b16 %v4574, %v4570
    %v4951 = vpack.c.b16 %v4575, %v4571
    %v4952 = vpack.c.b16 %v4580, %v4576
    %v4953 = vpack.c.b16 %v4581, %v4577
    %v4954 = vpack.c.b16 %v4582, %v4578
    %v4955 = vpack.c.b16 %v4583, %v4579
    %v4956 = vpack.c.b16 %v4588, %v4584
    %v4957 = vpack.c.b16 %v4589, %v4585
    %v4958 = vpack.c.b16 %v4590, %v4586
    %v4959 = vpack.c.b16 %v4591, %v4587
    %v4960 = vpack.c.b16 %v4596, %v4592
    %v4961 = vpack.c.b16 %v4597, %v4593
    %v4962 = vpack.c.b16 %v4598, %v4594
    %v4963 = vpack.c.b16 %v4599, %v4595
    %v4964 = vpack.c.b16 %v4604, %v4600
    %v4965 = vpack.c.b16 %v4605, %v4601
    %v4966 = vpack.c.b16 %v4606, %v4602
    %v4967 = vpack.c.b16 %v4607, %v4603
    %v4968 = vpack.c.b16 %v4612, %v4608
    %v4969 = vpack.c.b16 %v4613, %v4609
    %v4970 = vpack.c.b16 %v4614, %v4610
    %v4971 = vpack.c.b16 %v4615, %v4611
    %v4972 = vpack.c.b16 %v4620, %v4616
    %v4973 = vpack.c.b16 %v4621, %v4617
    %v4974 = vpack.c.b16 %v4622, %v4618
    %v4975 = vpack.c.b16 %v4623, %v4619
    %v4976 = vpack.c.b16 %v4628, %v4624
    %v4977 = vpack.c.b16 %v4629, %v4625
    %v4978 = vpack.c.b16 %v4630, %v4626
    %v4979 = vpack.c.b16 %v4631, %v4627
    %v4980 = vpack.c.b16 %v4636, %v4632
    %v4981 = vpack.c.b16 %v4637, %v4633
    %v4982 = vpack.c.b16 %v4638, %v4634
    %v4983 = vpack.c.b16 %v4639, %v4635
    %v4984 = vpack.c.b16 %v4644, %v4640
    %v4985 = vpack.c.b16 %v4645, %v4641
    %v4986 = vpack.c.b16 %v4646, %v4642
    %v4987 = vpack.c.b16 %v4647, %v4643
    %v4988 = vpack.c.b16 %v4652, %v4648
    %v4989 = vpack.c.b16 %v4653, %v4649
    %v4990 = vpack.c.b16 %v4654, %v4650
    %v4991 = vpack.c.b16 %v4655, %v4651
    %v4992 = vpack.c.b16 %v4660, %v4656
    %v4993 = vpack.c.b16 %v4661, %v4657
    %v4994 = vpack.c.b16 %v4662, %v4658
    %v4995 = vpack.c.b16 %v4663, %v4659
    %v4996 = vpack.c.b16 %v4668, %v4664
    %v4997 = vpack.c.b16 %v4669, %v4665
    %v4998 = vpack.c.b16 %v4670, %v4666
    %v4999 = vpack.c.b16 %v4671, %v4667
    %v5000 = vpack.c.b16 %v4676, %v4672
    %v5001 = vpack.c.b16 %v4677, %v4673
    %v5002 = vpack.c.b16 %v4678, %v4674
    %v5003 = vpack.c.b16 %v4679, %v4675
    %v5004 = vpack.c.b16 %v4684, %v4680
    %v5005 = vpack.c.b16 %v4685, %v4681
    %v5006 = vpack.c.b16 %v4686, %v4682
    %v5007 = vpack.c.b16 %v4687, %v4683
    %v5008 = vpack.c.b16 %v4692, %v4688
    %v5009 = vpack.c.b16 %v4693, %v4689
    %v5010 = vpack.c.b16 %v4694, %v4690
    %v5011 = vpack.c.b16 %v4695, %v4691
    %v5012 = vpack.c.b16 %v4700, %v4696
    %v5013 = vpack.c.b16 %v4701, %v4697
    %v5014 = vpack.c.b16 %v4702, %v4698
    %v5015 = vpack.c.b16 %v4703, %v4699
    %v5016 = vpack.c.b16 %v4708, %v4704
    %v5017 = vpack.c.b16 %v4709, %v4705
    %v5018 = vpack.c.b16 %v4710, %v4706
    %v5019 = vpack.c.b16 %v4711, %v4707
    %v5020 = vpack.c.b16 %v4716, %v4712
    %v5021 = vpack.c.b16 %v4717, %v4713
    %v5022 = vpack.c.b16 %v4718, %v4714
    %v5023 = vpack.c.b16 %v4719, %v4715
    %v5024 = vpack.c.b16 %v4724, %v4720
    %v5025 = vpack.c.b16 %v4725, %v4721
    %v5026 = vpack.c.b16 %v4726, %v4722
    %v5027 = vpack.c.b16 %v4727, %v4723
    %v5028 = vpack.c.b16 %v4732, %v4728
    %v5029 = vpack.c.b16 %v4733, %v4729
    %v5030 = vpack.c.b16 %v4734, %v4730
    %v5031 = vpack.c.b16 %v4735, %v4731
    %v5032 = vpack.c.b16 %v4740, %v4736
    %v5033 = vpack.c.b16 %v4741, %v4737
    %v5034 = vpack.c.b16 %v4742, %v4738
    %v5035 = vpack.c.b16 %v4743, %v4739
    %v5036 = vpack.c.b16 %v4748, %v4744
    %v5037 = vpack.c.b16 %v4749, %v4745
    %v5038 = vpack.c.b16 %v4750, %v4746
    %v5039 = vpack.c.b16 %v4751, %v4747
    %v5040 = vpack.c.b16 %v4756, %v4752
    %v5041 = vpack.c.b16 %v4757, %v4753
    %v5042 = vpack.c.b16 %v4758, %v4754
    %v5043 = vpack.c.b16 %v4759, %v4755
    %v5044 = vpack.c.b16 %v4764, %v4760
    %v5045 = vpack.c.b16 %v4765, %v4761
    %v5046 = vpack.c.b16 %v4766, %v4762
    %v5047 = vpack.c.b16 %v4767, %v4763
    %v5048 = vpack.c.b16 %v4772, %v4768
    %v5049 = vpack.c.b16 %v4773, %v4769
    %v5050 = vpack.c.b16 %v4774, %v4770
    %v5051 = vpack.c.b16 %v4775, %v4771
    %v5052 = vpack.c.b16 %v4780, %v4776
    %v5053 = vpack.c.b16 %v4781, %v4777
    %v5054 = vpack.c.b16 %v4782, %v4778
    %v5055 = vpack.c.b16 %v4783, %v4779
    %v5056 = vpack.c.b16 %v4788, %v4784
    %v5057 = vpack.c.b16 %v4789, %v4785
    %v5058 = vpack.c.b16 %v4790, %v4786
    %v5059 = vpack.c.b16 %v4791, %v4787
    %v5060 = vpack.c.b16 %v4796, %v4792
    %v5061 = vpack.c.b16 %v4797, %v4793
    %v5062 = vpack.c.b16 %v4798, %v4794
    %v5063 = vpack.c.b16 %v4799, %v4795
    %v5064 = vpack.c.b16 %v4804, %v4800
    %v5065 = vpack.c.b16 %v4805, %v4801
    %v5066 = vpack.c.b16 %v4806, %v4802
    %v5067 = vpack.c.b16 %v4807, %v4803
    %v5068 = vpack.c.b16 %v4812, %v4808
    %v5069 = vpack.c.b16 %v4813, %v4809
    %v5070 = vpack.c.b16 %v4814, %v4810
    %v5071 = vpack.c.b16 %v4815, %v4811
    %5328 = vmatprep.subr.bf16.mxu0 %v4817
    %5329 = vmatpush1.bf16.msra.mxu0 %v4816
    %5330 = vmatprep.subr.bf16.mxu0 %v4821
    %5331 = vmatpush1.bf16.msra.mxu0 %v4820
    %5332 = vmatprep.subr.bf16.mxu0 %v4825
    %5333 = vmatpush1.bf16.msra.mxu0 %v4824
    %5334 = vmatprep.subr.bf16.mxu0 %v4829
    %5335 = vmatpush1.bf16.msra.mxu0 %v4828
    %5336 = vmatprep.subr.bf16.mxu0 %v4833
    %5337 = vmatpush1.bf16.msra.mxu0 %v4832
    %5338 = vmatprep.subr.bf16.mxu0 %v4837
    %5339 = vmatpush1.bf16.msra.mxu0 %v4836
    %5340 = vmatprep.subr.bf16.mxu0 %v4841
    %5341 = vmatpush1.bf16.msra.mxu0 %v4840
    %5342 = vmatprep.subr.bf16.mxu0 %v4845
    %5343 = vmatpush1.bf16.msra.mxu0 %v4844
    %5344 = vmatprep.subr.bf16.mxu0 %v4849
    %5345 = vmatpush1.bf16.msra.mxu0 %v4848
    %5346 = vmatprep.subr.bf16.mxu0 %v4853
    %5347 = vmatpush1.bf16.msra.mxu0 %v4852
    %5348 = vmatprep.subr.bf16.mxu0 %v4857
    %5349 = vmatpush1.bf16.msra.mxu0 %v4856
    %5350 = vmatprep.subr.bf16.mxu0 %v4861
    %5351 = vmatpush1.bf16.msra.mxu0 %v4860
    %5352 = vmatprep.subr.bf16.mxu0 %v4865
    %5353 = vmatpush1.bf16.msra.mxu0 %v4864
    %5354 = vmatprep.subr.bf16.mxu0 %v4869
    %5355 = vmatpush1.bf16.msra.mxu0 %v4868
    %5356 = vmatprep.subr.bf16.mxu0 %v4873
    %5357 = vmatpush1.bf16.msra.mxu0 %v4872
    %5358 = vmatprep.subr.bf16.mxu0 %v4877
    %5359 = vmatpush1.bf16.msra.mxu0 %v4876
    %5360 = vmatprep.mubr.bf16.mxu0 %v3769
    %5361 = vmatmul.mubr.bf16.gmra.mrb[0].mxu0 %v3768
    %v5362 = vpop.f32.mrb[0].mxu0
    %v5363 = vadd.f32 %v4035, %v5362
    %v5364 = vpop.f32.mrb[0].mxu0
    %v5365 = vadd.f32 %v4039, %v5364
    %v5366 = vpop.f32.mrb[0].mxu0
    %v5367 = vpop.f32.mrb[0].mxu0
    %5368 = vdwg.mxu0
    %5369 = vmatprep.subr.bf16.mxu0 %v4881
    %5370 = vmatpush1.bf16.msra.mxu0 %v4880
    %5371 = vmatprep.subr.bf16.mxu0 %v4885
    %5372 = vmatpush1.bf16.msra.mxu0 %v4884
    %5373 = vmatprep.subr.bf16.mxu0 %v4889
    %5374 = vmatpush1.bf16.msra.mxu0 %v4888
    %5375 = vmatprep.subr.bf16.mxu0 %v4893
    %5376 = vmatpush1.bf16.msra.mxu0 %v4892
    %5377 = vmatprep.subr.bf16.mxu0 %v4897
    %5378 = vmatpush1.bf16.msra.mxu0 %v4896
    %5379 = vmatprep.subr.bf16.mxu0 %v4901
    %5380 = vmatpush1.bf16.msra.mxu0 %v4900
    %5381 = vmatprep.subr.bf16.mxu0 %v4905
    %5382 = vmatpush1.bf16.msra.mxu0 %v4904
    %5383 = vmatprep.subr.bf16.mxu0 %v4909
    %5384 = vmatpush1.bf16.msra.mxu0 %v4908
    %5385 = vmatprep.subr.bf16.mxu0 %v4913
    %5386 = vmatpush1.bf16.msra.mxu0 %v4912
    %5387 = vmatprep.subr.bf16.mxu0 %v4917
    %5388 = vmatpush1.bf16.msra.mxu0 %v4916
    %5389 = vmatprep.subr.bf16.mxu0 %v4921
    %5390 = vmatpush1.bf16.msra.mxu0 %v4920
    %5391 = vmatprep.subr.bf16.mxu0 %v4925
    %5392 = vmatpush1.bf16.msra.mxu0 %v4924
    %5393 = vmatprep.subr.bf16.mxu0 %v4929
    %5394 = vmatpush1.bf16.msra.mxu0 %v4928
    %5395 = vmatprep.subr.bf16.mxu0 %v4933
    %5396 = vmatpush1.bf16.msra.mxu0 %v4932
    %5397 = vmatprep.subr.bf16.mxu0 %v4937
    %5398 = vmatpush1.bf16.msra.mxu0 %v4936
    %5399 = vmatprep.subr.bf16.mxu0 %v4941
    %5400 = vmatpush1.bf16.msra.mxu0 %v4940
    %5401 = vmatprep.mubr.bf16.mxu0 %v3771
    %5402 = vmatmul.mubr.bf16.gmra.mrb[0].mxu0 %v3770
    %v5403 = vpop.f32.mrb[0].mxu0
    %v5404 = vadd.f32 %v5363, %v5403
    %v5405 = vpop.f32.mrb[0].mxu0
    %v5406 = vadd.f32 %v5365, %v5405
    %v5407 = vpop.f32.mrb[0].mxu0
    %v5408 = vpop.f32.mrb[0].mxu0
    %5409 = vdwg.mxu0
    %5410 = vmatprep.subr.bf16.mxu0 %v4945
    %5411 = vmatpush1.bf16.msra.mxu0 %v4944
    %5412 = vmatprep.subr.bf16.mxu0 %v4949
    %5413 = vmatpush1.bf16.msra.mxu0 %v4948
    %5414 = vmatprep.subr.bf16.mxu0 %v4953
    %5415 = vmatpush1.bf16.msra.mxu0 %v4952
    %5416 = vmatprep.subr.bf16.mxu0 %v4957
    %5417 = vmatpush1.bf16.msra.mxu0 %v4956
    %5418 = vmatprep.subr.bf16.mxu0 %v4961
    %5419 = vmatpush1.bf16.msra.mxu0 %v4960
    %5420 = vmatprep.subr.bf16.mxu0 %v4965
    %5421 = vmatpush1.bf16.msra.mxu0 %v4964
    %5422 = vmatprep.subr.bf16.mxu0 %v4969
    %5423 = vmatpush1.bf16.msra.mxu0 %v4968
    %5424 = vmatprep.subr.bf16.mxu0 %v4973
    %5425 = vmatpush1.bf16.msra.mxu0 %v4972
    %5426 = vmatprep.subr.bf16.mxu0 %v4977
    %5427 = vmatpush1.bf16.msra.mxu0 %v4976
    %5428 = vmatprep.subr.bf16.mxu0 %v4981
    %5429 = vmatpush1.bf16.msra.mxu0 %v4980
    %5430 = vmatprep.subr.bf16.mxu0 %v4985
    %5431 = vmatpush1.bf16.msra.mxu0 %v4984
    %5432 = vmatprep.subr.bf16.mxu0 %v4989
    %5433 = vmatpush1.bf16.msra.mxu0 %v4988
    %5434 = vmatprep.subr.bf16.mxu0 %v4993
    %5435 = vmatpush1.bf16.msra.mxu0 %v4992
    %5436 = vmatprep.subr.bf16.mxu0 %v4997
    %5437 = vmatpush1.bf16.msra.mxu0 %v4996
    %5438 = vmatprep.subr.bf16.mxu0 %v5001
    %5439 = vmatpush1.bf16.msra.mxu0 %v5000
    %5440 = vmatprep.subr.bf16.mxu0 %v5005
    %5441 = vmatpush1.bf16.msra.mxu0 %v5004
    %5442 = vmatprep.mubr.bf16.mxu0 %v3773
    %5443 = vmatmul.mubr.bf16.gmra.mrb[0].mxu0 %v3772
    %v5444 = vpop.f32.mrb[0].mxu0
    %v5445 = vadd.f32 %v5404, %v5444
    %v5446 = vpop.f32.mrb[0].mxu0
    %v5447 = vadd.f32 %v5406, %v5446
    %v5448 = vpop.f32.mrb[0].mxu0
    %v5449 = vpop.f32.mrb[0].mxu0
    %5450 = vdwg.mxu0
    %5451 = vmatprep.subr.bf16.mxu0 %v5009
    %5452 = vmatpush1.bf16.msra.mxu0 %v5008
    %5453 = vmatprep.subr.bf16.mxu0 %v5013
    %5454 = vmatpush1.bf16.msra.mxu0 %v5012
    %5455 = vmatprep.subr.bf16.mxu0 %v5017
    %5456 = vmatpush1.bf16.msra.mxu0 %v5016
    %5457 = vmatprep.subr.bf16.mxu0 %v5021
    %5458 = vmatpush1.bf16.msra.mxu0 %v5020
    %5459 = vmatprep.subr.bf16.mxu0 %v5025
    %5460 = vmatpush1.bf16.msra.mxu0 %v5024
    %5461 = vmatprep.subr.bf16.mxu0 %v5029
    %5462 = vmatpush1.bf16.msra.mxu0 %v5028
    %5463 = vmatprep.subr.bf16.mxu0 %v5033
    %5464 = vmatpush1.bf16.msra.mxu0 %v5032
    %5465 = vmatprep.subr.bf16.mxu0 %v5037
    %5466 = vmatpush1.bf16.msra.mxu0 %v5036
    %5467 = vmatprep.subr.bf16.mxu0 %v5041
    %5468 = vmatpush1.bf16.msra.mxu0 %v5040
    %5469 = vmatprep.subr.bf16.mxu0 %v5045
    %5470 = vmatpush1.bf16.msra.mxu0 %v5044
    %5471 = vmatprep.subr.bf16.mxu0 %v5049
    %5472 = vmatpush1.bf16.msra.mxu0 %v5048
    %5473 = vmatprep.subr.bf16.mxu0 %v5053
    %5474 = vmatpush1.bf16.msra.mxu0 %v5052
    %5475 = vmatprep.subr.bf16.mxu0 %v5057
    %5476 = vmatpush1.bf16.msra.mxu0 %v5056
    %5477 = vmatprep.subr.bf16.mxu0 %v5061
    %5478 = vmatpush1.bf16.msra.mxu0 %v5060
    %5479 = vmatprep.subr.bf16.mxu0 %v5065
    %5480 = vmatpush1.bf16.msra.mxu0 %v5064
    %5481 = vmatprep.subr.bf16.mxu0 %v5069
    %5482 = vmatpush1.bf16.msra.mxu0 %v5068
    %5483 = vmatprep.mubr.bf16.mxu0 %v3775
    %5484 = vmatmul.mubr.bf16.gmra.mrb[0].mxu0 %v3774
    %v5485 = vpop.f32.mrb[0].mxu0
    %v5486 = vadd.f32 %v5445, %v5485
    %v5487 = vpop.f32.mrb[0].mxu0
    %v5488 = vadd.f32 %v5447, %v5487
    %v5489 = vpop.f32.mrb[0].mxu0
    %v5490 = vpop.f32.mrb[0].mxu0
    %5491 = vdwg.mxu0
    %5492 = vmatprep.subr.bf16.mxu0 %v4819
    %5493 = vmatpush1.bf16.msra.mxu0 %v4818
    %5494 = vmatprep.subr.bf16.mxu0 %v4823
    %5495 = vmatpush1.bf16.msra.mxu0 %v4822
    %5496 = vmatprep.subr.bf16.mxu0 %v4827
    %5497 = vmatpush1.bf16.msra.mxu0 %v4826
    %5498 = vmatprep.subr.bf16.mxu0 %v4831
    %5499 = vmatpush1.bf16.msra.mxu0 %v4830
    %5500 = vmatprep.subr.bf16.mxu0 %v4835
    %5501 = vmatpush1.bf16.msra.mxu0 %v4834
    %5502 = vmatprep.subr.bf16.mxu0 %v4839
    %5503 = vmatpush1.bf16.msra.mxu0 %v4838
    %5504 = vmatprep.subr.bf16.mxu0 %v4843
    %5505 = vmatpush1.bf16.msra.mxu0 %v4842
    %5506 = vmatprep.subr.bf16.mxu0 %v4847
    %5507 = vmatpush1.bf16.msra.mxu0 %v4846
    %5508 = vmatprep.subr.bf16.mxu0 %v4851
    %5509 = vmatpush1.bf16.msra.mxu0 %v4850
    %5510 = vmatprep.subr.bf16.mxu0 %v4855
    %5511 = vmatpush1.bf16.msra.mxu0 %v4854
    %5512 = vmatprep.subr.bf16.mxu0 %v4859
    %5513 = vmatpush1.bf16.msra.mxu0 %v4858
    %5514 = vmatprep.subr.bf16.mxu0 %v4863
    %5515 = vmatpush1.bf16.msra.mxu0 %v4862
    %5516 = vmatprep.subr.bf16.mxu0 %v4867
    %5517 = vmatpush1.bf16.msra.mxu0 %v4866
    %5518 = vmatprep.subr.bf16.mxu0 %v4871
    %5519 = vmatpush1.bf16.msra.mxu0 %v4870
    %5520 = vmatprep.subr.bf16.mxu0 %v4875
    %5521 = vmatpush1.bf16.msra.mxu0 %v4874
    %5522 = vmatprep.subr.bf16.mxu0 %v4879
    %5523 = vmatpush1.bf16.msra.mxu0 %v4878
    %5524 = vmatprep.mubr.bf16.mxu0 %v3769
    %5525 = vmatmul.mubr.bf16.gmra.mrb[0].mxu0 %v3768
    %v5526 = vpop.f32.mrb[0].mxu0
    %v5527 = vadd.f32 %v4043, %v5526
    %v5528 = vpop.f32.mrb[0].mxu0
    %v5529 = vadd.f32 %v4047, %v5528
    %v5530 = vpop.f32.mrb[0].mxu0
    %v5531 = vpop.f32.mrb[0].mxu0
    %5532 = vdwg.mxu0
    %5533 = vmatprep.subr.bf16.mxu0 %v4883
    %5534 = vmatpush1.bf16.msra.mxu0 %v4882
    %5535 = vmatprep.subr.bf16.mxu0 %v4887
    %5536 = vmatpush1.bf16.msra.mxu0 %v4886
    %5537 = vmatprep.subr.bf16.mxu0 %v4891
    %5538 = vmatpush1.bf16.msra.mxu0 %v4890
    %5539 = vmatprep.subr.bf16.mxu0 %v4895
    %5540 = vmatpush1.bf16.msra.mxu0 %v4894
    %5541 = vmatprep.subr.bf16.mxu0 %v4899
    %5542 = vmatpush1.bf16.msra.mxu0 %v4898
    %5543 = vmatprep.subr.bf16.mxu0 %v4903
    %5544 = vmatpush1.bf16.msra.mxu0 %v4902
    %5545 = vmatprep.subr.bf16.mxu0 %v4907
    %5546 = vmatpush1.bf16.msra.mxu0 %v4906
    %5547 = vmatprep.subr.bf16.mxu0 %v4911
    %5548 = vmatpush1.bf16.msra.mxu0 %v4910
    %5549 = vmatprep.subr.bf16.mxu0 %v4915
    %5550 = vmatpush1.bf16.msra.mxu0 %v4914
    %5551 = vmatprep.subr.bf16.mxu0 %v4919
    %5552 = vmatpush1.bf16.msra.mxu0 %v4918
    %5553 = vmatprep.subr.bf16.mxu0 %v4923
    %5554 = vmatpush1.bf16.msra.mxu0 %v4922
    %5555 = vmatprep.subr.bf16.mxu0 %v4927
    %5556 = vmatpush1.bf16.msra.mxu0 %v4926
    %5557 = vmatprep.subr.bf16.mxu0 %v4931
    %5558 = vmatpush1.bf16.msra.mxu0 %v4930
    %5559 = vmatprep.subr.bf16.mxu0 %v4935
    %5560 = vmatpush1.bf16.msra.mxu0 %v4934
    %5561 = vmatprep.subr.bf16.mxu0 %v4939
    %5562 = vmatpush1.bf16.msra.mxu0 %v4938
    %5563 = vmatprep.subr.bf16.mxu0 %v4943
    %5564 = vmatpush1.bf16.msra.mxu0 %v4942
    %5565 = vmatprep.mubr.bf16.mxu0 %v3771
    %5566 = vmatmul.mubr.bf16.gmra.mrb[0].mxu0 %v3770
    %v5567 = vpop.f32.mrb[0].mxu0
    %v5568 = vadd.f32 %v5527, %v5567
    %v5569 = vpop.f32.mrb[0].mxu0
    %v5570 = vadd.f32 %v5529, %v5569
    %v5571 = vpop.f32.mrb[0].mxu0
    %v5572 = vpop.f32.mrb[0].mxu0
    %5573 = vdwg.mxu0
    %5574 = vmatprep.subr.bf16.mxu0 %v4947
    %5575 = vmatpush1.bf16.msra.mxu0 %v4946
    %5576 = vmatprep.subr.bf16.mxu0 %v4951
    %5577 = vmatpush1.bf16.msra.mxu0 %v4950
    %5578 = vmatprep.subr.bf16.mxu0 %v4955
    %5579 = vmatpush1.bf16.msra.mxu0 %v4954
    %5580 = vmatprep.subr.bf16.mxu0 %v4959
    %5581 = vmatpush1.bf16.msra.mxu0 %v4958
    %5582 = vmatprep.subr.bf16.mxu0 %v4963
    %5583 = vmatpush1.bf16.msra.mxu0 %v4962
    %5584 = vmatprep.subr.bf16.mxu0 %v4967
    %5585 = vmatpush1.bf16.msra.mxu0 %v4966
    %5586 = vmatprep.subr.bf16.mxu0 %v4971
    %5587 = vmatpush1.bf16.msra.mxu0 %v4970
    %5588 = vmatprep.subr.bf16.mxu0 %v4975
    %5589 = vmatpush1.bf16.msra.mxu0 %v4974
    %5590 = vmatprep.subr.bf16.mxu0 %v4979
    %5591 = vmatpush1.bf16.msra.mxu0 %v4978
    %5592 = vmatprep.subr.bf16.mxu0 %v4983
    %5593 = vmatpush1.bf16.msra.mxu0 %v4982
    %5594 = vmatprep.subr.bf16.mxu0 %v4987
    %5595 = vmatpush1.bf16.msra.mxu0 %v4986
    %5596 = vmatprep.subr.bf16.mxu0 %v4991
    %5597 = vmatpush1.bf16.msra.mxu0 %v4990
    %5598 = vmatprep.subr.bf16.mxu0 %v4995
    %5599 = vmatpush1.bf16.msra.mxu0 %v4994
    %5600 = vmatprep.subr.bf16.mxu0 %v4999
    %5601 = vmatpush1.bf16.msra.mxu0 %v4998
    %5602 = vmatprep.subr.bf16.mxu0 %v5003
    %5603 = vmatpush1.bf16.msra.mxu0 %v5002
    %5604 = vmatprep.subr.bf16.mxu0 %v5007
    %5605 = vmatpush1.bf16.msra.mxu0 %v5006
    %5606 = vmatprep.mubr.bf16.mxu0 %v3773
    %5607 = vmatmul.mubr.bf16.gmra.mrb[0].mxu0 %v3772
    %v5608 = vpop.f32.mrb[0].mxu0
    %v5609 = vadd.f32 %v5568, %v5608
    %v5610 = vpop.f32.mrb[0].mxu0
    %v5611 = vadd.f32 %v5570, %v5610
    %v5612 = vpop.f32.mrb[0].mxu0
    %v5613 = vpop.f32.mrb[0].mxu0
    %5614 = vdwg.mxu0
    %5615 = vmatprep.subr.bf16.mxu0 %v5011
    %5616 = vmatpush1.bf16.msra.mxu0 %v5010
    %5617 = vmatprep.subr.bf16.mxu0 %v5015
    %5618 = vmatpush1.bf16.msra.mxu0 %v5014
    %5619 = vmatprep.subr.bf16.mxu0 %v5019
    %5620 = vmatpush1.bf16.msra.mxu0 %v5018
    %5621 = vmatprep.subr.bf16.mxu0 %v5023
    %5622 = vmatpush1.bf16.msra.mxu0 %v5022
    %5623 = vmatprep.subr.bf16.mxu0 %v5027
    %5624 = vmatpush1.bf16.msra.mxu0 %v5026
    %5625 = vmatprep.subr.bf16.mxu0 %v5031
    %5626 = vmatpush1.bf16.msra.mxu0 %v5030
    %5627 = vmatprep.subr.bf16.mxu0 %v5035
    %5628 = vmatpush1.bf16.msra.mxu0 %v5034
    %5629 = vmatprep.subr.bf16.mxu0 %v5039
    %5630 = vmatpush1.bf16.msra.mxu0 %v5038
    %5631 = vmatprep.subr.bf16.mxu0 %v5043
    %5632 = vmatpush1.bf16.msra.mxu0 %v5042
    %5633 = vmatprep.subr.bf16.mxu0 %v5047
    %5634 = vmatpush1.bf16.msra.mxu0 %v5046
    %5635 = vmatprep.subr.bf16.mxu0 %v5051
    %5636 = vmatpush1.bf16.msra.mxu0 %v5050
    %5637 = vmatprep.subr.bf16.mxu0 %v5055
    %5638 = vmatpush1.bf16.msra.mxu0 %v5054
    %5639 = vmatprep.subr.bf16.mxu0 %v5059
    %5640 = vmatpush1.bf16.msra.mxu0 %v5058
    %5641 = vmatprep.subr.bf16.mxu0 %v5063
    %5642 = vmatpush1.bf16.msra.mxu0 %v5062
    %5643 = vmatprep.subr.bf16.mxu0 %v5067
    %5644 = vmatpush1.bf16.msra.mxu0 %v5066
    %5645 = vmatprep.subr.bf16.mxu0 %v5071
    %5646 = vmatpush1.bf16.msra.mxu0 %v5070
    %5647 = vmatprep.mubr.bf16.mxu0 %v3775
    %5648 = vmatmul.mubr.bf16.gmra.mrb[0].mxu0 %v3774
    %v5649 = vpop.f32.mrb[0].mxu0
    %v5650 = vadd.f32 %v5609, %v5649
    %v5651 = vpop.f32.mrb[0].mxu0
    %v5652 = vadd.f32 %v5611, %v5651
    %v5653 = vpop.f32.mrb[0].mxu0
    %v5654 = vpop.f32.mrb[0].mxu0
    %5655 = vdwg.mxu0
    %v5656 = vsel %vm3455, %v5486, 0.0
    %v5657 = vrot.slane %v5656, 4
    %v5658 = vadd.f32 %v5656, %v5657
    %v5659 = vrot.slane %v5658, 2
    %v5660 = vadd.f32 %v5658, %v5659
    %v5661 = vrot.slane %v5660, 1
    %v5662 = vadd.f32 %v5660, %v5661
    %v5663 = vsel %vm3455, %v5488, 0.0
    %v5664 = vrot.slane %v5663, 4
    %v5665 = vadd.f32 %v5663, %v5664
    %v5666 = vrot.slane %v5665, 2
    %v5667 = vadd.f32 %v5665, %v5666
    %v5668 = vrot.slane %v5667, 1
    %v5669 = vadd.f32 %v5667, %v5668
    %v5670 = vsel %vm3455, %v5650, 0.0
    %v5671 = vrot.slane %v5670, 4
    %v5672 = vadd.f32 %v5670, %v5671
    %v5673 = vrot.slane %v5672, 2
    %v5674 = vadd.f32 %v5672, %v5673
    %v5675 = vrot.slane %v5674, 1
    %v5676 = vadd.f32 %v5674, %v5675
    %v5677 = vsel %vm3455, %v5652, 0.0
    %v5678 = vrot.slane %v5677, 4
    %v5679 = vadd.f32 %v5677, %v5678
    %v5680 = vrot.slane %v5679, 2
    %v5681 = vadd.f32 %v5679, %v5680
    %v5682 = vrot.slane %v5681, 1
    %v5683 = vadd.f32 %v5681, %v5682
    %v5684 = vmul.f32 %v5486, %v5486
    %v5685 = vmul.f32 %v5488, %v5488
    %v5686 = vmul.f32 %v5650, %v5650
    %v5687 = vmul.f32 %v5652, %v5652
    %v5688 = vsel %vm3455, %v5684, 0.0
    %v5689 = vrot.slane %v5688, 4
    %v5690 = vadd.f32 %v5688, %v5689
    %v5691 = vrot.slane %v5690, 2
    %v5692 = vadd.f32 %v5690, %v5691
    %v5693 = vrot.slane %v5692, 1
    %v5694 = vadd.f32 %v5692, %v5693
    %v5695 = vsel %vm3455, %v5685, 0.0
    %v5696 = vrot.slane %v5695, 4
    %v5697 = vadd.f32 %v5695, %v5696
    %v5698 = vrot.slane %v5697, 2
    %v5699 = vadd.f32 %v5697, %v5698
    %v5700 = vrot.slane %v5699, 1
    %v5701 = vadd.f32 %v5699, %v5700
    %v5702 = vsel %vm3455, %v5686, 0.0
    %v5703 = vrot.slane %v5702, 4
    %v5704 = vadd.f32 %v5702, %v5703
    %v5705 = vrot.slane %v5704, 2
    %v5706 = vadd.f32 %v5704, %v5705
    %v5707 = vrot.slane %v5706, 1
    %v5708 = vadd.f32 %v5706, %v5707
    %v5709 = vsel %vm3455, %v5687, 0.0
    %v5710 = vrot.slane %v5709, 4
    %v5711 = vadd.f32 %v5709, %v5710
    %v5712 = vrot.slane %v5711, 2
    %v5713 = vadd.f32 %v5711, %v5712
    %v5714 = vrot.slane %v5713, 1
    %v5715 = vadd.f32 %v5713, %v5714
    %v5716 = vmul.f32 %v5662, 0.25
    %v5717 = vmul.f32 %v5669, 0.25
    %v5718 = vmul.f32 %v5676, 0.25
    %v5719 = vmul.f32 %v5683, 0.25
    %v5720 = vmul.f32 %v5694, 0.25
    %v5721 = vmul.f32 %v5701, 0.25
    %v5722 = vmul.f32 %v5708, 0.25
    %v5723 = vmul.f32 %v5715, 0.25
    %v5724 = vmul.f32 %v5716, %v5716
    %v5725 = vmul.f32 %v5717, %v5717
    %v5726 = vmul.f32 %v5718, %v5718
    %v5727 = vmul.f32 %v5719, %v5719
    %v5728 = vsub.f32 %v5720, %v5724
    %v5729 = vsub.f32 %v5721, %v5725
    %v5730 = vsub.f32 %v5722, %v5726
    %v5731 = vsub.f32 %v5723, %v5727
    %v5732 = vmax.f32 %v5728, 0.0
    %v5733 = vmax.f32 %v5729, 0.0
    %v5734 = vmax.f32 %v5730, 0.0
    %v5735 = vmax.f32 %v5731, 0.0
    %v5736 = vadd.f32 %v5732, 1e-05
    %v5737 = vadd.f32 %v5733, 1e-05
    %v5738 = vadd.f32 %v5734, 1e-05
    %v5739 = vadd.f32 %v5735, 1e-05
    %v5740 = vrsqrt.pop %v5736
    %v5741 = vrsqrt.pop %v5737
    %v5742 = vrsqrt.pop %v5738
    %v5743 = vrsqrt.pop %v5739
    %v5744 = vmul.f32 %v108, %v5740
    %v5745 = vmul.f32 %v109, %v5741
    %v5746 = vmul.f32 %v110, %v5742
    %v5747 = vmul.f32 %v111, %v5743
    %v5748 = vmul.f32 %v5716, %v5744
    %v5749 = vmul.f32 %v5717, %v5745
    %v5750 = vmul.f32 %v5718, %v5746
    %v5751 = vmul.f32 %v5719, %v5747
    %v5756 = vrot.slane %v5748, 7
    %v5757 = vrot.slane %v5749, 7
    %v5758 = vrot.slane %v5750, 7
    %v5759 = vrot.slane %v5751, 7
    %v5764 = vsub.f32 %v108, %v5756
    %v5765 = vsub.f32 %v109, %v5757
    %v5766 = vsub.f32 %v110, %v5758
    %v5767 = vsub.f32 %v111, %v5759
    %v5768 = vlaneseq
    %v5769 = vshrl.u32 %v5768, 7
    %v5770 = vsub.s32 5, %v5769
    %v5771 = vrot.slane %v5744, %v5770
    %v5772 = vlaneseq
    %v5773 = vshrl.u32 %v5772, 7
    %v5774 = vsub.s32 5, %v5773
    %v5775 = vrot.slane %v5745, %v5774
    %v5776 = vlaneseq
    %v5777 = vshrl.u32 %v5776, 7
    %v5778 = vsub.s32 5, %v5777
    %v5779 = vrot.slane %v5746, %v5778
    %v5780 = vlaneseq
    %v5781 = vshrl.u32 %v5780, 7
    %v5782 = vsub.s32 5, %v5781
    %v5783 = vrot.slane %v5747, %v5782
    %v5784 = vmul.f32 %v5486, %v5771
    %v5785 = vmul.f32 %v5488, %v5775
    %v5786 = vmul.f32 %v5650, %v5779
    %v5787 = vmul.f32 %v5652, %v5783
    %v5788 = vlaneseq
    %v5789 = vshrl.u32 %v5788, 7
    %v5790 = vsub.s32 6, %v5789
    %v5791 = vrot.slane %v5764, %v5790
    %v5792 = vlaneseq
    %v5793 = vshrl.u32 %v5792, 7
    %v5794 = vsub.s32 6, %v5793
    %v5795 = vrot.slane %v5765, %v5794
    %v5796 = vlaneseq
    %v5797 = vshrl.u32 %v5796, 7
    %v5798 = vsub.s32 6, %v5797
    %v5799 = vrot.slane %v5766, %v5798
    %v5800 = vlaneseq
    %v5801 = vshrl.u32 %v5800, 7
    %v5802 = vsub.s32 6, %v5801
    %v5803 = vrot.slane %v5767, %v5802
    %v5804 = vadd.f32 %v5784, %v5791
    %v5805 = vadd.f32 %v5785, %v5795
    %v5806 = vadd.f32 %v5786, %v5799
    %v5807 = vadd.f32 %v5787, %v5803
    %v5808 = vmax.f32 %v5804, 0.0
    %v5809 = vmax.f32 %v5805, 0.0
    %v5810 = vmax.f32 %v5806, 0.0
    %v5811 = vmax.f32 %v5807, 0.0
    %v5812 = vpack.c.bf16 %v5808, %v5808
    %v5813 = vpack.c.bf16 %v5809, %v5809
    %v5814 = vpack.c.bf16 %v5810, %v5810
    %v5815 = vpack.c.bf16 %v5811, %v5811
    %v5816 = vld [vmem:[#allocation10] sm:$0xff]
    %v5817 = vld [vmem:[#allocation10 + $0x8] sm:$0xff]
    %v5818 = vld [vmem:[#allocation10 + $0x10] sm:$0xff]
    %v5819 = vld [vmem:[#allocation10 + $0x18] sm:$0xff]
    %v5820 = vld [vmem:[#allocation10 + $0x20] sm:$0xff]
    %v5821 = vld [vmem:[#allocation10 + $0x28] sm:$0xff]
    %v5822 = vld [vmem:[#allocation10 + $0x30] sm:$0xff]
    %v5823 = vld [vmem:[#allocation10 + $0x38] sm:$0xff]
    %v5824 = vld [vmem:[#allocation10 + $0x40] sm:$0xff]
    %v5825 = vld [vmem:[#allocation10 + $0x48] sm:$0xff]
    %v5826 = vld [vmem:[#allocation10 + $0x50] sm:$0xff]
    %v5827 = vld [vmem:[#allocation10 + $0x58] sm:$0xff]
    %v5828 = vld [vmem:[#allocation10 + $0x60] sm:$0xff]
    %v5829 = vld [vmem:[#allocation10 + $0x68] sm:$0xff]
    %v5830 = vld [vmem:[#allocation10 + $0x70] sm:$0xff]
    %v5831 = vld [vmem:[#allocation10 + $0x78] sm:$0xff]
    %v5832 = vld [vmem:[#allocation10 + $0x80] sm:$0xff]
    %v5833 = vld [vmem:[#allocation10 + $0x88] sm:$0xff]
    %v5834 = vld [vmem:[#allocation10 + $0x90] sm:$0xff]
    %v5835 = vld [vmem:[#allocation10 + $0x98] sm:$0xff]
    %v5836 = vld [vmem:[#allocation10 + $0xa0] sm:$0xff]
    %v5837 = vld [vmem:[#allocation10 + $0xa8] sm:$0xff]
    %v5838 = vld [vmem:[#allocation10 + $0xb0] sm:$0xff]
    %v5839 = vld [vmem:[#allocation10 + $0xb8] sm:$0xff]
    %v5840 = vld [vmem:[#allocation10 + $0xc0] sm:$0xff]
    %v5841 = vld [vmem:[#allocation10 + $0xc8] sm:$0xff]
    %v5842 = vld [vmem:[#allocation10 + $0xd0] sm:$0xff]
    %v5843 = vld [vmem:[#allocation10 + $0xd8] sm:$0xff]
    %v5844 = vld [vmem:[#allocation10 + $0xe0] sm:$0xff]
    %v5845 = vld [vmem:[#allocation10 + $0xe8] sm:$0xff]
    %v5846 = vld [vmem:[#allocation10 + $0xf0] sm:$0xff]
    %v5847 = vld [vmem:[#allocation10 + $0xf8] sm:$0xff]
    %v5848 = vld [vmem:[#allocation10 + $0x100] sm:$0xff]
    %v5849 = vld [vmem:[#allocation10 + $0x108] sm:$0xff]
    %v5850 = vld [vmem:[#allocation10 + $0x110] sm:$0xff]
    %v5851 = vld [vmem:[#allocation10 + $0x118] sm:$0xff]
    %v5852 = vld [vmem:[#allocation10 + $0x120] sm:$0xff]
    %v5853 = vld [vmem:[#allocation10 + $0x128] sm:$0xff]
    %v5854 = vld [vmem:[#allocation10 + $0x130] sm:$0xff]
    %v5855 = vld [vmem:[#allocation10 + $0x138] sm:$0xff]
    %v5856 = vld [vmem:[#allocation10 + $0x140] sm:$0xff]
    %v5857 = vld [vmem:[#allocation10 + $0x148] sm:$0xff]
    %v5858 = vld [vmem:[#allocation10 + $0x150] sm:$0xff]
    %v5859 = vld [vmem:[#allocation10 + $0x158] sm:$0xff]
    %v5860 = vld [vmem:[#allocation10 + $0x160] sm:$0xff]
    %v5861 = vld [vmem:[#allocation10 + $0x168] sm:$0xff]
    %v5862 = vld [vmem:[#allocation10 + $0x170] sm:$0xff]
    %v5863 = vld [vmem:[#allocation10 + $0x178] sm:$0xff]
    %v5864 = vld [vmem:[#allocation10 + $0x180] sm:$0xff]
    %v5865 = vld [vmem:[#allocation10 + $0x188] sm:$0xff]
    %v5866 = vld [vmem:[#allocation10 + $0x190] sm:$0xff]
    %v5867 = vld [vmem:[#allocation10 + $0x198] sm:$0xff]
    %v5868 = vld [vmem:[#allocation10 + $0x1a0] sm:$0xff]
    %v5869 = vld [vmem:[#allocation10 + $0x1a8] sm:$0xff]
    %v5870 = vld [vmem:[#allocation10 + $0x1b0] sm:$0xff]
    %v5871 = vld [vmem:[#allocation10 + $0x1b8] sm:$0xff]
    %v5872 = vld [vmem:[#allocation10 + $0x1c0] sm:$0xff]
    %v5873 = vld [vmem:[#allocation10 + $0x1c8] sm:$0xff]
    %v5874 = vld [vmem:[#allocation10 + $0x1d0] sm:$0xff]
    %v5875 = vld [vmem:[#allocation10 + $0x1d8] sm:$0xff]
    %v5876 = vld [vmem:[#allocation10 + $0x1e0] sm:$0xff]
    %v5877 = vld [vmem:[#allocation10 + $0x1e8] sm:$0xff]
    %v5878 = vld [vmem:[#allocation10 + $0x1f0] sm:$0xff]
    %v5879 = vld [vmem:[#allocation10 + $0x1f8] sm:$0xff]
    %v5880 = vld [vmem:[#allocation10 + $0x200] sm:$0xff]
    %v5881 = vld [vmem:[#allocation10 + $0x208] sm:$0xff]
    %v5882 = vld [vmem:[#allocation10 + $0x210] sm:$0xff]
    %v5883 = vld [vmem:[#allocation10 + $0x218] sm:$0xff]
    %v5884 = vld [vmem:[#allocation10 + $0x220] sm:$0xff]
    %v5885 = vld [vmem:[#allocation10 + $0x228] sm:$0xff]
    %v5886 = vld [vmem:[#allocation10 + $0x230] sm:$0xff]
    %v5887 = vld [vmem:[#allocation10 + $0x238] sm:$0xff]
    %v5888 = vld [vmem:[#allocation10 + $0x240] sm:$0xff]
    %v5889 = vld [vmem:[#allocation10 + $0x248] sm:$0xff]
    %v5890 = vld [vmem:[#allocation10 + $0x250] sm:$0xff]
    %v5891 = vld [vmem:[#allocation10 + $0x258] sm:$0xff]
    %v5892 = vld [vmem:[#allocation10 + $0x260] sm:$0xff]
    %v5893 = vld [vmem:[#allocation10 + $0x268] sm:$0xff]
    %v5894 = vld [vmem:[#allocation10 + $0x270] sm:$0xff]
    %v5895 = vld [vmem:[#allocation10 + $0x278] sm:$0xff]
    %v5896 = vld [vmem:[#allocation10 + $0x280] sm:$0xff]
    %v5897 = vld [vmem:[#allocation10 + $0x288] sm:$0xff]
    %v5898 = vld [vmem:[#allocation10 + $0x290] sm:$0xff]
    %v5899 = vld [vmem:[#allocation10 + $0x298] sm:$0xff]
    %v5900 = vld [vmem:[#allocation10 + $0x2a0] sm:$0xff]
    %v5901 = vld [vmem:[#allocation10 + $0x2a8] sm:$0xff]
    %v5902 = vld [vmem:[#allocation10 + $0x2b0] sm:$0xff]
    %v5903 = vld [vmem:[#allocation10 + $0x2b8] sm:$0xff]
    %v5904 = vld [vmem:[#allocation10 + $0x2c0] sm:$0xff]
    %v5905 = vld [vmem:[#allocation10 + $0x2c8] sm:$0xff]
    %v5906 = vld [vmem:[#allocation10 + $0x2d0] sm:$0xff]
    %v5907 = vld [vmem:[#allocation10 + $0x2d8] sm:$0xff]
    %v5908 = vld [vmem:[#allocation10 + $0x2e0] sm:$0xff]
    %v5909 = vld [vmem:[#allocation10 + $0x2e8] sm:$0xff]
    %v5910 = vld [vmem:[#allocation10 + $0x2f0] sm:$0xff]
    %v5911 = vld [vmem:[#allocation10 + $0x2f8] sm:$0xff]
    %v5912 = vld [vmem:[#allocation10 + $0x300] sm:$0xff]
    %v5913 = vld [vmem:[#allocation10 + $0x308] sm:$0xff]
    %v5914 = vld [vmem:[#allocation10 + $0x310] sm:$0xff]
    %v5915 = vld [vmem:[#allocation10 + $0x318] sm:$0xff]
    %v5916 = vld [vmem:[#allocation10 + $0x320] sm:$0xff]
    %v5917 = vld [vmem:[#allocation10 + $0x328] sm:$0xff]
    %v5918 = vld [vmem:[#allocation10 + $0x330] sm:$0xff]
    %v5919 = vld [vmem:[#allocation10 + $0x338] sm:$0xff]
    %v5920 = vld [vmem:[#allocation10 + $0x340] sm:$0xff]
    %v5921 = vld [vmem:[#allocation10 + $0x348] sm:$0xff]
    %v5922 = vld [vmem:[#allocation10 + $0x350] sm:$0xff]
    %v5923 = vld [vmem:[#allocation10 + $0x358] sm:$0xff]
    %v5924 = vld [vmem:[#allocation10 + $0x360] sm:$0xff]
    %v5925 = vld [vmem:[#allocation10 + $0x368] sm:$0xff]
    %v5926 = vld [vmem:[#allocation10 + $0x370] sm:$0xff]
    %v5927 = vld [vmem:[#allocation10 + $0x378] sm:$0xff]
    %v5928 = vld [vmem:[#allocation10 + $0x380] sm:$0xff]
    %v5929 = vld [vmem:[#allocation10 + $0x388] sm:$0xff]
    %v5930 = vld [vmem:[#allocation10 + $0x390] sm:$0xff]
    %v5931 = vld [vmem:[#allocation10 + $0x398] sm:$0xff]
    %v5932 = vld [vmem:[#allocation10 + $0x3a0] sm:$0xff]
    %v5933 = vld [vmem:[#allocation10 + $0x3a8] sm:$0xff]
    %v5934 = vld [vmem:[#allocation10 + $0x3b0] sm:$0xff]
    %v5935 = vld [vmem:[#allocation10 + $0x3b8] sm:$0xff]
    %v5936 = vld [vmem:[#allocation10 + $0x3c0] sm:$0xff]
    %v5937 = vld [vmem:[#allocation10 + $0x3c8] sm:$0xff]
    %v5938 = vld [vmem:[#allocation10 + $0x3d0] sm:$0xff]
    %v5939 = vld [vmem:[#allocation10 + $0x3d8] sm:$0xff]
    %v5940 = vld [vmem:[#allocation10 + $0x3e0] sm:$0xff]
    %v5941 = vld [vmem:[#allocation10 + $0x3e8] sm:$0xff]
    %v5942 = vld [vmem:[#allocation10 + $0x3f0] sm:$0xff]
    %v5943 = vld [vmem:[#allocation10 + $0x3f8] sm:$0xff]
    %v5944 = vlaneseq
    %v5945 = vshrl.u32 %v5944, 7
    %v5946 = vsub.s32 7, %v5945
    %v5947 = vrot.slane %v108, %v5946
    %v5948 = vlaneseq
    %v5949 = vshrl.u32 %v5948, 7
    %v5950 = vsub.s32 7, %v5949
    %v5951 = vrot.slane %v109, %v5950
    %v5952 = vlaneseq
    %v5953 = vshrl.u32 %v5952, 7
    %v5954 = vsub.s32 7, %v5953
    %v5955 = vrot.slane %v110, %v5954
    %v5956 = vlaneseq
    %v5957 = vshrl.u32 %v5956, 7
    %v5958 = vsub.s32 7, %v5957
    %v5959 = vrot.slane %v111, %v5958
    %v6088 = vunpack.c.l.b16 %v5816
    %v6089 = vunpack.c.h.b16 %v5816
    %v6090 = vunpack.c.l.b16 %v5817
    %v6091 = vunpack.c.h.b16 %v5817
    %v6092 = vunpack.c.l.b16 %v5818
    %v6093 = vunpack.c.h.b16 %v5818
    %v6094 = vunpack.c.l.b16 %v5819
    %v6095 = vunpack.c.h.b16 %v5819
    %v6096 = vunpack.c.l.b16 %v5820
    %v6097 = vunpack.c.h.b16 %v5820
    %v6098 = vunpack.c.l.b16 %v5821
    %v6099 = vunpack.c.h.b16 %v5821
    %v6100 = vunpack.c.l.b16 %v5822
    %v6101 = vunpack.c.h.b16 %v5822
    %v6102 = vunpack.c.l.b16 %v5823
    %v6103 = vunpack.c.h.b16 %v5823
    %v6104 = vunpack.c.l.b16 %v5824
    %v6105 = vunpack.c.h.b16 %v5824
    %v6106 = vunpack.c.l.b16 %v5825
    %v6107 = vunpack.c.h.b16 %v5825
    %v6108 = vunpack.c.l.b16 %v5826
    %v6109 = vunpack.c.h.b16 %v5826
    %v6110 = vunpack.c.l.b16 %v5827
    %v6111 = vunpack.c.h.b16 %v5827
    %v6112 = vunpack.c.l.b16 %v5828
    %v6113 = vunpack.c.h.b16 %v5828
    %v6114 = vunpack.c.l.b16 %v5829
    %v6115 = vunpack.c.h.b16 %v5829
    %v6116 = vunpack.c.l.b16 %v5830
    %v6117 = vunpack.c.h.b16 %v5830
    %v6118 = vunpack.c.l.b16 %v5831
    %v6119 = vunpack.c.h.b16 %v5831
    %v6120 = vunpack.c.l.b16 %v5832
    %v6121 = vunpack.c.h.b16 %v5832
    %v6122 = vunpack.c.l.b16 %v5833
    %v6123 = vunpack.c.h.b16 %v5833
    %v6124 = vunpack.c.l.b16 %v5834
    %v6125 = vunpack.c.h.b16 %v5834
    %v6126 = vunpack.c.l.b16 %v5835
    %v6127 = vunpack.c.h.b16 %v5835
    %v6128 = vunpack.c.l.b16 %v5836
    %v6129 = vunpack.c.h.b16 %v5836
    %v6130 = vunpack.c.l.b16 %v5837
    %v6131 = vunpack.c.h.b16 %v5837
    %v6132 = vunpack.c.l.b16 %v5838
    %v6133 = vunpack.c.h.b16 %v5838
    %v6134 = vunpack.c.l.b16 %v5839
    %v6135 = vunpack.c.h.b16 %v5839
    %v6136 = vunpack.c.l.b16 %v5840
    %v6137 = vunpack.c.h.b16 %v5840
    %v6138 = vunpack.c.l.b16 %v5841
    %v6139 = vunpack.c.h.b16 %v5841
    %v6140 = vunpack.c.l.b16 %v5842
    %v6141 = vunpack.c.h.b16 %v5842
    %v6142 = vunpack.c.l.b16 %v5843
    %v6143 = vunpack.c.h.b16 %v5843
    %v6144 = vunpack.c.l.b16 %v5844
    %v6145 = vunpack.c.h.b16 %v5844
    %v6146 = vunpack.c.l.b16 %v5845
    %v6147 = vunpack.c.h.b16 %v5845
    %v6148 = vunpack.c.l.b16 %v5846
    %v6149 = vunpack.c.h.b16 %v5846
    %v6150 = vunpack.c.l.b16 %v5847
    %v6151 = vunpack.c.h.b16 %v5847
    %v6152 = vunpack.c.l.b16 %v5848
    %v6153 = vunpack.c.h.b16 %v5848
    %v6154 = vunpack.c.l.b16 %v5849
    %v6155 = vunpack.c.h.b16 %v5849
    %v6156 = vunpack.c.l.b16 %v5850
    %v6157 = vunpack.c.h.b16 %v5850
    %v6158 = vunpack.c.l.b16 %v5851
    %v6159 = vunpack.c.h.b16 %v5851
    %v6160 = vunpack.c.l.b16 %v5852
    %v6161 = vunpack.c.h.b16 %v5852
    %v6162 = vunpack.c.l.b16 %v5853
    %v6163 = vunpack.c.h.b16 %v5853
    %v6164 = vunpack.c.l.b16 %v5854
    %v6165 = vunpack.c.h.b16 %v5854
    %v6166 = vunpack.c.l.b16 %v5855
    %v6167 = vunpack.c.h.b16 %v5855
    %v6168 = vunpack.c.l.b16 %v5856
    %v6169 = vunpack.c.h.b16 %v5856
    %v6170 = vunpack.c.l.b16 %v5857
    %v6171 = vunpack.c.h.b16 %v5857
    %v6172 = vunpack.c.l.b16 %v5858
    %v6173 = vunpack.c.h.b16 %v5858
    %v6174 = vunpack.c.l.b16 %v5859
    %v6175 = vunpack.c.h.b16 %v5859
    %v6176 = vunpack.c.l.b16 %v5860
    %v6177 = vunpack.c.h.b16 %v5860
    %v6178 = vunpack.c.l.b16 %v5861
    %v6179 = vunpack.c.h.b16 %v5861
    %v6180 = vunpack.c.l.b16 %v5862
    %v6181 = vunpack.c.h.b16 %v5862
    %v6182 = vunpack.c.l.b16 %v5863
    %v6183 = vunpack.c.h.b16 %v5863
    %v6184 = vunpack.c.l.b16 %v5864
    %v6185 = vunpack.c.h.b16 %v5864
    %v6186 = vunpack.c.l.b16 %v5865
    %v6187 = vunpack.c.h.b16 %v5865
    %v6188 = vunpack.c.l.b16 %v5866
    %v6189 = vunpack.c.h.b16 %v5866
    %v6190 = vunpack.c.l.b16 %v5867
    %v6191 = vunpack.c.h.b16 %v5867
    %v6192 = vunpack.c.l.b16 %v5868
    %v6193 = vunpack.c.h.b16 %v5868
    %v6194 = vunpack.c.l.b16 %v5869
    %v6195 = vunpack.c.h.b16 %v5869
    %v6196 = vunpack.c.l.b16 %v5870
    %v6197 = vunpack.c.h.b16 %v5870
    %v6198 = vunpack.c.l.b16 %v5871
    %v6199 = vunpack.c.h.b16 %v5871
    %v6200 = vunpack.c.l.b16 %v5872
    %v6201 = vunpack.c.h.b16 %v5872
    %v6202 = vunpack.c.l.b16 %v5873
    %v6203 = vunpack.c.h.b16 %v5873
    %v6204 = vunpack.c.l.b16 %v5874
    %v6205 = vunpack.c.h.b16 %v5874
    %v6206 = vunpack.c.l.b16 %v5875
    %v6207 = vunpack.c.h.b16 %v5875
    %v6208 = vunpack.c.l.b16 %v5876
    %v6209 = vunpack.c.h.b16 %v5876
    %v6210 = vunpack.c.l.b16 %v5877
    %v6211 = vunpack.c.h.b16 %v5877
    %v6212 = vunpack.c.l.b16 %v5878
    %v6213 = vunpack.c.h.b16 %v5878
    %v6214 = vunpack.c.l.b16 %v5879
    %v6215 = vunpack.c.h.b16 %v5879
    %v6216 = vunpack.c.l.b16 %v5880
    %v6217 = vunpack.c.h.b16 %v5880
    %v6218 = vunpack.c.l.b16 %v5881
    %v6219 = vunpack.c.h.b16 %v5881
    %v6220 = vunpack.c.l.b16 %v5882
    %v6221 = vunpack.c.h.b16 %v5882
    %v6222 = vunpack.c.l.b16 %v5883
    %v6223 = vunpack.c.h.b16 %v5883
    %v6224 = vunpack.c.l.b16 %v5884
    %v6225 = vunpack.c.h.b16 %v5884
    %v6226 = vunpack.c.l.b16 %v5885
    %v6227 = vunpack.c.h.b16 %v5885
    %v6228 = vunpack.c.l.b16 %v5886
    %v6229 = vunpack.c.h.b16 %v5886
    %v6230 = vunpack.c.l.b16 %v5887
    %v6231 = vunpack.c.h.b16 %v5887
    %v6232 = vunpack.c.l.b16 %v5888
    %v6233 = vunpack.c.h.b16 %v5888
    %v6234 = vunpack.c.l.b16 %v5889
    %v6235 = vunpack.c.h.b16 %v5889
    %v6236 = vunpack.c.l.b16 %v5890
    %v6237 = vunpack.c.h.b16 %v5890
    %v6238 = vunpack.c.l.b16 %v5891
    %v6239 = vunpack.c.h.b16 %v5891
    %v6240 = vunpack.c.l.b16 %v5892
    %v6241 = vunpack.c.h.b16 %v5892
    %v6242 = vunpack.c.l.b16 %v5893
    %v6243 = vunpack.c.h.b16 %v5893
    %v6244 = vunpack.c.l.b16 %v5894
    %v6245 = vunpack.c.h.b16 %v5894
    %v6246 = vunpack.c.l.b16 %v5895
    %v6247 = vunpack.c.h.b16 %v5895
    %v6248 = vunpack.c.l.b16 %v5896
    %v6249 = vunpack.c.h.b16 %v5896
    %v6250 = vunpack.c.l.b16 %v5897
    %v6251 = vunpack.c.h.b16 %v5897
    %v6252 = vunpack.c.l.b16 %v5898
    %v6253 = vunpack.c.h.b16 %v5898
    %v6254 = vunpack.c.l.b16 %v5899
    %v6255 = vunpack.c.h.b16 %v5899
    %v6256 = vunpack.c.l.b16 %v5900
    %v6257 = vunpack.c.h.b16 %v5900
    %v6258 = vunpack.c.l.b16 %v5901
    %v6259 = vunpack.c.h.b16 %v5901
    %v6260 = vunpack.c.l.b16 %v5902
    %v6261 = vunpack.c.h.b16 %v5902
    %v6262 = vunpack.c.l.b16 %v5903
    %v6263 = vunpack.c.h.b16 %v5903
    %v6264 = vunpack.c.l.b16 %v5904
    %v6265 = vunpack.c.h.b16 %v5904
    %v6266 = vunpack.c.l.b16 %v5905
    %v6267 = vunpack.c.h.b16 %v5905
    %v6268 = vunpack.c.l.b16 %v5906
    %v6269 = vunpack.c.h.b16 %v5906
    %v6270 = vunpack.c.l.b16 %v5907
    %v6271 = vunpack.c.h.b16 %v5907
    %v6272 = vunpack.c.l.b16 %v5908
    %v6273 = vunpack.c.h.b16 %v5908
    %v6274 = vunpack.c.l.b16 %v5909
    %v6275 = vunpack.c.h.b16 %v5909
    %v6276 = vunpack.c.l.b16 %v5910
    %v6277 = vunpack.c.h.b16 %v5910
    %v6278 = vunpack.c.l.b16 %v5911
    %v6279 = vunpack.c.h.b16 %v5911
    %v6280 = vunpack.c.l.b16 %v5912
    %v6281 = vunpack.c.h.b16 %v5912
    %v6282 = vunpack.c.l.b16 %v5913
    %v6283 = vunpack.c.h.b16 %v5913
    %v6284 = vunpack.c.l.b16 %v5914
    %v6285 = vunpack.c.h.b16 %v5914
    %v6286 = vunpack.c.l.b16 %v5915
    %v6287 = vunpack.c.h.b16 %v5915
    %v6288 = vunpack.c.l.b16 %v5916
    %v6289 = vunpack.c.h.b16 %v5916
    %v6290 = vunpack.c.l.b16 %v5917
    %v6291 = vunpack.c.h.b16 %v5917
    %v6292 = vunpack.c.l.b16 %v5918
    %v6293 = vunpack.c.h.b16 %v5918
    %v6294 = vunpack.c.l.b16 %v5919
    %v6295 = vunpack.c.h.b16 %v5919
    %v6296 = vunpack.c.l.b16 %v5920
    %v6297 = vunpack.c.h.b16 %v5920
    %v6298 = vunpack.c.l.b16 %v5921
    %v6299 = vunpack.c.h.b16 %v5921
    %v6300 = vunpack.c.l.b16 %v5922
    %v6301 = vunpack.c.h.b16 %v5922
    %v6302 = vunpack.c.l.b16 %v5923
    %v6303 = vunpack.c.h.b16 %v5923
    %v6304 = vunpack.c.l.b16 %v5924
    %v6305 = vunpack.c.h.b16 %v5924
    %v6306 = vunpack.c.l.b16 %v5925
    %v6307 = vunpack.c.h.b16 %v5925
    %v6308 = vunpack.c.l.b16 %v5926
    %v6309 = vunpack.c.h.b16 %v5926
    %v6310 = vunpack.c.l.b16 %v5927
    %v6311 = vunpack.c.h.b16 %v5927
    %v6312 = vunpack.c.l.b16 %v5928
    %v6313 = vunpack.c.h.b16 %v5928
    %v6314 = vunpack.c.l.b16 %v5929
    %v6315 = vunpack.c.h.b16 %v5929
    %v6316 = vunpack.c.l.b16 %v5930
    %v6317 = vunpack.c.h.b16 %v5930
    %v6318 = vunpack.c.l.b16 %v5931
    %v6319 = vunpack.c.h.b16 %v5931
    %v6320 = vunpack.c.l.b16 %v5932
    %v6321 = vunpack.c.h.b16 %v5932
    %v6322 = vunpack.c.l.b16 %v5933
    %v6323 = vunpack.c.h.b16 %v5933
    %v6324 = vunpack.c.l.b16 %v5934
    %v6325 = vunpack.c.h.b16 %v5934
    %v6326 = vunpack.c.l.b16 %v5935
    %v6327 = vunpack.c.h.b16 %v5935
    %v6328 = vunpack.c.l.b16 %v5936
    %v6329 = vunpack.c.h.b16 %v5936
    %v6330 = vunpack.c.l.b16 %v5937
    %v6331 = vunpack.c.h.b16 %v5937
    %v6332 = vunpack.c.l.b16 %v5938
    %v6333 = vunpack.c.h.b16 %v5938
    %v6334 = vunpack.c.l.b16 %v5939
    %v6335 = vunpack.c.h.b16 %v5939
    %v6336 = vunpack.c.l.b16 %v5940
    %v6337 = vunpack.c.h.b16 %v5940
    %v6338 = vunpack.c.l.b16 %v5941
    %v6339 = vunpack.c.h.b16 %v5941
    %v6340 = vunpack.c.l.b16 %v5942
    %v6341 = vunpack.c.h.b16 %v5942
    %v6342 = vunpack.c.l.b16 %v5943
    %v6343 = vunpack.c.h.b16 %v5943
    %v6344 = vpack.c.b16 %v6092, %v6088
    %v6345 = vpack.c.b16 %v6093, %v6089
    %v6346 = vpack.c.b16 %v6094, %v6090
    %v6347 = vpack.c.b16 %v6095, %v6091
    %v6348 = vpack.c.b16 %v6100, %v6096
    %v6349 = vpack.c.b16 %v6101, %v6097
    %v6350 = vpack.c.b16 %v6102, %v6098
    %v6351 = vpack.c.b16 %v6103, %v6099
    %v6352 = vpack.c.b16 %v6108, %v6104
    %v6353 = vpack.c.b16 %v6109, %v6105
    %v6354 = vpack.c.b16 %v6110, %v6106
    %v6355 = vpack.c.b16 %v6111, %v6107
    %v6356 = vpack.c.b16 %v6116, %v6112
    %v6357 = vpack.c.b16 %v6117, %v6113
    %v6358 = vpack.c.b16 %v6118, %v6114
    %v6359 = vpack.c.b16 %v6119, %v6115
    %v6360 = vpack.c.b16 %v6124, %v6120
    %v6361 = vpack.c.b16 %v6125, %v6121
    %v6362 = vpack.c.b16 %v6126, %v6122
    %v6363 = vpack.c.b16 %v6127, %v6123
    %v6364 = vpack.c.b16 %v6132, %v6128
    %v6365 = vpack.c.b16 %v6133, %v6129
    %v6366 = vpack.c.b16 %v6134, %v6130
    %v6367 = vpack.c.b16 %v6135, %v6131
    %v6368 = vpack.c.b16 %v6140, %v6136
    %v6369 = vpack.c.b16 %v6141, %v6137
    %v6370 = vpack.c.b16 %v6142, %v6138
    %v6371 = vpack.c.b16 %v6143, %v6139
    %v6372 = vpack.c.b16 %v6148, %v6144
    %v6373 = vpack.c.b16 %v6149, %v6145
    %v6374 = vpack.c.b16 %v6150, %v6146
    %v6375 = vpack.c.b16 %v6151, %v6147
    %v6376 = vpack.c.b16 %v6156, %v6152
    %v6377 = vpack.c.b16 %v6157, %v6153
    %v6378 = vpack.c.b16 %v6158, %v6154
    %v6379 = vpack.c.b16 %v6159, %v6155
    %v6380 = vpack.c.b16 %v6164, %v6160
    %v6381 = vpack.c.b16 %v6165, %v6161
    %v6382 = vpack.c.b16 %v6166, %v6162
    %v6383 = vpack.c.b16 %v6167, %v6163
    %v6384 = vpack.c.b16 %v6172, %v6168
    %v6385 = vpack.c.b16 %v6173, %v6169
    %v6386 = vpack.c.b16 %v6174, %v6170
    %v6387 = vpack.c.b16 %v6175, %v6171
    %v6388 = vpack.c.b16 %v6180, %v6176
    %v6389 = vpack.c.b16 %v6181, %v6177
    %v6390 = vpack.c.b16 %v6182, %v6178
    %v6391 = vpack.c.b16 %v6183, %v6179
    %v6392 = vpack.c.b16 %v6188, %v6184
    %v6393 = vpack.c.b16 %v6189, %v6185
    %v6394 = vpack.c.b16 %v6190, %v6186
    %v6395 = vpack.c.b16 %v6191, %v6187
    %v6396 = vpack.c.b16 %v6196, %v6192
    %v6397 = vpack.c.b16 %v6197, %v6193
    %v6398 = vpack.c.b16 %v6198, %v6194
    %v6399 = vpack.c.b16 %v6199, %v6195
    %v6400 = vpack.c.b16 %v6204, %v6200
    %v6401 = vpack.c.b16 %v6205, %v6201
    %v6402 = vpack.c.b16 %v6206, %v6202
    %v6403 = vpack.c.b16 %v6207, %v6203
    %v6404 = vpack.c.b16 %v6212, %v6208
    %v6405 = vpack.c.b16 %v6213, %v6209
    %v6406 = vpack.c.b16 %v6214, %v6210
    %v6407 = vpack.c.b16 %v6215, %v6211
    %v6408 = vpack.c.b16 %v6220, %v6216
    %v6409 = vpack.c.b16 %v6221, %v6217
    %v6410 = vpack.c.b16 %v6222, %v6218
    %v6411 = vpack.c.b16 %v6223, %v6219
    %v6412 = vpack.c.b16 %v6228, %v6224
    %v6413 = vpack.c.b16 %v6229, %v6225
    %v6414 = vpack.c.b16 %v6230, %v6226
    %v6415 = vpack.c.b16 %v6231, %v6227
    %v6416 = vpack.c.b16 %v6236, %v6232
    %v6417 = vpack.c.b16 %v6237, %v6233
    %v6418 = vpack.c.b16 %v6238, %v6234
    %v6419 = vpack.c.b16 %v6239, %v6235
    %v6420 = vpack.c.b16 %v6244, %v6240
    %v6421 = vpack.c.b16 %v6245, %v6241
    %v6422 = vpack.c.b16 %v6246, %v6242
    %v6423 = vpack.c.b16 %v6247, %v6243
    %v6424 = vpack.c.b16 %v6252, %v6248
    %v6425 = vpack.c.b16 %v6253, %v6249
    %v6426 = vpack.c.b16 %v6254, %v6250
    %v6427 = vpack.c.b16 %v6255, %v6251
    %v6428 = vpack.c.b16 %v6260, %v6256
    %v6429 = vpack.c.b16 %v6261, %v6257
    %v6430 = vpack.c.b16 %v6262, %v6258
    %v6431 = vpack.c.b16 %v6263, %v6259
    %v6432 = vpack.c.b16 %v6268, %v6264
    %v6433 = vpack.c.b16 %v6269, %v6265
    %v6434 = vpack.c.b16 %v6270, %v6266
    %v6435 = vpack.c.b16 %v6271, %v6267
    %v6436 = vpack.c.b16 %v6276, %v6272
    %v6437 = vpack.c.b16 %v6277, %v6273
    %v6438 = vpack.c.b16 %v6278, %v6274
    %v6439 = vpack.c.b16 %v6279, %v6275
    %v6440 = vpack.c.b16 %v6284, %v6280
    %v6441 = vpack.c.b16 %v6285, %v6281
    %v6442 = vpack.c.b16 %v6286, %v6282
    %v6443 = vpack.c.b16 %v6287, %v6283
    %v6444 = vpack.c.b16 %v6292, %v6288
    %v6445 = vpack.c.b16 %v6293, %v6289
    %v6446 = vpack.c.b16 %v6294, %v6290
    %v6447 = vpack.c.b16 %v6295, %v6291
    %v6448 = vpack.c.b16 %v6300, %v6296
    %v6449 = vpack.c.b16 %v6301, %v6297
    %v6450 = vpack.c.b16 %v6302, %v6298
    %v6451 = vpack.c.b16 %v6303, %v6299
    %v6452 = vpack.c.b16 %v6308, %v6304
    %v6453 = vpack.c.b16 %v6309, %v6305
    %v6454 = vpack.c.b16 %v6310, %v6306
    %v6455 = vpack.c.b16 %v6311, %v6307
    %v6456 = vpack.c.b16 %v6316, %v6312
    %v6457 = vpack.c.b16 %v6317, %v6313
    %v6458 = vpack.c.b16 %v6318, %v6314
    %v6459 = vpack.c.b16 %v6319, %v6315
    %v6460 = vpack.c.b16 %v6324, %v6320
    %v6461 = vpack.c.b16 %v6325, %v6321
    %v6462 = vpack.c.b16 %v6326, %v6322
    %v6463 = vpack.c.b16 %v6327, %v6323
    %v6464 = vpack.c.b16 %v6332, %v6328
    %v6465 = vpack.c.b16 %v6333, %v6329
    %v6466 = vpack.c.b16 %v6334, %v6330
    %v6467 = vpack.c.b16 %v6335, %v6331
    %v6468 = vpack.c.b16 %v6340, %v6336
    %v6469 = vpack.c.b16 %v6341, %v6337
    %v6470 = vpack.c.b16 %v6342, %v6338
    %v6471 = vpack.c.b16 %v6343, %v6339
    %6600 = vmatprep.subr.bf16.mxu0 %v6345
    %6601 = vmatpush1.bf16.msra.mxu0 %v6344
    %6602 = vmatprep.subr.bf16.mxu0 %v6349
    %6603 = vmatpush1.bf16.msra.mxu0 %v6348
    %6604 = vmatprep.subr.bf16.mxu0 %v6353
    %6605 = vmatpush1.bf16.msra.mxu0 %v6352
    %6606 = vmatprep.subr.bf16.mxu0 %v6357
    %6607 = vmatpush1.bf16.msra.mxu0 %v6356
    %6608 = vmatprep.subr.bf16.mxu0 %v6361
    %6609 = vmatpush1.bf16.msra.mxu0 %v6360
    %6610 = vmatprep.subr.bf16.mxu0 %v6365
    %6611 = vmatpush1.bf16.msra.mxu0 %v6364
    %6612 = vmatprep.subr.bf16.mxu0 %v6369
    %6613 = vmatpush1.bf16.msra.mxu0 %v6368
    %6614 = vmatprep.subr.bf16.mxu0 %v6373
    %6615 = vmatpush1.bf16.msra.mxu0 %v6372
    %6616 = vmatprep.subr.bf16.mxu0 %v6377
    %6617 = vmatpush1.bf16.msra.mxu0 %v6376
    %6618 = vmatprep.subr.bf16.mxu0 %v6381
    %6619 = vmatpush1.bf16.msra.mxu0 %v6380
    %6620 = vmatprep.subr.bf16.mxu0 %v6385
    %6621 = vmatpush1.bf16.msra.mxu0 %v6384
    %6622 = vmatprep.subr.bf16.mxu0 %v6389
    %6623 = vmatpush1.bf16.msra.mxu0 %v6388
    %6624 = vmatprep.subr.bf16.mxu0 %v6393
    %6625 = vmatpush1.bf16.msra.mxu0 %v6392
    %6626 = vmatprep.subr.bf16.mxu0 %v6397
    %6627 = vmatpush1.bf16.msra.mxu0 %v6396
    %6628 = vmatprep.subr.bf16.mxu0 %v6401
    %6629 = vmatpush1.bf16.msra.mxu0 %v6400
    %6630 = vmatprep.subr.bf16.mxu0 %v6405
    %6631 = vmatpush1.bf16.msra.mxu0 %v6404
    %6632 = vmatprep.mubr.bf16.mxu0 %v5813
    %6633 = vmatmul.mubr.bf16.gmra.mrb[0].mxu0 %v5812
    %v6634 = vpop.f32.mrb[0].mxu0
    %v6635 = vadd.f32 %v5947, %v6634
    %v6636 = vpop.f32.mrb[0].mxu0
    %v6637 = vadd.f32 %v5951, %v6636
    %v6638 = vpop.f32.mrb[0].mxu0
    %v6639 = vpop.f32.mrb[0].mxu0
    %6640 = vdwg.mxu0
    %6641 = vmatprep.subr.bf16.mxu0 %v6409
    %6642 = vmatpush1.bf16.msra.mxu0 %v6408
    %6643 = vmatprep.subr.bf16.mxu0 %v6413
    %6644 = vmatpush1.bf16.msra.mxu0 %v6412
    %6645 = vmatprep.subr.bf16.mxu0 %v6417
    %6646 = vmatpush1.bf16.msra.mxu0 %v6416
    %6647 = vmatprep.subr.bf16.mxu0 %v6421
    %6648 = vmatpush1.bf16.msra.mxu0 %v6420
    %6649 = vmatprep.subr.bf16.mxu0 %v6425
    %6650 = vmatpush1.bf16.msra.mxu0 %v6424
    %6651 = vmatprep.subr.bf16.mxu0 %v6429
    %6652 = vmatpush1.bf16.msra.mxu0 %v6428
    %6653 = vmatprep.subr.bf16.mxu0 %v6433
    %6654 = vmatpush1.bf16.msra.mxu0 %v6432
    %6655 = vmatprep.subr.bf16.mxu0 %v6437
    %6656 = vmatpush1.bf16.msra.mxu0 %v6436
    %6657 = vmatprep.subr.bf16.mxu0 %v6441
    %6658 = vmatpush1.bf16.msra.mxu0 %v6440
    %6659 = vmatprep.subr.bf16.mxu0 %v6445
    %6660 = vmatpush1.bf16.msra.mxu0 %v6444
    %6661 = vmatprep.subr.bf16.mxu0 %v6449
    %6662 = vmatpush1.bf16.msra.mxu0 %v6448
    %6663 = vmatprep.subr.bf16.mxu0 %v6453
    %6664 = vmatpush1.bf16.msra.mxu0 %v6452
    %6665 = vmatprep.subr.bf16.mxu0 %v6457
    %6666 = vmatpush1.bf16.msra.mxu0 %v6456
    %6667 = vmatprep.subr.bf16.mxu0 %v6461
    %6668 = vmatpush1.bf16.msra.mxu0 %v6460
    %6669 = vmatprep.subr.bf16.mxu0 %v6465
    %6670 = vmatpush1.bf16.msra.mxu0 %v6464
    %6671 = vmatprep.subr.bf16.mxu0 %v6469
    %6672 = vmatpush1.bf16.msra.mxu0 %v6468
    %6673 = vmatprep.mubr.bf16.mxu0 %v5815
    %6674 = vmatmul.mubr.bf16.gmra.mrb[0].mxu0 %v5814
    %v6675 = vpop.f32.mrb[0].mxu0
    %v6676 = vadd.f32 %v6635, %v6675
    %v6677 = vpop.f32.mrb[0].mxu0
    %v6678 = vadd.f32 %v6637, %v6677
    %v6679 = vpop.f32.mrb[0].mxu0
    %v6680 = vpop.f32.mrb[0].mxu0
    %6681 = vdwg.mxu0
    %6682 = vmatprep.subr.bf16.mxu0 %v6347
    %6683 = vmatpush1.bf16.msra.mxu0 %v6346
    %6684 = vmatprep.subr.bf16.mxu0 %v6351
    %6685 = vmatpush1.bf16.msra.mxu0 %v6350
    %6686 = vmatprep.subr.bf16.mxu0 %v6355
    %6687 = vmatpush1.bf16.msra.mxu0 %v6354
    %6688 = vmatprep.subr.bf16.mxu0 %v6359
    %6689 = vmatpush1.bf16.msra.mxu0 %v6358
    %6690 = vmatprep.subr.bf16.mxu0 %v6363
    %6691 = vmatpush1.bf16.msra.mxu0 %v6362
    %6692 = vmatprep.subr.bf16.mxu0 %v6367
    %6693 = vmatpush1.bf16.msra.mxu0 %v6366
    %6694 = vmatprep.subr.bf16.mxu0 %v6371
    %6695 = vmatpush1.bf16.msra.mxu0 %v6370
    %6696 = vmatprep.subr.bf16.mxu0 %v6375
    %6697 = vmatpush1.bf16.msra.mxu0 %v6374
    %6698 = vmatprep.subr.bf16.mxu0 %v6379
    %6699 = vmatpush1.bf16.msra.mxu0 %v6378
    %6700 = vmatprep.subr.bf16.mxu0 %v6383
    %6701 = vmatpush1.bf16.msra.mxu0 %v6382
    %6702 = vmatprep.subr.bf16.mxu0 %v6387
    %6703 = vmatpush1.bf16.msra.mxu0 %v6386
    %6704 = vmatprep.subr.bf16.mxu0 %v6391
    %6705 = vmatpush1.bf16.msra.mxu0 %v6390
    %6706 = vmatprep.subr.bf16.mxu0 %v6395
    %6707 = vmatpush1.bf16.msra.mxu0 %v6394
    %6708 = vmatprep.subr.bf16.mxu0 %v6399
    %6709 = vmatpush1.bf16.msra.mxu0 %v6398
    %6710 = vmatprep.subr.bf16.mxu0 %v6403
    %6711 = vmatpush1.bf16.msra.mxu0 %v6402
    %6712 = vmatprep.subr.bf16.mxu0 %v6407
    %6713 = vmatpush1.bf16.msra.mxu0 %v6406
    %6714 = vmatprep.mubr.bf16.mxu0 %v5813
    %6715 = vmatmul.mubr.bf16.gmra.mrb[0].mxu0 %v5812
    %v6716 = vpop.f32.mrb[0].mxu0
    %v6717 = vadd.f32 %v5955, %v6716
    %v6718 = vpop.f32.mrb[0].mxu0
    %v6719 = vadd.f32 %v5959, %v6718
    %v6720 = vpop.f32.mrb[0].mxu0
    %v6721 = vpop.f32.mrb[0].mxu0
    %6722 = vdwg.mxu0
    %6723 = vmatprep.subr.bf16.mxu0 %v6411
    %6724 = vmatpush1.bf16.msra.mxu0 %v6410
    %6725 = vmatprep.subr.bf16.mxu0 %v6415
    %6726 = vmatpush1.bf16.msra.mxu0 %v6414
    %6727 = vmatprep.subr.bf16.mxu0 %v6419
    %6728 = vmatpush1.bf16.msra.mxu0 %v6418
    %6729 = vmatprep.subr.bf16.mxu0 %v6423
    %6730 = vmatpush1.bf16.msra.mxu0 %v6422
    %6731 = vmatprep.subr.bf16.mxu0 %v6427
    %6732 = vmatpush1.bf16.msra.mxu0 %v6426
    %6733 = vmatprep.subr.bf16.mxu0 %v6431
    %6734 = vmatpush1.bf16.msra.mxu0 %v6430
    %6735 = vmatprep.subr.bf16.mxu0 %v6435
    %6736 = vmatpush1.bf16.msra.mxu0 %v6434
    %6737 = vmatprep.subr.bf16.mxu0 %v6439
    %6738 = vmatpush1.bf16.msra.mxu0 %v6438
    %6739 = vmatprep.subr.bf16.mxu0 %v6443
    %6740 = vmatpush1.bf16.msra.mxu0 %v6442
    %6741 = vmatprep.subr.bf16.mxu0 %v6447
    %6742 = vmatpush1.bf16.msra.mxu0 %v6446
    %6743 = vmatprep.subr.bf16.mxu0 %v6451
    %6744 = vmatpush1.bf16.msra.mxu0 %v6450
    %6745 = vmatprep.subr.bf16.mxu0 %v6455
    %6746 = vmatpush1.bf16.msra.mxu0 %v6454
    %6747 = vmatprep.subr.bf16.mxu0 %v6459
    %6748 = vmatpush1.bf16.msra.mxu0 %v6458
    %6749 = vmatprep.subr.bf16.mxu0 %v6463
    %6750 = vmatpush1.bf16.msra.mxu0 %v6462
    %6751 = vmatprep.subr.bf16.mxu0 %v6467
    %6752 = vmatpush1.bf16.msra.mxu0 %v6466
    %6753 = vmatprep.subr.bf16.mxu0 %v6471
    %6754 = vmatpush1.bf16.msra.mxu0 %v6470
    %6755 = vmatprep.mubr.bf16.mxu0 %v5815
    %6756 = vmatmul.mubr.bf16.gmra.mrb[0].mxu0 %v5814
    %v6757 = vpop.f32.mrb[0].mxu0
    %v6758 = vadd.f32 %v6717, %v6757
    %v6759 = vpop.f32.mrb[0].mxu0
    %v6760 = vadd.f32 %v6719, %v6759
    %v6761 = vpop.f32.mrb[0].mxu0
    %v6762 = vpop.f32.mrb[0].mxu0
    %6763 = vdwg.mxu0
    %v6768 = vcombine.low %v6676, %v6678
    %v6769 = vcombine.low %v6758, %v6760
    %6772 = vst [vmem:[#allocation14] sm:$0xff] %v6768
    %6773 = vst [vmem:[#allocation14 + $0x8] sm:$0xff] %v6769
    // Predicated region
    $region50: #{vib_t_forward.1} parent=1 // pred_check
      _
    $region51: #{vib_t_forward.1} parent=1 // pred_check_branch
      %6775 = sbr.rel (0) target = $region53
    $region52: #{vib_t_forward.1} parent=1 // pred_region
      %s6777 = ssub.s32 256, 256
      %6778 = vsyncadd [#allocation4], %s6777
      %s6780 = sshll.u32 [#allocation13], 4
      %s6781 = int_to_ptr.vmem [resolvable:$true] %s6780
      %6783 = dma.vmem_to_hbm [thread:$0]  %s6781, 256, %s6, [#allocation4]
    $region53: #{vib_t_forward.1} parent=1 // pred_fallthru
      _
    // Predicated region
    $region54: #{vib_t_forward.1} parent=1 // pred_check
      _
    $region55: #{vib_t_forward.1} parent=1 // pred_check_branch
      %6785 = sbr.rel (0) target = $region57
    $region56: #{vib_t_forward.1} parent=1 // pred_region
      %s6787 = ssub.s32 256, 256
      %6788 = vsyncadd [#allocation15], %s6787
      %s6790 = sshll.u32 [#allocation14], 4
      %s6791 = int_to_ptr.vmem [resolvable:$true] %s6790
      %6793 = dma.vmem_to_hbm [thread:$0]  %s6791, 256, %s7, [#allocation15]
    $region57: #{vib_t_forward.1} parent=1 // pred_fallthru
      _
    // Predicated region
    $region58: #{vib_t_forward.1} parent=1 // pred_check
      _
    $region59: #{vib_t_forward.1} parent=1 // pred_check_branch
      %6795 = sbr.rel (0) target = $region61
    $region60: #{vib_t_forward.1} parent=1 // pred_region
      %6796 = dma.done [#allocation4], 256
    $region61: #{vib_t_forward.1} parent=1 // pred_fallthru
      _
    // Predicated region
    $region62: #{vib_t_forward.1} parent=1 // pred_check
      _
    $region63: #{vib_t_forward.1} parent=1 // pred_check_branch
      %6798 = sbr.rel (0) target = $region65
    $region64: #{vib_t_forward.1} parent=1 // pred_region
      %6799 = dma.done [#allocation15], 256
    $region65: #{vib_t_forward.1} parent=1 // pred_fallthru
      _
    %6800 = vsyncpa [#allocation3], 1
    %6801 = vsyncpa [#allocation6], 1
    %6802 = vsyncpa [#allocation9], 1
    %6803 = vsyncpa [#allocation12], 1
    %6804 = vsyncpa [#allocation4], 1
    %6805 = vsyncpa [#allocation15], 1

</llo_original>
